<compile_context>
chip_gen: v6e
topology: v6e:2x2x1
jax: 0.10.0
libtpu: 0.0.40
codegen_flags: <defaults>
</compile_context>

<pallas_src>
import functools

import jax
import jax.numpy as jnp
from jax.experimental import pallas as pl
from jax.experimental.pallas import tpu as pltpu


# ---------------------------------------------------------------------------
# Kernel
# ---------------------------------------------------------------------------
def _transformer_block_kernel(
    q_hm_ref,    # (1, heads, TQ, d)  bf16  (head-major queries)
    k_hm_ref,    # (1, heads, S,  d)  bf16
    v_hm_ref,    # (1, heads, S,  d)  bf16
    q_res_ref,   # (1, TQ, E)         bf16  (residual path)
    *rest,       # [bias_ref], w_out, g1, b1, w_ff1, b_ff1, w_ff2, b_ff2, g2, b2, o_ref
    scale: float,
    heads: int,
    has_bias: bool,
):
    if has_bias:
        (bias_ref, w_out_ref, g1_ref, b1_ref, w_ff1_ref, b_ff1_ref,
         w_ff2_ref, b_ff2_ref, g2_ref, b2_ref, o_ref) = rest
    else:
        bias_ref = None
        (w_out_ref, g1_ref, b1_ref, w_ff1_ref, b_ff1_ref,
         w_ff2_ref, b_ff2_ref, g2_ref, b2_ref, o_ref) = rest

    # Fold the softmax scale into q (heads*TQ*d multiplies instead of
    # heads*TQ*S); stays bf16 for the MXU.
    q = q_hm_ref[0] * scale          # (heads, TQ, d) bf16
    k = k_hm_ref[0]                  # (heads, S,  d) bf16
    v = v_hm_ref[0]                  # (heads, S,  d) bf16

    # energy[h, q, s] = sum_d q[h,q,d] * k[h,s,d]     (head-batched, f32 acc)
    energy = jax.lax.dot_general(
        q, k,
        dimension_numbers=(((2,), (2,)), ((0,), (0,))),
        preferred_element_type=jnp.float32)            # (heads, TQ, S)

    if has_bias:
        # additive mask bias, applied once in f32 (broadcast over heads)
        energy = energy + bias_ref[0, 0].astype(jnp.float32)[None, :, :]

    # numerically stable softmax over keys (f32)
    m = jnp.max(energy, axis=-1, keepdims=True)
    p = jnp.exp(energy - m)
    att = p * pl.reciprocal(jnp.sum(p, axis=-1, keepdims=True), approx=True)

    # context[h, q, d] = sum_s att[h,q,s] * v[h,s,d]
    ctx = jax.lax.dot_general(
        att.astype(jnp.bfloat16), v,
        dimension_numbers=(((2,), (1,)), ((0,), (0,))),
        preferred_element_type=jnp.float32)            # (heads, TQ, d)

    # fc_out:  out[q, e] = sum_{h, d} ctx[h,q,d] * W_out[h,d,e]
    # Unrolled accumulation over heads -> only one (TQ, E) f32 value is live,
    # no (heads, TQ, E) intermediate.  `heads` is a small static int.
    ctx_bf = ctx.astype(jnp.bfloat16)
    w_out = w_out_ref[...]                             # (heads, d, E) bf16
    attn = jnp.dot(ctx_bf[0], w_out[0], preferred_element_type=jnp.float32)
    for h in range(1, heads):
        attn = attn + jnp.dot(ctx_bf[h], w_out[h],
                              preferred_element_type=jnp.float32)  # (TQ, E)

    # --- LayerNorm helper (f32) -------------------------------------------
    def layer_norm(x, gamma, beta, eps=1e-5):
        mu = jnp.mean(x, axis=-1, keepdims=True)
        var = jnp.mean((x - mu) ** 2, axis=-1, keepdims=True)
        return (x - mu) * jax.lax.rsqrt(var + eps) * gamma + beta

    # residual 1 + norm1 (dropout == identity at inference)
    x = layer_norm(attn + q_res_ref[0].astype(jnp.float32),
                   g1_ref[...], b1_ref[...])                        # (TQ, E)

    # --- feed-forward (bf16 matmuls, f32 accumulation) ----------------------
    h1 = jnp.dot(x.astype(jnp.bfloat16), w_ff1_ref[...],
                 preferred_element_type=jnp.float32) + b_ff1_ref[...]
    h1 = jnp.maximum(h1, 0.0)                                       # ReLU
    ff = jnp.dot(h1.astype(jnp.bfloat16), w_ff2_ref[...],
                 preferred_element_type=jnp.float32) + b_ff2_ref[...]

    # residual 2 + norm2 (dropout == identity at inference)
    out = layer_norm(ff + x, g2_ref[...], b2_ref[...])              # (TQ, E)

    o_ref[0] = out.astype(o_ref.dtype)


# ---------------------------------------------------------------------------
# Wrapper
# ---------------------------------------------------------------------------
def transformer_block(value, key, query, mask, params, *, heads: int,
                      out_dtype=jnp.bfloat16):
    """value, key, query: (N, S, E); mask: (N, 1, S, S) or None -> (N, S, E)."""
    N, S, E = query.shape
    d = E // heads
    H = params["w_ff1"].shape[1]
    scale = float(E) ** 0.5  # energy / E**(-1/2) == energy * sqrt(E)
    has_bias = mask is not None
    bf16b, f32b = 2, 4

    # --- VMEM footprint estimate for a candidate query tile ------------------
    def vmem_estimate(tq, single_buffer_consts):
        blk = bf16b * (heads * tq * d          # q head-major
                       + 2 * heads * S * d     # resident K and V
                       + tq * E                # bf16 residual
                       + tq * E)               # bf16 output
        if has_bias:
            blk += bf16b * tq * S
        blk *= 2                               # default double-buffering
        wmul = 1 if single_buffer_consts else 2
        weights = wmul * (bf16b * (heads * d * E + E * H + H * E)
                          + f32b * (5 * E + H))
        interm = (f32b * 3 * heads * tq * S    # energy, p, att (f32)
                  + bf16b * heads * tq * S     # att bf16 cast
                  + (f32b + bf16b) * heads * tq * d   # ctx (+ bf16 cast)
                  + f32b * tq * H              # FFN hidden
                  + f32b * 4 * tq * E)         # attn / x / ff / out
        return blk + weights + interm

    # --- query-tile size: largest divisor of S (<=256) that fits the budget --
    max_tq = 256
    if N == 1:
        # give v7x megacore at least 2 parallel blocks when possible
        max_tq = min(max_tq, max(8, S // 2))
    max_tq = min(max_tq, S)
    cands = [t for t in range(max_tq, 0, -1) if S % t == 0]
    budget = 40 * 1024 * 1024
    TQ = cands[-1]
    for t in cands:
        if vmem_estimate(t, True) <= budget:
            TQ = t
            break
    n_q = S // TQ

    # --- layout plumbing (XLA side): head-major bf16 q/k/v, bf16 weights ----
    def head_major(x):
        return x.reshape(N, S, heads, d).transpose(0, 2, 1, 3).astype(jnp.bfloat16)

    q_hm = head_major(query)
    k_hm = head_major(key)
    v_hm = head_major(value)
    q_res = query.astype(jnp.bfloat16)     # residual read in bf16 (half the DMA)
    w_out_r = params["w_out"].reshape(heads, d, E).astype(jnp.bfloat16)
    w_ff1 = params["w_ff1"].astype(jnp.bfloat16)
    w_ff2 = params["w_ff2"].astype(jnp.bfloat16)

    data_args = [q_hm, k_hm, v_hm, q_res]
    if has_bias:
        # additive mask bias: 0 where visible, -1e20 where masked (bf16 halves DMA)
        mask_bias = jnp.where(mask == 0, jnp.float32(-1e20),
                              jnp.float32(0.0)).astype(jnp.bfloat16)
        data_args.append(mask_bias)
    param_args = [w_out_r,
                  params["ln1_gamma"], params["ln1_beta"],
                  w_ff1, params["b_ff1"],
                  w_ff2, params["b_ff2"],
                  params["ln2_gamma"], params["ln2_beta"]]

    kernel = functools.partial(_transformer_block_kernel, scale=scale,
                               heads=heads, has_bias=has_bias)

    # --- cost estimate -------------------------------------------------------
    flops = int(N * (4 * S * S * E + 2 * S * E * E + 4 * S * E * H))
    transcendentals = int(N * heads * S * S + 3 * N * S)
    bytes_accessed = int(
        3 * N * S * E * 2                      # q/k/v head-major bf16
        + N * S * E * 2                        # bf16 residual
        + (N * S * S * 2 if has_bias else 0)   # mask bias bf16
        + (heads * d * E + E * H + H * E) * 2  # bf16 weights
        + (5 * E + H) * 4                      # f32 biases / LN params
        + N * S * E * jnp.dtype(out_dtype).itemsize)  # output
    cost = pl.CostEstimate(flops=flops, transcendentals=transcendentals,
                           bytes_accessed=bytes_accessed)

    def run(single_buffer_consts):
        est_vmem = vmem_estimate(TQ, single_buffer_consts)
        # Set an explicit limit once above the smallest per-generation default
        # (v5e ~16 MiB); never request more than 48 MiB so v7x (64 MiB/TC)
        # keeps headroom for double buffers / compiler scratch.
        vmem_limit = None
        if est_vmem > 12 * 1024 * 1024:
            vmem_limit = int(min(max(est_vmem * 5 // 4, 16 * 1024 * 1024),
                                 48 * 1024 * 1024))

        def const_spec(shape):
            idx = lambda n, qi: (0,) * len(shape)
            if single_buffer_consts:
                # block index never changes -> single buffer halves weight VMEM
                return pl.BlockSpec(shape, idx, pipeline_mode=pl.Buffered(1))
            return pl.BlockSpec(shape, idx)

        in_specs = [
            pl.BlockSpec((1, heads, TQ, d), lambda n, qi: (n, 0, qi, 0)),  # q
            pl.BlockSpec((1, heads, S, d), lambda n, qi: (n, 0, 0, 0)),    # k
            pl.BlockSpec((1, heads, S, d), lambda n, qi: (n, 0, 0, 0)),    # v
            pl.BlockSpec((1, TQ, E), lambda n, qi: (n, qi, 0)),            # residual
        ]
        if has_bias:
            in_specs.append(
                pl.BlockSpec((1, 1, TQ, S), lambda n, qi: (n, 0, qi, 0)))  # bias
        in_specs += [
            const_spec((heads, d, E)),   # w_out (reshaped)
            const_spec((1, E)),          # norm1 gamma
            const_spec((1, E)),          # norm1 beta
            const_spec((E, H)),          # ff w1
            const_spec((1, H)),          # ff b1
            const_spec((H, E)),          # ff w2
            const_spec((1, E)),          # ff b2
            const_spec((1, E)),          # norm2 gamma
            const_spec((1, E)),          # norm2 beta
        ]
        out_spec = pl.BlockSpec((1, TQ, E), lambda n, qi: (n, qi, 0))

        grid_spec = pltpu.PrefetchScalarGridSpec(
            num_scalar_prefetch=0,
            grid=(N, n_q),
            in_specs=in_specs,
            out_specs=out_spec)

        return pl.pallas_call(
            kernel,
            out_shape=jax.ShapeDtypeStruct((N, S, E), out_dtype),
            grid_spec=grid_spec,
            compiler_params=pltpu.CompilerParams(
                dimension_semantics=("parallel", "parallel"),
                vmem_limit_bytes=vmem_limit),
            cost_estimate=cost,
        )(*data_args, *param_args)

    try:
        return run(single_buffer_consts=True)
    except Exception:
        # Fallback: if this jax version rejects pl.Buffered on pallas_call
        # BlockSpecs, default double-buffering is functionally identical.
        return run(single_buffer_consts=False)


# ---------------------------------------------------------------------------
# Pure-JAX reference (f32) for a sanity check
# ---------------------------------------------------------------------------
def transformer_block_ref(value, key, query, mask, params, *, heads: int):
    N, S, E = query.shape
    d = E // heads
    q = query.reshape(N, S, heads, d)
    k = key.reshape(N, S, heads, d)
    v = value.reshape(N, S, heads, d)
    energy = jnp.einsum("nqhd,nkhd->nhqk", q, k)
    energy = jnp.where(mask[:, :, :, :] == 0, jnp.float32(-1e20), energy)
    att = jax.nn.softmax(energy * (E ** 0.5), axis=-1)
    out = jnp.einsum("nhqk,nkhd->nqhd", att, v).reshape(N, S, E)
    out = out @ params["w_out"]

    def ln(x, g, b, eps=1e-5):
        mu = x.mean(-1, keepdims=True)
        var = ((x - mu) ** 2).mean(-1, keepdims=True)
        return (x - mu) * jax.lax.rsqrt(var + eps) * g + b

    x = ln(out + query, params["ln1_gamma"], params["ln1_beta"])
    h1 = jnp.maximum(x @ params["w_ff1"] + params["b_ff1"], 0.0)
    ff = h1 @ params["w_ff2"] + params["b_ff2"]
    return ln(ff + x, params["ln2_gamma"], params["ln2_beta"])


# ---------------------------------------------------------------------------
# Deterministic parameter construction (synthetic, not a checkpoint load)
# ---------------------------------------------------------------------------
def make_params(rng, embed_size, forward_expansion):
    H = embed_size * forward_expansion
    k0, k1, k2, k3, k4 = jax.random.split(rng, 5)
    scale_e = 1.0 / jnp.sqrt(embed_size)
    scale_h = 1.0 / jnp.sqrt(H)
    return {
        "w_out": jax.random.normal(k0, (embed_size, embed_size), jnp.float32) * scale_e,
        "ln1_gamma": jnp.ones((1, embed_size), jnp.float32),
        "ln1_beta": jnp.zeros((1, embed_size), jnp.float32),
        "w_ff1": jax.random.normal(k1, (embed_size, H), jnp.float32) * scale_e,
        "b_ff1": jax.random.normal(k2, (1, H), jnp.float32) * 0.01,
        "w_ff2": jax.random.normal(k3, (H, embed_size), jnp.float32) * scale_h,
        "b_ff2": jax.random.normal(k4, (1, embed_size), jnp.float32) * 0.01,
        "ln2_gamma": jnp.ones((1, embed_size), jnp.float32),
        "ln2_beta": jnp.zeros((1, embed_size), jnp.float32),
    }


if __name__ == "__main__":
    # small shapes consistent with the module
    N, S, E, heads, forward_expansion = 2, 8, 32, 4, 4

    rng = jax.random.PRNGKey(0)
    k_p, k_v, k_k, k_q = jax.random.split(rng, 4)

    params = make_params(k_p, E, forward_expansion)
    value = jax.random.normal(k_v, (N, S, E), jnp.float32)
    key = jax.random.normal(k_k, (N, S, E), jnp.float32)
    query = jax.random.normal(k_q, (N, S, E), jnp.float32)
    mask = jnp.ones((N, 1, S, S), jnp.float32)  # all-visible mask

    out = transformer_block(value, key, query, mask, params, heads=heads)
    out = jax.block_until_ready(out)

    assert out.shape == (N, S, E)
    assert jnp.isfinite(out.astype(jnp.float32)).all()

    # loose sanity check vs the f32 reference (kernel matmuls/output in bf16)
    ref = transformer_block_ref(value, key, query, mask, params, heads=heads)
    max_err = float(jnp.max(jnp.abs(out.astype(jnp.float32) - ref)))
    assert max_err < 0.5, f"max abs error vs reference too large: {max_err}"

    # structural all-visible case: mask=None skips the (N,S,S) bias DMA + add
    out_nomask = transformer_block(value, key, query, None, params, heads=heads)
    out_nomask = jax.block_until_ready(out_nomask)
    max_err2 = float(jnp.max(jnp.abs(out_nomask.astype(jnp.float32) - ref)))
    assert max_err2 < 0.5, f"mask=None path error too large: {max_err2}"

    print("KERNEL_OK")
</pallas_src>

<mosaic_0001>
module attributes {stable_mosaic.version = 11 : i64} {
  func.func @_transformer_block_kernel(%arg0: i32, %arg1: i32, %arg2: memref<1x4x8x8xbf16, #tpu.memory_space<vmem>>, %arg3: memref<1x4x8x8xbf16, #tpu.memory_space<vmem>>, %arg4: memref<1x4x8x8xbf16, #tpu.memory_space<vmem>>, %arg5: memref<1x8x32xbf16, #tpu.memory_space<vmem>>, %arg6: memref<1x1x8x8xbf16, #tpu.memory_space<vmem>>, %arg7: memref<4x8x32xbf16, #tpu.memory_space<vmem>>, %arg8: memref<1x32xf32, #tpu.memory_space<vmem>>, %arg9: memref<1x32xf32, #tpu.memory_space<vmem>>, %arg10: memref<32x128xbf16, #tpu.memory_space<vmem>>, %arg11: memref<1x128xf32, #tpu.memory_space<vmem>>, %arg12: memref<128x32xbf16, #tpu.memory_space<vmem>>, %arg13: memref<1x32xf32, #tpu.memory_space<vmem>>, %arg14: memref<1x32xf32, #tpu.memory_space<vmem>>, %arg15: memref<1x32xf32, #tpu.memory_space<vmem>>, %arg16: memref<1x8x32xbf16, #tpu.memory_space<vmem>>) attributes {dimension_semantics = [#tpu.dimension_semantics<parallel>, #tpu.dimension_semantics<parallel>], iteration_bounds = array<i64: 2, 1>, scalar_prefetch = 0 : i64, scratch_operands = 0 : i64, tpu.core_type = #tpu.core_type<tc>, window_params = [{transform_indices = @transform_0, window_bounds = array<i64: 1, 4, 8, 8>}, {transform_indices = @transform_1, window_bounds = array<i64: 1, 4, 8, 8>}, {transform_indices = @transform_2, window_bounds = array<i64: 1, 4, 8, 8>}, {transform_indices = @transform_3, window_bounds = array<i64: 1, 8, 32>}, {transform_indices = @transform_4, window_bounds = array<i64: 1, 1, 8, 8>}, {pipeline_mode = #tpu.pipeline_mode<synchronous>, transform_indices = @transform_5, window_bounds = array<i64: 4, 8, 32>}, {pipeline_mode = #tpu.pipeline_mode<synchronous>, transform_indices = @transform_6, window_bounds = array<i64: 1, 32>}, {pipeline_mode = #tpu.pipeline_mode<synchronous>, transform_indices = @transform_7, window_bounds = array<i64: 1, 32>}, {pipeline_mode = #tpu.pipeline_mode<synchronous>, transform_indices = @transform_8, window_bounds = array<i64: 32, 128>}, {pipeline_mode = #tpu.pipeline_mode<synchronous>, transform_indices = @transform_9, window_bounds = array<i64: 1, 128>}, {pipeline_mode = #tpu.pipeline_mode<synchronous>, transform_indices = @transform_10, window_bounds = array<i64: 128, 32>}, {pipeline_mode = #tpu.pipeline_mode<synchronous>, transform_indices = @transform_11, window_bounds = array<i64: 1, 32>}, {pipeline_mode = #tpu.pipeline_mode<synchronous>, transform_indices = @transform_12, window_bounds = array<i64: 1, 32>}, {pipeline_mode = #tpu.pipeline_mode<synchronous>, transform_indices = @transform_13, window_bounds = array<i64: 1, 32>}, {transform_indices = @transform_14, window_bounds = array<i64: 1, 8, 32>}]} {
    %c0 = arith.constant 0 : index
    %c0_0 = arith.constant 0 : index
    %c0_1 = arith.constant 0 : index
    %c0_2 = arith.constant 0 : index
    %0 = vector.load %arg2[%c0, %c0_0, %c0_1, %c0_2] : memref<1x4x8x8xbf16, #tpu.memory_space<vmem>>, vector<1x4x8x8xbf16>
    %1 = vector.shape_cast %0 : vector<1x4x8x8xbf16> to vector<4x8x8xbf16>
    %cst = arith.constant 5.656250e+00 : bf16
    %2 = vector.broadcast %cst : bf16 to vector<4x8x8xbf16>
    %3 = arith.mulf %1, %2 : vector<4x8x8xbf16>
    %c0_3 = arith.constant 0 : index
    %c0_4 = arith.constant 0 : index
    %c0_5 = arith.constant 0 : index
    %c0_6 = arith.constant 0 : index
    %4 = vector.load %arg3[%c0_3, %c0_4, %c0_5, %c0_6] : memref<1x4x8x8xbf16, #tpu.memory_space<vmem>>, vector<1x4x8x8xbf16>
    %5 = vector.shape_cast %4 : vector<1x4x8x8xbf16> to vector<4x8x8xbf16>
    %c0_7 = arith.constant 0 : index
    %c0_8 = arith.constant 0 : index
    %c0_9 = arith.constant 0 : index
    %c0_10 = arith.constant 0 : index
    %6 = vector.load %arg4[%c0_7, %c0_8, %c0_9, %c0_10] : memref<1x4x8x8xbf16, #tpu.memory_space<vmem>>, vector<1x4x8x8xbf16>
    %7 = vector.shape_cast %6 : vector<1x4x8x8xbf16> to vector<4x8x8xbf16>
    %cst_11 = arith.constant dense<0.000000e+00> : vector<4x8x8xf32>
    %8 = tpu.matmul %3, %5, %cst_11 {dimension_numbers = #tpu.dot_dimension_numbers<[2], [2], [1], [1], [0, 0, 0, 1, 1, 1], [0], [0]>} : vector<4x8x8xbf16>, vector<4x8x8xbf16>, vector<4x8x8xf32> -> vector<4x8x8xf32>
    %c0_12 = arith.constant 0 : index
    %c0_13 = arith.constant 0 : index
    %c0_14 = arith.constant 0 : index
    %c0_15 = arith.constant 0 : index
    %9 = vector.load %arg6[%c0_12, %c0_13, %c0_14, %c0_15] : memref<1x1x8x8xbf16, #tpu.memory_space<vmem>>, vector<1x1x8x8xbf16>
    %10 = vector.shape_cast %9 : vector<1x1x8x8xbf16> to vector<8x8xbf16>
    %11 = arith.extf %10 : vector<8x8xbf16> to vector<8x8xf32>
    %12 = vector.shape_cast %11 : vector<8x8xf32> to vector<1x8x8xf32>
    %13 = vector.broadcast %12 : vector<1x8x8xf32> to vector<4x8x8xf32>
    %14 = arith.addf %8, %13 : vector<4x8x8xf32>
    %cst_16 = arith.constant dense<0xFF800000> : vector<4x8xf32>
    %15 = vector.multi_reduction <maximumf>, %14, %cst_16 [2] : vector<4x8x8xf32> to vector<4x8xf32>
    %16 = vector.shape_cast %15 : vector<4x8xf32> to vector<4x8x1xf32>
    %17 = vector.broadcast %16 : vector<4x8x1xf32> to vector<4x8x8xf32>
    %18 = arith.subf %14, %17 : vector<4x8x8xf32>
    %19 = math.exp %18 : vector<4x8x8xf32>
    %cst_17 = arith.constant dense<0.000000e+00> : vector<4x8xf32>
    %20 = vector.multi_reduction <add>, %19, %cst_17 [2] : vector<4x8x8xf32> to vector<4x8xf32>
    %21 = vector.shape_cast %20 : vector<4x8xf32> to vector<4x8x1xf32>
    %22 = tpu.reciprocal %21 {approx = true} : vector<4x8x1xf32> -> vector<4x8x1xf32>
    %23 = vector.broadcast %22 : vector<4x8x1xf32> to vector<4x8x8xf32>
    %24 = arith.mulf %19, %23 : vector<4x8x8xf32>
    %25 = arith.truncf %24 : vector<4x8x8xf32> to vector<4x8x8xbf16>
    %cst_18 = arith.constant dense<0.000000e+00> : vector<4x8x8xf32>
    %26 = tpu.matmul %25, %7, %cst_18 {dimension_numbers = #tpu.dot_dimension_numbers<[2], [1], [1], [2], [0, 0, 0, 1, 1, 2], [0], [0]>} : vector<4x8x8xbf16>, vector<4x8x8xbf16>, vector<4x8x8xf32> -> vector<4x8x8xf32>
    %27 = arith.truncf %26 : vector<4x8x8xf32> to vector<4x8x8xbf16>
    %c0_19 = arith.constant 0 : index
    %c0_20 = arith.constant 0 : index
    %c0_21 = arith.constant 0 : index
    %28 = vector.load %arg7[%c0_19, %c0_20, %c0_21] : memref<4x8x32xbf16, #tpu.memory_space<vmem>>, vector<4x8x32xbf16>
    %29 = vector.extract_strided_slice %27 {offsets = [0, 0, 0], sizes = [1, 8, 8], strides = [1, 1, 1]} : vector<4x8x8xbf16> to vector<1x8x8xbf16>
    %30 = vector.shape_cast %29 : vector<1x8x8xbf16> to vector<8x8xbf16>
    %31 = vector.extract_strided_slice %28 {offsets = [0, 0, 0], sizes = [1, 8, 32], strides = [1, 1, 1]} : vector<4x8x32xbf16> to vector<1x8x32xbf16>
    %32 = vector.shape_cast %31 : vector<1x8x32xbf16> to vector<8x32xbf16>
    %cst_22 = arith.constant dense<0.000000e+00> : vector<8x32xf32>
    %33 = tpu.matmul %30, %32, %cst_22 {dimension_numbers = #tpu.dot_dimension_numbers<[1], [0], [0], [1], [0, 0, 1, 1], [], []>} : vector<8x8xbf16>, vector<8x32xbf16>, vector<8x32xf32> -> vector<8x32xf32>
    %34 = vector.extract_strided_slice %27 {offsets = [1, 0, 0], sizes = [1, 8, 8], strides = [1, 1, 1]} : vector<4x8x8xbf16> to vector<1x8x8xbf16>
    %35 = vector.shape_cast %34 : vector<1x8x8xbf16> to vector<8x8xbf16>
    %36 = vector.extract_strided_slice %28 {offsets = [1, 0, 0], sizes = [1, 8, 32], strides = [1, 1, 1]} : vector<4x8x32xbf16> to vector<1x8x32xbf16>
    %37 = vector.shape_cast %36 : vector<1x8x32xbf16> to vector<8x32xbf16>
    %cst_23 = arith.constant dense<0.000000e+00> : vector<8x32xf32>
    %38 = tpu.matmul %35, %37, %cst_23 {dimension_numbers = #tpu.dot_dimension_numbers<[1], [0], [0], [1], [0, 0, 1, 1], [], []>} : vector<8x8xbf16>, vector<8x32xbf16>, vector<8x32xf32> -> vector<8x32xf32>
    %39 = arith.addf %33, %38 : vector<8x32xf32>
    %40 = vector.extract_strided_slice %27 {offsets = [2, 0, 0], sizes = [1, 8, 8], strides = [1, 1, 1]} : vector<4x8x8xbf16> to vector<1x8x8xbf16>
    %41 = vector.shape_cast %40 : vector<1x8x8xbf16> to vector<8x8xbf16>
    %42 = vector.extract_strided_slice %28 {offsets = [2, 0, 0], sizes = [1, 8, 32], strides = [1, 1, 1]} : vector<4x8x32xbf16> to vector<1x8x32xbf16>
    %43 = vector.shape_cast %42 : vector<1x8x32xbf16> to vector<8x32xbf16>
    %cst_24 = arith.constant dense<0.000000e+00> : vector<8x32xf32>
    %44 = tpu.matmul %41, %43, %cst_24 {dimension_numbers = #tpu.dot_dimension_numbers<[1], [0], [0], [1], [0, 0, 1, 1], [], []>} : vector<8x8xbf16>, vector<8x32xbf16>, vector<8x32xf32> -> vector<8x32xf32>
    %45 = arith.addf %39, %44 : vector<8x32xf32>
    %46 = vector.extract_strided_slice %27 {offsets = [3, 0, 0], sizes = [1, 8, 8], strides = [1, 1, 1]} : vector<4x8x8xbf16> to vector<1x8x8xbf16>
    %47 = vector.shape_cast %46 : vector<1x8x8xbf16> to vector<8x8xbf16>
    %48 = vector.extract_strided_slice %28 {offsets = [3, 0, 0], sizes = [1, 8, 32], strides = [1, 1, 1]} : vector<4x8x32xbf16> to vector<1x8x32xbf16>
    %49 = vector.shape_cast %48 : vector<1x8x32xbf16> to vector<8x32xbf16>
    %cst_25 = arith.constant dense<0.000000e+00> : vector<8x32xf32>
    %50 = tpu.matmul %47, %49, %cst_25 {dimension_numbers = #tpu.dot_dimension_numbers<[1], [0], [0], [1], [0, 0, 1, 1], [], []>} : vector<8x8xbf16>, vector<8x32xbf16>, vector<8x32xf32> -> vector<8x32xf32>
    %51 = arith.addf %45, %50 : vector<8x32xf32>
    %c0_26 = arith.constant 0 : index
    %c0_27 = arith.constant 0 : index
    %c0_28 = arith.constant 0 : index
    %52 = vector.load %arg5[%c0_26, %c0_27, %c0_28] : memref<1x8x32xbf16, #tpu.memory_space<vmem>>, vector<1x8x32xbf16>
    %53 = vector.shape_cast %52 : vector<1x8x32xbf16> to vector<8x32xbf16>
    %54 = arith.extf %53 : vector<8x32xbf16> to vector<8x32xf32>
    %55 = arith.addf %51, %54 : vector<8x32xf32>
    %c0_29 = arith.constant 0 : index
    %c0_30 = arith.constant 0 : index
    %56 = vector.load %arg8[%c0_29, %c0_30] : memref<1x32xf32, #tpu.memory_space<vmem>>, vector<1x32xf32>
    %c0_31 = arith.constant 0 : index
    %c0_32 = arith.constant 0 : index
    %57 = vector.load %arg9[%c0_31, %c0_32] : memref<1x32xf32, #tpu.memory_space<vmem>>, vector<1x32xf32>
    %cst_33 = arith.constant dense<0.000000e+00> : vector<8xf32>
    %58 = vector.multi_reduction <add>, %55, %cst_33 [1] : vector<8x32xf32> to vector<8xf32>
    %59 = vector.shape_cast %58 : vector<8xf32> to vector<8x1xf32>
    %cst_34 = arith.constant 3.200000e+01 : f32
    %60 = vector.broadcast %cst_34 : f32 to vector<8x1xf32>
    %61 = arith.divf %59, %60 : vector<8x1xf32>
    %62 = vector.broadcast %61 : vector<8x1xf32> to vector<8x32xf32>
    %63 = arith.subf %55, %62 : vector<8x32xf32>
    %64 = arith.mulf %63, %63 : vector<8x32xf32>
    %cst_35 = arith.constant dense<0.000000e+00> : vector<8xf32>
    %65 = vector.multi_reduction <add>, %64, %cst_35 [1] : vector<8x32xf32> to vector<8xf32>
    %66 = vector.shape_cast %65 : vector<8xf32> to vector<8x1xf32>
    %cst_36 = arith.constant 3.200000e+01 : f32
    %67 = vector.broadcast %cst_36 : f32 to vector<8x1xf32>
    %68 = arith.divf %66, %67 : vector<8x1xf32>
    %69 = vector.broadcast %61 : vector<8x1xf32> to vector<8x32xf32>
    %70 = arith.subf %55, %69 : vector<8x32xf32>
    %cst_37 = arith.constant 9.99999974E-6 : f32
    %71 = vector.broadcast %cst_37 : f32 to vector<8x1xf32>
    %72 = arith.addf %68, %71 : vector<8x1xf32>
    %73 = math.rsqrt %72 : vector<8x1xf32>
    %74 = vector.broadcast %73 : vector<8x1xf32> to vector<8x32xf32>
    %75 = arith.mulf %70, %74 : vector<8x32xf32>
    %76 = vector.broadcast %56 : vector<1x32xf32> to vector<8x32xf32>
    %77 = arith.mulf %75, %76 : vector<8x32xf32>
    %78 = vector.broadcast %57 : vector<1x32xf32> to vector<8x32xf32>
    %79 = arith.addf %77, %78 : vector<8x32xf32>
    %80 = arith.truncf %79 : vector<8x32xf32> to vector<8x32xbf16>
    %c0_38 = arith.constant 0 : index
    %c0_39 = arith.constant 0 : index
    %81 = vector.load %arg10[%c0_38, %c0_39] : memref<32x128xbf16, #tpu.memory_space<vmem>>, vector<32x128xbf16>
    %cst_40 = arith.constant dense<0.000000e+00> : vector<8x128xf32>
    %82 = tpu.matmul %80, %81, %cst_40 {dimension_numbers = #tpu.dot_dimension_numbers<[1], [0], [0], [1], [0, 0, 1, 1], [], []>} : vector<8x32xbf16>, vector<32x128xbf16>, vector<8x128xf32> -> vector<8x128xf32>
    %c0_41 = arith.constant 0 : index
    %c0_42 = arith.constant 0 : index
    %83 = vector.load %arg11[%c0_41, %c0_42] : memref<1x128xf32, #tpu.memory_space<vmem>>, vector<1x128xf32>
    %84 = vector.broadcast %83 : vector<1x128xf32> to vector<8x128xf32>
    %85 = arith.addf %82, %84 : vector<8x128xf32>
    %cst_43 = arith.constant 0.000000e+00 : f32
    %86 = vector.broadcast %cst_43 : f32 to vector<8x128xf32>
    %87 = arith.maximumf %85, %86 : vector<8x128xf32>
    %88 = arith.truncf %87 : vector<8x128xf32> to vector<8x128xbf16>
    %c0_44 = arith.constant 0 : index
    %c0_45 = arith.constant 0 : index
    %89 = vector.load %arg12[%c0_44, %c0_45] : memref<128x32xbf16, #tpu.memory_space<vmem>>, vector<128x32xbf16>
    %cst_46 = arith.constant dense<0.000000e+00> : vector<8x32xf32>
    %90 = tpu.matmul %88, %89, %cst_46 {dimension_numbers = #tpu.dot_dimension_numbers<[1], [0], [0], [1], [0, 0, 1, 1], [], []>} : vector<8x128xbf16>, vector<128x32xbf16>, vector<8x32xf32> -> vector<8x32xf32>
    %c0_47 = arith.constant 0 : index
    %c0_48 = arith.constant 0 : index
    %91 = vector.load %arg13[%c0_47, %c0_48] : memref<1x32xf32, #tpu.memory_space<vmem>>, vector<1x32xf32>
    %92 = vector.broadcast %91 : vector<1x32xf32> to vector<8x32xf32>
    %93 = arith.addf %90, %92 : vector<8x32xf32>
    %94 = arith.addf %93, %79 : vector<8x32xf32>
    %c0_49 = arith.constant 0 : index
    %c0_50 = arith.constant 0 : index
    %95 = vector.load %arg14[%c0_49, %c0_50] : memref<1x32xf32, #tpu.memory_space<vmem>>, vector<1x32xf32>
    %c0_51 = arith.constant 0 : index
    %c0_52 = arith.constant 0 : index
    %96 = vector.load %arg15[%c0_51, %c0_52] : memref<1x32xf32, #tpu.memory_space<vmem>>, vector<1x32xf32>
    %cst_53 = arith.constant dense<0.000000e+00> : vector<8xf32>
    %97 = vector.multi_reduction <add>, %94, %cst_53 [1] : vector<8x32xf32> to vector<8xf32>
    %98 = vector.shape_cast %97 : vector<8xf32> to vector<8x1xf32>
    %cst_54 = arith.constant 3.200000e+01 : f32
    %99 = vector.broadcast %cst_54 : f32 to vector<8x1xf32>
    %100 = arith.divf %98, %99 : vector<8x1xf32>
    %101 = vector.broadcast %100 : vector<8x1xf32> to vector<8x32xf32>
    %102 = arith.subf %94, %101 : vector<8x32xf32>
    %103 = arith.mulf %102, %102 : vector<8x32xf32>
    %cst_55 = arith.constant dense<0.000000e+00> : vector<8xf32>
    %104 = vector.multi_reduction <add>, %103, %cst_55 [1] : vector<8x32xf32> to vector<8xf32>
    %105 = vector.shape_cast %104 : vector<8xf32> to vector<8x1xf32>
    %cst_56 = arith.constant 3.200000e+01 : f32
    %106 = vector.broadcast %cst_56 : f32 to vector<8x1xf32>
    %107 = arith.divf %105, %106 : vector<8x1xf32>
    %108 = vector.broadcast %100 : vector<8x1xf32> to vector<8x32xf32>
    %109 = arith.subf %94, %108 : vector<8x32xf32>
    %cst_57 = arith.constant 9.99999974E-6 : f32
    %110 = vector.broadcast %cst_57 : f32 to vector<8x1xf32>
    %111 = arith.addf %107, %110 : vector<8x1xf32>
    %112 = math.rsqrt %111 : vector<8x1xf32>
    %113 = vector.broadcast %112 : vector<8x1xf32> to vector<8x32xf32>
    %114 = arith.mulf %109, %113 : vector<8x32xf32>
    %115 = vector.broadcast %95 : vector<1x32xf32> to vector<8x32xf32>
    %116 = arith.mulf %114, %115 : vector<8x32xf32>
    %117 = vector.broadcast %96 : vector<1x32xf32> to vector<8x32xf32>
    %118 = arith.addf %116, %117 : vector<8x32xf32>
    %119 = arith.truncf %118 : vector<8x32xf32> to vector<8x32xbf16>
    %c0_58 = arith.constant 0 : index
    %c0_59 = arith.constant 0 : index
    %c0_60 = arith.constant 0 : index
    %120 = vector.load %arg16[%c0_58, %c0_59, %c0_60] : memref<1x8x32xbf16, #tpu.memory_space<vmem>>, vector<1x8x32xbf16>
    %121 = vector.shape_cast %120 : vector<1x8x32xbf16> to vector<8x32xbf16>
    %122 = vector.shape_cast %119 : vector<8x32xbf16> to vector<1x8x32xbf16>
    tpu.vector_store %arg16[%c0_58, %c0_59, %c0_60], %122 {strides = array<i32>} : memref<1x8x32xbf16, #tpu.memory_space<vmem>>, vector<1x8x32xbf16>,
    return
  }
  func.func @transform_0(%arg0: i32, %arg1: i32) -> (i32, i32, i32, i32) {
    %c0_i32 = arith.constant 0 : i32
    %c0_i32_0 = arith.constant 0 : i32
    %c0_i32_1 = arith.constant 0 : i32
    return %arg0, %c0_i32, %arg1, %c0_i32_0 : i32, i32, i32, i32
  }
  func.func @transform_1(%arg0: i32, %arg1: i32) -> (i32, i32, i32, i32) {
    %c0_i32 = arith.constant 0 : i32
    %c0_i32_0 = arith.constant 0 : i32
    %c0_i32_1 = arith.constant 0 : i32
    %c0_i32_2 = arith.constant 0 : i32
    return %arg0, %c0_i32, %c0_i32_0, %c0_i32_1 : i32, i32, i32, i32
  }
  func.func @transform_2(%arg0: i32, %arg1: i32) -> (i32, i32, i32, i32) {
    %c0_i32 = arith.constant 0 : i32
    %c0_i32_0 = arith.constant 0 : i32
    %c0_i32_1 = arith.constant 0 : i32
    %c0_i32_2 = arith.constant 0 : i32
    return %arg0, %c0_i32, %c0_i32_0, %c0_i32_1 : i32, i32, i32, i32
  }
  func.func @transform_3(%arg0: i32, %arg1: i32) -> (i32, i32, i32) {
    %c0_i32 = arith.constant 0 : i32
    %c0_i32_0 = arith.constant 0 : i32
    return %arg0, %arg1, %c0_i32 : i32, i32, i32
  }
  func.func @transform_4(%arg0: i32, %arg1: i32) -> (i32, i32, i32, i32) {
    %c0_i32 = arith.constant 0 : i32
    %c0_i32_0 = arith.constant 0 : i32
    %c0_i32_1 = arith.constant 0 : i32
    return %arg0, %c0_i32, %arg1, %c0_i32_0 : i32, i32, i32, i32
  }
  func.func @transform_5(%arg0: i32, %arg1: i32) -> (i32, i32, i32) {
    %c0_i32 = arith.constant 0 : i32
    %c0_i32_0 = arith.constant 0 : i32
    %c0_i32_1 = arith.constant 0 : i32
    %c0_i32_2 = arith.constant 0 : i32
    return %c0_i32, %c0_i32_0, %c0_i32_1 : i32, i32, i32
  }
  func.func @transform_6(%arg0: i32, %arg1: i32) -> (i32, i32) {
    %c0_i32 = arith.constant 0 : i32
    %c0_i32_0 = arith.constant 0 : i32
    %c0_i32_1 = arith.constant 0 : i32
    return %c0_i32, %c0_i32_0 : i32, i32
  }
  func.func @transform_7(%arg0: i32, %arg1: i32) -> (i32, i32) {
    %c0_i32 = arith.constant 0 : i32
    %c0_i32_0 = arith.constant 0 : i32
    %c0_i32_1 = arith.constant 0 : i32
    return %c0_i32, %c0_i32_0 : i32, i32
  }
  func.func @transform_8(%arg0: i32, %arg1: i32) -> (i32, i32) {
    %c0_i32 = arith.constant 0 : i32
    %c0_i32_0 = arith.constant 0 : i32
    %c0_i32_1 = arith.constant 0 : i32
    return %c0_i32, %c0_i32_0 : i32, i32
  }
  func.func @transform_9(%arg0: i32, %arg1: i32) -> (i32, i32) {
    %c0_i32 = arith.constant 0 : i32
    %c0_i32_0 = arith.constant 0 : i32
    %c0_i32_1 = arith.constant 0 : i32
    return %c0_i32, %c0_i32_0 : i32, i32
  }
  func.func @transform_10(%arg0: i32, %arg1: i32) -> (i32, i32) {
    %c0_i32 = arith.constant 0 : i32
    %c0_i32_0 = arith.constant 0 : i32
    %c0_i32_1 = arith.constant 0 : i32
    return %c0_i32, %c0_i32_0 : i32, i32
  }
  func.func @transform_11(%arg0: i32, %arg1: i32) -> (i32, i32) {
    %c0_i32 = arith.constant 0 : i32
    %c0_i32_0 = arith.constant 0 : i32
    %c0_i32_1 = arith.constant 0 : i32
    return %c0_i32, %c0_i32_0 : i32, i32
  }
  func.func @transform_12(%arg0: i32, %arg1: i32) -> (i32, i32) {
    %c0_i32 = arith.constant 0 : i32
    %c0_i32_0 = arith.constant 0 : i32
    %c0_i32_1 = arith.constant 0 : i32
    return %c0_i32, %c0_i32_0 : i32, i32
  }
  func.func @transform_13(%arg0: i32, %arg1: i32) -> (i32, i32) {
    %c0_i32 = arith.constant 0 : i32
    %c0_i32_0 = arith.constant 0 : i32
    %c0_i32_1 = arith.constant 0 : i32
    return %c0_i32, %c0_i32_0 : i32, i32
  }
  func.func @transform_14(%arg0: i32, %arg1: i32) -> (i32, i32, i32) {
    %c0_i32 = arith.constant 0 : i32
    %c0_i32_0 = arith.constant 0 : i32
    return %arg0, %arg1, %c0_i32 : i32, i32, i32
  }
}

module attributes {stable_mosaic.version = 11 : i64} {
  func.func @_transformer_block_kernel(%arg0: i32, %arg1: i32, %arg2: memref<1x4x8x8xbf16, #tpu.memory_space<vmem>>, %arg3: memref<1x4x8x8xbf16, #tpu.memory_space<vmem>>, %arg4: memref<1x4x8x8xbf16, #tpu.memory_space<vmem>>, %arg5: memref<1x8x32xbf16, #tpu.memory_space<vmem>>, %arg6: memref<1x1x8x8xbf16, #tpu.memory_space<vmem>>, %arg7: memref<4x8x32xbf16, #tpu.memory_space<vmem>>, %arg8: memref<1x32xf32, #tpu.memory_space<vmem>>, %arg9: memref<1x32xf32, #tpu.memory_space<vmem>>, %arg10: memref<32x128xbf16, #tpu.memory_space<vmem>>, %arg11: memref<1x128xf32, #tpu.memory_space<vmem>>, %arg12: memref<128x32xbf16, #tpu.memory_space<vmem>>, %arg13: memref<1x32xf32, #tpu.memory_space<vmem>>, %arg14: memref<1x32xf32, #tpu.memory_space<vmem>>, %arg15: memref<1x32xf32, #tpu.memory_space<vmem>>, %arg16: memref<1x8x32xbf16, #tpu.memory_space<vmem>>) attributes {dimension_semantics = [#tpu.dimension_semantics<parallel>, #tpu.dimension_semantics<parallel>], iteration_bounds = array<i64: 2, 1>, scalar_prefetch = 0 : i64, scratch_operands = 0 : i64, tpu.core_type = #tpu.core_type<tc>, window_params = [{transform_indices = @transform_0, window_bounds = array<i64: 1, 4, 8, 8>}, {transform_indices = @transform_1, window_bounds = array<i64: 1, 4, 8, 8>}, {transform_indices = @transform_2, window_bounds = array<i64: 1, 4, 8, 8>}, {transform_indices = @transform_3, window_bounds = array<i64: 1, 8, 32>}, {transform_indices = @transform_4, window_bounds = array<i64: 1, 1, 8, 8>}, {pipeline_mode = #tpu.pipeline_mode<synchronous>, transform_indices = @transform_5, window_bounds = array<i64: 4, 8, 32>}, {pipeline_mode = #tpu.pipeline_mode<synchronous>, transform_indices = @transform_6, window_bounds = array<i64: 1, 32>}, {pipeline_mode = #tpu.pipeline_mode<synchronous>, transform_indices = @transform_7, window_bounds = array<i64: 1, 32>}, {pipeline_mode = #tpu.pipeline_mode<synchronous>, transform_indices = @transform_8, window_bounds = array<i64: 32, 128>}, {pipeline_mode = #tpu.pipeline_mode<synchronous>, transform_indices = @transform_9, window_bounds = array<i64: 1, 128>}, {pipeline_mode = #tpu.pipeline_mode<synchronous>, transform_indices = @transform_10, window_bounds = array<i64: 128, 32>}, {pipeline_mode = #tpu.pipeline_mode<synchronous>, transform_indices = @transform_11, window_bounds = array<i64: 1, 32>}, {pipeline_mode = #tpu.pipeline_mode<synchronous>, transform_indices = @transform_12, window_bounds = array<i64: 1, 32>}, {pipeline_mode = #tpu.pipeline_mode<synchronous>, transform_indices = @transform_13, window_bounds = array<i64: 1, 32>}, {transform_indices = @transform_14, window_bounds = array<i64: 1, 8, 32>}]} {
    %c0 = arith.constant 0 : index
    %c0_0 = arith.constant 0 : index
    %c0_1 = arith.constant 0 : index
    %c0_2 = arith.constant 0 : index
    %0 = vector.load %arg2[%c0, %c0_0, %c0_1, %c0_2] : memref<1x4x8x8xbf16, #tpu.memory_space<vmem>>, vector<1x4x8x8xbf16>
    %1 = vector.shape_cast %0 : vector<1x4x8x8xbf16> to vector<4x8x8xbf16>
    %cst = arith.constant 5.656250e+00 : bf16
    %2 = vector.broadcast %cst : bf16 to vector<4x8x8xbf16>
    %3 = arith.mulf %1, %2 : vector<4x8x8xbf16>
    %c0_3 = arith.constant 0 : index
    %c0_4 = arith.constant 0 : index
    %c0_5 = arith.constant 0 : index
    %c0_6 = arith.constant 0 : index
    %4 = vector.load %arg3[%c0_3, %c0_4, %c0_5, %c0_6] : memref<1x4x8x8xbf16, #tpu.memory_space<vmem>>, vector<1x4x8x8xbf16>
    %5 = vector.shape_cast %4 : vector<1x4x8x8xbf16> to vector<4x8x8xbf16>
    %c0_7 = arith.constant 0 : index
    %c0_8 = arith.constant 0 : index
    %c0_9 = arith.constant 0 : index
    %c0_10 = arith.constant 0 : index
    %6 = vector.load %arg4[%c0_7, %c0_8, %c0_9, %c0_10] : memref<1x4x8x8xbf16, #tpu.memory_space<vmem>>, vector<1x4x8x8xbf16>
    %7 = vector.shape_cast %6 : vector<1x4x8x8xbf16> to vector<4x8x8xbf16>
    %cst_11 = arith.constant dense<0.000000e+00> : vector<4x8x8xf32>
    %8 = tpu.matmul %3, %5, %cst_11 {dimension_numbers = #tpu.dot_dimension_numbers<[2], [2], [1], [1], [0, 0, 0, 1, 1, 1], [0], [0]>} : vector<4x8x8xbf16>, vector<4x8x8xbf16>, vector<4x8x8xf32> -> vector<4x8x8xf32>
    %c0_12 = arith.constant 0 : index
    %c0_13 = arith.constant 0 : index
    %c0_14 = arith.constant 0 : index
    %c0_15 = arith.constant 0 : index
    %9 = vector.load %arg6[%c0_12, %c0_13, %c0_14, %c0_15] : memref<1x1x8x8xbf16, #tpu.memory_space<vmem>>, vector<1x1x8x8xbf16>
    %10 = vector.shape_cast %9 : vector<1x1x8x8xbf16> to vector<8x8xbf16>
    %11 = arith.extf %10 : vector<8x8xbf16> to vector<8x8xf32>
    %12 = vector.shape_cast %11 : vector<8x8xf32> to vector<1x8x8xf32>
    %13 = vector.broadcast %12 : vector<1x8x8xf32> to vector<4x8x8xf32>
    %14 = arith.addf %8, %13 : vector<4x8x8xf32>
    %cst_16 = arith.constant dense<0xFF800000> : vector<4x8xf32>
    %15 = vector.multi_reduction <maximumf>, %14, %cst_16 [2] : vector<4x8x8xf32> to vector<4x8xf32>
    %16 = vector.shape_cast %15 : vector<4x8xf32> to vector<4x8x1xf32>
    %17 = vector.broadcast %16 : vector<4x8x1xf32> to vector<4x8x8xf32>
    %18 = arith.subf %14, %17 : vector<4x8x8xf32>
    %19 = math.exp %18 : vector<4x8x8xf32>
    %cst_17 = arith.constant dense<0.000000e+00> : vector<4x8xf32>
    %20 = vector.multi_reduction <add>, %19, %cst_17 [2] : vector<4x8x8xf32> to vector<4x8xf32>
    %21 = vector.shape_cast %20 : vector<4x8xf32> to vector<4x8x1xf32>
    %22 = tpu.reciprocal %21 {approx = true} : vector<4x8x1xf32> -> vector<4x8x1xf32>
    %23 = vector.broadcast %22 : vector<4x8x1xf32> to vector<4x8x8xf32>
    %24 = arith.mulf %19, %23 : vector<4x8x8xf32>
    %25 = arith.truncf %24 : vector<4x8x8xf32> to vector<4x8x8xbf16>
    %cst_18 = arith.constant dense<0.000000e+00> : vector<4x8x8xf32>
    %26 = tpu.matmul %25, %7, %cst_18 {dimension_numbers = #tpu.dot_dimension_numbers<[2], [1], [1], [2], [0, 0, 0, 1, 1, 2], [0], [0]>} : vector<4x8x8xbf16>, vector<4x8x8xbf16>, vector<4x8x8xf32> -> vector<4x8x8xf32>
    %27 = arith.truncf %26 : vector<4x8x8xf32> to vector<4x8x8xbf16>
    %c0_19 = arith.constant 0 : index
    %c0_20 = arith.constant 0 : index
    %c0_21 = arith.constant 0 : index
    %28 = vector.load %arg7[%c0_19, %c0_20, %c0_21] : memref<4x8x32xbf16, #tpu.memory_space<vmem>>, vector<4x8x32xbf16>
    %29 = vector.extract_strided_slice %27 {offsets = [0, 0, 0], sizes = [1, 8, 8], strides = [1, 1, 1]} : vector<4x8x8xbf16> to vector<1x8x8xbf16>
    %30 = vector.shape_cast %29 : vector<1x8x8xbf16> to vector<8x8xbf16>
    %31 = vector.extract_strided_slice %28 {offsets = [0, 0, 0], sizes = [1, 8, 32], strides = [1, 1, 1]} : vector<4x8x32xbf16> to vector<1x8x32xbf16>
    %32 = vector.shape_cast %31 : vector<1x8x32xbf16> to vector<8x32xbf16>
    %cst_22 = arith.constant dense<0.000000e+00> : vector<8x32xf32>
    %33 = tpu.matmul %30, %32, %cst_22 {dimension_numbers = #tpu.dot_dimension_numbers<[1], [0], [0], [1], [0, 0, 1, 1], [], []>} : vector<8x8xbf16>, vector<8x32xbf16>, vector<8x32xf32> -> vector<8x32xf32>
    %34 = vector.extract_strided_slice %27 {offsets = [1, 0, 0], sizes = [1, 8, 8], strides = [1, 1, 1]} : vector<4x8x8xbf16> to vector<1x8x8xbf16>
    %35 = vector.shape_cast %34 : vector<1x8x8xbf16> to vector<8x8xbf16>
    %36 = vector.extract_strided_slice %28 {offsets = [1, 0, 0], sizes = [1, 8, 32], strides = [1, 1, 1]} : vector<4x8x32xbf16> to vector<1x8x32xbf16>
    %37 = vector.shape_cast %36 : vector<1x8x32xbf16> to vector<8x32xbf16>
    %cst_23 = arith.constant dense<0.000000e+00> : vector<8x32xf32>
    %38 = tpu.matmul %35, %37, %cst_23 {dimension_numbers = #tpu.dot_dimension_numbers<[1], [0], [0], [1], [0, 0, 1, 1], [], []>} : vector<8x8xbf16>, vector<8x32xbf16>, vector<8x32xf32> -> vector<8x32xf32>
    %39 = arith.addf %33, %38 : vector<8x32xf32>
    %40 = vector.extract_strided_slice %27 {offsets = [2, 0, 0], sizes = [1, 8, 8], strides = [1, 1, 1]} : vector<4x8x8xbf16> to vector<1x8x8xbf16>
    %41 = vector.shape_cast %40 : vector<1x8x8xbf16> to vector<8x8xbf16>
    %42 = vector.extract_strided_slice %28 {offsets = [2, 0, 0], sizes = [1, 8, 32], strides = [1, 1, 1]} : vector<4x8x32xbf16> to vector<1x8x32xbf16>
    %43 = vector.shape_cast %42 : vector<1x8x32xbf16> to vector<8x32xbf16>
    %cst_24 = arith.constant dense<0.000000e+00> : vector<8x32xf32>
    %44 = tpu.matmul %41, %43, %cst_24 {dimension_numbers = #tpu.dot_dimension_numbers<[1], [0], [0], [1], [0, 0, 1, 1], [], []>} : vector<8x8xbf16>, vector<8x32xbf16>, vector<8x32xf32> -> vector<8x32xf32>
    %45 = arith.addf %39, %44 : vector<8x32xf32>
    %46 = vector.extract_strided_slice %27 {offsets = [3, 0, 0], sizes = [1, 8, 8], strides = [1, 1, 1]} : vector<4x8x8xbf16> to vector<1x8x8xbf16>
    %47 = vector.shape_cast %46 : vector<1x8x8xbf16> to vector<8x8xbf16>
    %48 = vector.extract_strided_slice %28 {offsets = [3, 0, 0], sizes = [1, 8, 32], strides = [1, 1, 1]} : vector<4x8x32xbf16> to vector<1x8x32xbf16>
    %49 = vector.shape_cast %48 : vector<1x8x32xbf16> to vector<8x32xbf16>
    %cst_25 = arith.constant dense<0.000000e+00> : vector<8x32xf32>
    %50 = tpu.matmul %47, %49, %cst_25 {dimension_numbers = #tpu.dot_dimension_numbers<[1], [0], [0], [1], [0, 0, 1, 1], [], []>} : vector<8x8xbf16>, vector<8x32xbf16>, vector<8x32xf32> -> vector<8x32xf32>
    %51 = arith.addf %45, %50 : vector<8x32xf32>
    %c0_26 = arith.constant 0 : index
    %c0_27 = arith.constant 0 : index
    %c0_28 = arith.constant 0 : index
    %52 = vector.load %arg5[%c0_26, %c0_27, %c0_28] : memref<1x8x32xbf16, #tpu.memory_space<vmem>>, vector<1x8x32xbf16>
    %53 = vector.shape_cast %52 : vector<1x8x32xbf16> to vector<8x32xbf16>
    %54 = arith.extf %53 : vector<8x32xbf16> to vector<8x32xf32>
    %55 = arith.addf %51, %54 : vector<8x32xf32>
    %c0_29 = arith.constant 0 : index
    %c0_30 = arith.constant 0 : index
    %56 = vector.load %arg8[%c0_29, %c0_30] : memref<1x32xf32, #tpu.memory_space<vmem>>, vector<1x32xf32>
    %c0_31 = arith.constant 0 : index
    %c0_32 = arith.constant 0 : index
    %57 = vector.load %arg9[%c0_31, %c0_32] : memref<1x32xf32, #tpu.memory_space<vmem>>, vector<1x32xf32>
    %cst_33 = arith.constant dense<0.000000e+00> : vector<8xf32>
    %58 = vector.multi_reduction <add>, %55, %cst_33 [1] : vector<8x32xf32> to vector<8xf32>
    %59 = vector.shape_cast %58 : vector<8xf32> to vector<8x1xf32>
    %cst_34 = arith.constant 3.200000e+01 : f32
    %60 = vector.broadcast %cst_34 : f32 to vector<8x1xf32>
    %61 = arith.divf %59, %60 : vector<8x1xf32>
    %62 = vector.broadcast %61 : vector<8x1xf32> to vector<8x32xf32>
    %63 = arith.subf %55, %62 : vector<8x32xf32>
    %64 = arith.mulf %63, %63 : vector<8x32xf32>
    %cst_35 = arith.constant dense<0.000000e+00> : vector<8xf32>
    %65 = vector.multi_reduction <add>, %64, %cst_35 [1] : vector<8x32xf32> to vector<8xf32>
    %66 = vector.shape_cast %65 : vector<8xf32> to vector<8x1xf32>
    %cst_36 = arith.constant 3.200000e+01 : f32
    %67 = vector.broadcast %cst_36 : f32 to vector<8x1xf32>
    %68 = arith.divf %66, %67 : vector<8x1xf32>
    %69 = vector.broadcast %61 : vector<8x1xf32> to vector<8x32xf32>
    %70 = arith.subf %55, %69 : vector<8x32xf32>
    %cst_37 = arith.constant 9.99999974E-6 : f32
    %71 = vector.broadcast %cst_37 : f32 to vector<8x1xf32>
    %72 = arith.addf %68, %71 : vector<8x1xf32>
    %73 = math.rsqrt %72 : vector<8x1xf32>
    %74 = vector.broadcast %73 : vector<8x1xf32> to vector<8x32xf32>
    %75 = arith.mulf %70, %74 : vector<8x32xf32>
    %76 = vector.broadcast %56 : vector<1x32xf32> to vector<8x32xf32>
    %77 = arith.mulf %75, %76 : vector<8x32xf32>
    %78 = vector.broadcast %57 : vector<1x32xf32> to vector<8x32xf32>
    %79 = arith.addf %77, %78 : vector<8x32xf32>
    %80 = arith.truncf %79 : vector<8x32xf32> to vector<8x32xbf16>
    %c0_38 = arith.constant 0 : index
    %c0_39 = arith.constant 0 : index
    %81 = vector.load %arg10[%c0_38, %c0_39] : memref<32x128xbf16, #tpu.memory_space<vmem>>, vector<32x128xbf16>
    %cst_40 = arith.constant dense<0.000000e+00> : vector<8x128xf32>
    %82 = tpu.matmul %80, %81, %cst_40 {dimension_numbers = #tpu.dot_dimension_numbers<[1], [0], [0], [1], [0, 0, 1, 1], [], []>} : vector<8x32xbf16>, vector<32x128xbf16>, vector<8x128xf32> -> vector<8x128xf32>
    %c0_41 = arith.constant 0 : index
    %c0_42 = arith.constant 0 : index
    %83 = vector.load %arg11[%c0_41, %c0_42] : memref<1x128xf32, #tpu.memory_space<vmem>>, vector<1x128xf32>
    %84 = vector.broadcast %83 : vector<1x128xf32> to vector<8x128xf32>
    %85 = arith.addf %82, %84 : vector<8x128xf32>
    %cst_43 = arith.constant 0.000000e+00 : f32
    %86 = vector.broadcast %cst_43 : f32 to vector<8x128xf32>
    %87 = arith.maximumf %85, %86 : vector<8x128xf32>
    %88 = arith.truncf %87 : vector<8x128xf32> to vector<8x128xbf16>
    %c0_44 = arith.constant 0 : index
    %c0_45 = arith.constant 0 : index
    %89 = vector.load %arg12[%c0_44, %c0_45] : memref<128x32xbf16, #tpu.memory_space<vmem>>, vector<128x32xbf16>
    %cst_46 = arith.constant dense<0.000000e+00> : vector<8x32xf32>
    %90 = tpu.matmul %88, %89, %cst_46 {dimension_numbers = #tpu.dot_dimension_numbers<[1], [0], [0], [1], [0, 0, 1, 1], [], []>} : vector<8x128xbf16>, vector<128x32xbf16>, vector<8x32xf32> -> vector<8x32xf32>
    %c0_47 = arith.constant 0 : index
    %c0_48 = arith.constant 0 : index
    %91 = vector.load %arg13[%c0_47, %c0_48] : memref<1x32xf32, #tpu.memory_space<vmem>>, vector<1x32xf32>
    %92 = vector.broadcast %91 : vector<1x32xf32> to vector<8x32xf32>
    %93 = arith.addf %90, %92 : vector<8x32xf32>
    %94 = arith.addf %93, %79 : vector<8x32xf32>
    %c0_49 = arith.constant 0 : index
    %c0_50 = arith.constant 0 : index
    %95 = vector.load %arg14[%c0_49, %c0_50] : memref<1x32xf32, #tpu.memory_space<vmem>>, vector<1x32xf32>
    %c0_51 = arith.constant 0 : index
    %c0_52 = arith.constant 0 : index
    %96 = vector.load %arg15[%c0_51, %c0_52] : memref<1x32xf32, #tpu.memory_space<vmem>>, vector<1x32xf32>
    %cst_53 = arith.constant dense<0.000000e+00> : vector<8xf32>
    %97 = vector.multi_reduction <add>, %94, %cst_53 [1] : vector<8x32xf32> to vector<8xf32>
    %98 = vector.shape_cast %97 : vector<8xf32> to vector<8x1xf32>
    %cst_54 = arith.constant 3.200000e+01 : f32
    %99 = vector.broadcast %cst_54 : f32 to vector<8x1xf32>
    %100 = arith.divf %98, %99 : vector<8x1xf32>
    %101 = vector.broadcast %100 : vector<8x1xf32> to vector<8x32xf32>
    %102 = arith.subf %94, %101 : vector<8x32xf32>
    %103 = arith.mulf %102, %102 : vector<8x32xf32>
    %cst_55 = arith.constant dense<0.000000e+00> : vector<8xf32>
    %104 = vector.multi_reduction <add>, %103, %cst_55 [1] : vector<8x32xf32> to vector<8xf32>
    %105 = vector.shape_cast %104 : vector<8xf32> to vector<8x1xf32>
    %cst_56 = arith.constant 3.200000e+01 : f32
    %106 = vector.broadcast %cst_56 : f32 to vector<8x1xf32>
    %107 = arith.divf %105, %106 : vector<8x1xf32>
    %108 = vector.broadcast %100 : vector<8x1xf32> to vector<8x32xf32>
    %109 = arith.subf %94, %108 : vector<8x32xf32>
    %cst_57 = arith.constant 9.99999974E-6 : f32
    %110 = vector.broadcast %cst_57 : f32 to vector<8x1xf32>
    %111 = arith.addf %107, %110 : vector<8x1xf32>
    %112 = math.rsqrt %111 : vector<8x1xf32>
    %113 = vector.broadcast %112 : vector<8x1xf32> to vector<8x32xf32>
    %114 = arith.mulf %109, %113 : vector<8x32xf32>
    %115 = vector.broadcast %95 : vector<1x32xf32> to vector<8x32xf32>
    %116 = arith.mulf %114, %115 : vector<8x32xf32>
    %117 = vector.broadcast %96 : vector<1x32xf32> to vector<8x32xf32>
    %118 = arith.addf %116, %117 : vector<8x32xf32>
    %119 = arith.truncf %118 : vector<8x32xf32> to vector<8x32xbf16>
    %c0_58 = arith.constant 0 : index
    %c0_59 = arith.constant 0 : index
    %c0_60 = arith.constant 0 : index
    %120 = vector.load %arg16[%c0_58, %c0_59, %c0_60] : memref<1x8x32xbf16, #tpu.memory_space<vmem>>, vector<1x8x32xbf16>
    %121 = vector.shape_cast %120 : vector<1x8x32xbf16> to vector<8x32xbf16>
    %122 = vector.shape_cast %119 : vector<8x32xbf16> to vector<1x8x32xbf16>
    tpu.vector_store %arg16[%c0_58, %c0_59, %c0_60], %122 {strides = array<i32>} : memref<1x8x32xbf16, #tpu.memory_space<vmem>>, vector<1x8x32xbf16>,
    return
  }
  func.func @transform_0(%arg0: i32, %arg1: i32) -> (i32, i32, i32, i32) {
    %c0_i32 = arith.constant 0 : i32
    %c0_i32_0 = arith.constant 0 : i32
    %c0_i32_1 = arith.constant 0 : i32
    return %arg0, %c0_i32, %arg1, %c0_i32_0 : i32, i32, i32, i32
  }
  func.func @transform_1(%arg0: i32, %arg1: i32) -> (i32, i32, i32, i32) {
    %c0_i32 = arith.constant 0 : i32
    %c0_i32_0 = arith.constant 0 : i32
    %c0_i32_1 = arith.constant 0 : i32
    %c0_i32_2 = arith.constant 0 : i32
    return %arg0, %c0_i32, %c0_i32_0, %c0_i32_1 : i32, i32, i32, i32
  }
  func.func @transform_2(%arg0: i32, %arg1: i32) -> (i32, i32, i32, i32) {
    %c0_i32 = arith.constant 0 : i32
    %c0_i32_0 = arith.constant 0 : i32
    %c0_i32_1 = arith.constant 0 : i32
    %c0_i32_2 = arith.constant 0 : i32
    return %arg0, %c0_i32, %c0_i32_0, %c0_i32_1 : i32, i32, i32, i32
  }
  func.func @transform_3(%arg0: i32, %arg1: i32) -> (i32, i32, i32) {
    %c0_i32 = arith.constant 0 : i32
    %c0_i32_0 = arith.constant 0 : i32
    return %arg0, %arg1, %c0_i32 : i32, i32, i32
  }
  func.func @transform_4(%arg0: i32, %arg1: i32) -> (i32, i32, i32, i32) {
    %c0_i32 = arith.constant 0 : i32
    %c0_i32_0 = arith.constant 0 : i32
    %c0_i32_1 = arith.constant 0 : i32
    return %arg0, %c0_i32, %arg1, %c0_i32_0 : i32, i32, i32, i32
  }
  func.func @transform_5(%arg0: i32, %arg1: i32) -> (i32, i32, i32) {
    %c0_i32 = arith.constant 0 : i32
    %c0_i32_0 = arith.constant 0 : i32
    %c0_i32_1 = arith.constant 0 : i32
    %c0_i32_2 = arith.constant 0 : i32
    return %c0_i32, %c0_i32_0, %c0_i32_1 : i32, i32, i32
  }
  func.func @transform_6(%arg0: i32, %arg1: i32) -> (i32, i32) {
    %c0_i32 = arith.constant 0 : i32
    %c0_i32_0 = arith.constant 0 : i32
    %c0_i32_1 = arith.constant 0 : i32
    return %c0_i32, %c0_i32_0 : i32, i32
  }
  func.func @transform_7(%arg0: i32, %arg1: i32) -> (i32, i32) {
    %c0_i32 = arith.constant 0 : i32
    %c0_i32_0 = arith.constant 0 : i32
    %c0_i32_1 = arith.constant 0 : i32
    return %c0_i32, %c0_i32_0 : i32, i32
  }
  func.func @transform_8(%arg0: i32, %arg1: i32) -> (i32, i32) {
    %c0_i32 = arith.constant 0 : i32
    %c0_i32_0 = arith.constant 0 : i32
    %c0_i32_1 = arith.constant 0 : i32
    return %c0_i32, %c0_i32_0 : i32, i32
  }
  func.func @transform_9(%arg0: i32, %arg1: i32) -> (i32, i32) {
    %c0_i32 = arith.constant 0 : i32
    %c0_i32_0 = arith.constant 0 : i32
    %c0_i32_1 = arith.constant 0 : i32
    return %c0_i32, %c0_i32_0 : i32, i32
  }
  func.func @transform_10(%arg0: i32, %arg1: i32) -> (i32, i32) {
    %c0_i32 = arith.constant 0 : i32
    %c0_i32_0 = arith.constant 0 : i32
    %c0_i32_1 = arith.constant 0 : i32
    return %c0_i32, %c0_i32_0 : i32, i32
  }
  func.func @transform_11(%arg0: i32, %arg1: i32) -> (i32, i32) {
    %c0_i32 = arith.constant 0 : i32
    %c0_i32_0 = arith.constant 0 : i32
    %c0_i32_1 = arith.constant 0 : i32
    return %c0_i32, %c0_i32_0 : i32, i32
  }
  func.func @transform_12(%arg0: i32, %arg1: i32) -> (i32, i32) {
    %c0_i32 = arith.constant 0 : i32
    %c0_i32_0 = arith.constant 0 : i32
    %c0_i32_1 = arith.constant 0 : i32
    return %c0_i32, %c0_i32_0 : i32, i32
  }
  func.func @transform_13(%arg0: i32, %arg1: i32) -> (i32, i32) {
    %c0_i32 = arith.constant 0 : i32
    %c0_i32_0 = arith.constant 0 : i32
    %c0_i32_1 = arith.constant 0 : i32
    return %c0_i32, %c0_i32_0 : i32, i32
  }
  func.func @transform_14(%arg0: i32, %arg1: i32) -> (i32, i32, i32) {
    %c0_i32 = arith.constant 0 : i32
    %c0_i32_0 = arith.constant 0 : i32
    return %arg0, %arg1, %c0_i32 : i32, i32, i32
  }
}

</mosaic_0001>

<llo_original>
// kernel: tpu_custom_call.1
$region0: #{tpu_custom_call.1}
  #allocation0 [shape = 'u32[]', space=smem, size = 0x4, offset = 0x4, fixed_abs, tag = 'smem constant byte address 0x4 - core index']
  #allocation1 [shape = 'u32[144,128]{1,0:T(1,128)}', space=vmem, size = 0x12000, scoped, tag = 'internal scratch']
  %s0 = inlined_call_operand.vmem [shape: bf16[2,4,8,8], index: 0, kind: input, shape index: {}]
  %s1 = inlined_call_operand.vmem [shape: bf16[2,4,8,8], index: 1, kind: input, shape index: {}]
  %s2 = inlined_call_operand.hbm [shape: bf16[2,4,8,8], index: 2, kind: input, shape index: {}]
  %s3 = inlined_call_operand.hbm [shape: bf16[2,8,32], index: 3, kind: input, shape index: {}]
  %s4 = inlined_call_operand.hbm [shape: bf16[2,1,8,8], index: 4, kind: input, shape index: {}]
  %s5 = inlined_call_operand.vmem [shape: bf16[4,8,32], index: 5, kind: input, shape index: {}]
  %s6 = inlined_call_operand.vmem [shape: f32[1,32], index: 6, kind: input, shape index: {}]
  %s7 = inlined_call_operand.vmem [shape: f32[1,32], index: 7, kind: input, shape index: {}]
  %s8 = inlined_call_operand.hbm [shape: bf16[32,128], index: 8, kind: input, shape index: {}]
  %s9 = inlined_call_operand.hbm [shape: f32[1,128], index: 9, kind: input, shape index: {}]
  %s10 = inlined_call_operand.vmem [shape: bf16[128,32], index: 10, kind: input, shape index: {}]
  %s11 = inlined_call_operand.vmem [shape: f32[1,32], index: 11, kind: input, shape index: {}]
  %s12 = inlined_call_operand.vmem [shape: f32[1,32], index: 12, kind: input, shape index: {}]
  %s13 = inlined_call_operand.vmem [shape: f32[1,32], index: 13, kind: input, shape index: {}]
  %s14 = inlined_call_operand.hbm [shape: bf16[2,8,32], index: 14, kind: output, shape index: {}]
  %s15 = sld [smem:[#allocation0]]
  $region109: #{tpu_custom_call.1} parent=0
    _
  %s17 = ssub.s32 1, %s15
  %s18 = scalar_select 0, %s17, %s15
  $region1: #{tpu_custom_call.1} parent=0
    #allocation2 [shape = 'u8[16384]{0}', space=vmem, size = 0x4000, scoped, tag = 'input window, operand 2']
    #allocation3 [shape = 's32[2]{0}', space=sflag, size = 0x8, scoped, tag = 'scoped memory for tpu_custom_call.1']
    #allocation4 [shape = 's32[2]{0}', space=sflag, size = 0x8, scoped, tag = 'scoped memory for tpu_custom_call.1']
    #allocation5 [shape = 'u8[4096]{0}', space=vmem, size = 0x1000, scoped, tag = 'input window, operand 3']
    #allocation6 [shape = 's32[2]{0}', space=sflag, size = 0x8, scoped, tag = 'scoped memory for tpu_custom_call.1']
    #allocation7 [shape = 'u8[4096]{0}', space=vmem, size = 0x1000, scoped, tag = 'input window, operand 4']
    #allocation8 [shape = 'u8[8192]{0}', space=vmem, size = 0x2000, scoped, tag = 'input window, operand 8, single buffered']
    #allocation9 [shape = 's32[1]{0}', space=sflag, size = 0x4, scoped, tag = 'scoped memory for tpu_custom_call.1']
    #allocation10 [shape = 'u8[512]{0}', space=vmem, size = 0x400, scoped, tag = 'input window, operand 9, single buffered']
    #allocation11 [shape = 'u8[4096]{0}', space=vmem, size = 0x1000, scoped, tag = 'output window, operand 0']
    %19 = vsyncpa [#allocation3], 0
    %s20 = scalar_lea.sflag [#allocation3], 1
    %21 = vsyncpa %s20, 0
    %22 = vsyncpa [#allocation6], 0
    %s23 = scalar_lea.sflag [#allocation6], 1
    %24 = vsyncpa %s23, 0
    %25 = vsyncpa [#allocation9], 0
    %26 = vsyncpa [#allocation4], 0
    %s27 = scalar_lea.sflag [#allocation4], 1
    %28 = vsyncpa %s27, 0
    loop: start=0, step=1, limit=4
    $region2: #{tpu_custom_call.1} parent=1 // loop_pre_header
      _
    $region3: #{tpu_custom_call.1} parent=1 // loop_header
      %s30 = sphi 0, %s34
      %p31 = scmp.ge.s32.totalorder %s30, 4
      %s37 = sphi 0, %s49
      %s38 = sphi 0, %s45
      %s39 = sphi 0, %s37
      %s40 = sphi 0, %s38
      %s41 = sphi 0, %s39
      %s42 = sphi 0, %s40
      %s54 = sphi 0, %s56
      %s57 = sphi 0, %s54
      %s58 = sphi 0, %s57
      %s74 = sphi 0, %s58
      %s80 = sphi 0, %s82
      %s83 = sphi 0, %s80
      %s84 = sphi 0, %s83
      %s100 = sphi 0, %s84
      %s106 = sphi 0, %s108
      %s109 = sphi 0, %s106
      %s110 = sphi 0, %s109
      %s126 = sphi 0, %s110
      %s134 = sphi 0, %s136
      %s137 = sphi 0, %s134
      %s138 = sphi 0, %s137
      %s154 = sphi 0, %s138
      %s162 = sphi 0, %s164
      %s165 = sphi 0, %s162
      %s166 = sphi 0, %s165
      %s182 = sphi 0, %s166
      %s186 = sphi 0, %s186
      %s188 = sphi 0, %s186
      %s189 = sphi 0, %s188
      %s203 = sphi 0, %s189
      %s207 = sphi 0, %s207
      %s209 = sphi 0, %s207
      %s210 = sphi 0, %s209
      %s224 = sphi 0, %s210
      %s228 = sphi 0, %s228
      %s230 = sphi 0, %s228
      %s231 = sphi 0, %s230
      %s245 = sphi 0, %s231
      %s249 = sphi 0, %s249
      %s251 = sphi 0, %s249
      %s252 = sphi 0, %s251
      %s266 = sphi 0, %s252
      %s270 = sphi 0, %s270
      %s272 = sphi 0, %s270
      %s273 = sphi 0, %s272
      %s287 = sphi 0, %s273
      %s291 = sphi 0, %s291
      %s293 = sphi 0, %s291
      %s294 = sphi 0, %s293
      %s308 = sphi 0, %s294
      %s312 = sphi 0, %s312
      %s314 = sphi 0, %s312
      %s315 = sphi 0, %s314
      %s329 = sphi 0, %s315
      %s333 = sphi 0, %s333
      %s335 = sphi 0, %s333
      %s336 = sphi 0, %s335
      %s350 = sphi 0, %s336
      %s354 = sphi 0, %s354
      %s356 = sphi 0, %s354
      %s357 = sphi 0, %s356
      %s371 = sphi 0, %s357
      %s379 = sphi 0, %s381
      %s382 = sphi 0, %s379
      %s383 = sphi 0, %s382
      %s399 = sphi 0, %s383
    $region4: #{tpu_custom_call.1} parent=1 // loop_header_branch
      %33 = sbr.rel (%p31) target = $region8
    $region5: #{tpu_custom_call.1} parent=1 // loop_body
      %s35 = ssub.s32 %s30, 1
      %s36 = ssub.s32 %s30, 2
      %s43 = sadd.s32 1, %s38
      %p44 = scmp.ge.s32.totalorder %s43, 1
      %s45 = scalar_select %p44, 0, %s43
      %s46 = sadd.s32 1, %s37
      %s47 = scalar_select %p44, %s46, %s37
      %p48 = scmp.ge.s32.totalorder %s47, 2
      %s49 = scalar_select %p48, 0, %s47
      %s50 = ssub.s32 %s37, %s49
      %s51 = ssub.s32 %s38, %s45
      %s52 = sor.u32 %s50, %s51
      %p53 = scmp.eq.s32.totalorder %s52, 0
      %s55 = sadd.s32 %s54, 1
      %s56 = scalar_select %p53, %s54, %s55
      %p59 = pneg %p53
      %p60 = scmp.eq.s32.totalorder %s30, 1
      %p61 = por %p59, %p60
      %p62 = scmp.ne.s32.totalorder %s54, %s57
      %p63 = scmp.eq.s32.totalorder %s30, 0
      %p64 = por %p62, %p63
      %p65 = scmp.ne.s32.totalorder %s54, %s57
      %p66 = scmp.eq.s32.totalorder %s35, 1
      %p67 = por %p65, %p66
      %p68 = scmp.ne.s32.totalorder %s57, %s58
      %p69 = scmp.eq.s32.totalorder %s35, 0
      %p70 = por %p68, %p69
      %p71 = scmp.ne.s32.totalorder %s57, %s58
      %p72 = scmp.eq.s32.totalorder %s36, 1
      %p73 = por %p71, %p72
      %p75 = scmp.ne.s32.totalorder %s58, %s74
      %p76 = scmp.eq.s32.totalorder %s36, 0
      %p77 = por %p75, %p76
      %s78 = ssub.s32 %s37, %s49
      %p79 = scmp.eq.s32.totalorder %s78, 0
      %s81 = sadd.s32 %s80, 1
      %s82 = scalar_select %p79, %s80, %s81
      %p85 = pneg %p79
      %p86 = scmp.eq.s32.totalorder %s30, 1
      %p87 = por %p85, %p86
      %p88 = scmp.ne.s32.totalorder %s80, %s83
      %p89 = scmp.eq.s32.totalorder %s30, 0
      %p90 = por %p88, %p89
      %p91 = scmp.ne.s32.totalorder %s80, %s83
      %p92 = scmp.eq.s32.totalorder %s35, 1
      %p93 = por %p91, %p92
      %p94 = scmp.ne.s32.totalorder %s83, %s84
      %p95 = scmp.eq.s32.totalorder %s35, 0
      %p96 = por %p94, %p95
      %p97 = scmp.ne.s32.totalorder %s83, %s84
      %p98 = scmp.eq.s32.totalorder %s36, 1
      %p99 = por %p97, %p98
      %p101 = scmp.ne.s32.totalorder %s84, %s100
      %p102 = scmp.eq.s32.totalorder %s36, 0
      %p103 = por %p101, %p102
      %s104 = ssub.s32 %s37, %s49
      %p105 = scmp.eq.s32.totalorder %s104, 0
      %s107 = sadd.s32 %s106, 1
      %s108 = scalar_select %p105, %s106, %s107
      %p111 = pneg %p105
      %p112 = scmp.eq.s32.totalorder %s30, 1
      %p113 = por %p111, %p112
      %p114 = scmp.ne.s32.totalorder %s106, %s109
      %p115 = scmp.eq.s32.totalorder %s30, 0
      %p116 = por %p114, %p115
      %p117 = scmp.ne.s32.totalorder %s106, %s109
      %p118 = scmp.eq.s32.totalorder %s35, 1
      %p119 = por %p117, %p118
      %p120 = scmp.ne.s32.totalorder %s109, %s110
      %p121 = scmp.eq.s32.totalorder %s35, 0
      %p122 = por %p120, %p121
      %p123 = scmp.ne.s32.totalorder %s109, %s110
      %p124 = scmp.eq.s32.totalorder %s36, 1
      %p125 = por %p123, %p124
      %p127 = scmp.ne.s32.totalorder %s110, %s126
      %p128 = scmp.eq.s32.totalorder %s36, 0
      %p129 = por %p127, %p128
      %s130 = ssub.s32 %s37, %s49
      %s131 = ssub.s32 %s38, %s45
      %s132 = sor.u32 %s130, %s131
      %p133 = scmp.eq.s32.totalorder %s132, 0
      %s135 = sadd.s32 %s134, 1
      %s136 = scalar_select %p133, %s134, %s135
      %p139 = pneg %p133
      %p140 = scmp.eq.s32.totalorder %s30, 1
      %p141 = por %p139, %p140
      %p142 = scmp.ne.s32.totalorder %s134, %s137
      %p143 = scmp.eq.s32.totalorder %s30, 0
      %p144 = por %p142, %p143
      %p145 = scmp.ne.s32.totalorder %s134, %s137
      %p146 = scmp.eq.s32.totalorder %s35, 1
      %p147 = por %p145, %p146
      %p148 = scmp.ne.s32.totalorder %s137, %s138
      %p149 = scmp.eq.s32.totalorder %s35, 0
      %p150 = por %p148, %p149
      %p151 = scmp.ne.s32.totalorder %s137, %s138
      %p152 = scmp.eq.s32.totalorder %s36, 1
      %p153 = por %p151, %p152
      %p155 = scmp.ne.s32.totalorder %s138, %s154
      %p156 = scmp.eq.s32.totalorder %s36, 0
      %p157 = por %p155, %p156
      %s158 = ssub.s32 %s37, %s49
      %s159 = ssub.s32 %s38, %s45
      %s160 = sor.u32 %s158, %s159
      %p161 = scmp.eq.s32.totalorder %s160, 0
      %s163 = sadd.s32 %s162, 1
      %s164 = scalar_select %p161, %s162, %s163
      %p167 = pneg %p161
      %p168 = scmp.eq.s32.totalorder %s30, 1
      %p169 = por %p167, %p168
      %p170 = scmp.ne.s32.totalorder %s162, %s165
      %p171 = scmp.eq.s32.totalorder %s30, 0
      %p172 = por %p170, %p171
      %p173 = scmp.ne.s32.totalorder %s162, %s165
      %p174 = scmp.eq.s32.totalorder %s35, 1
      %p175 = por %p173, %p174
      %p176 = scmp.ne.s32.totalorder %s165, %s166
      %p177 = scmp.eq.s32.totalorder %s35, 0
      %p178 = por %p176, %p177
      %p179 = scmp.ne.s32.totalorder %s165, %s166
      %p180 = scmp.eq.s32.totalorder %s36, 1
      %p181 = por %p179, %p180
      %p183 = scmp.ne.s32.totalorder %s166, %s182
      %p184 = scmp.eq.s32.totalorder %s36, 0
      %p185 = por %p183, %p184
      %s187 = sadd.s32 %s186, 1
      %p190 = scmp.eq.s32.totalorder %s30, 1
      %p191 = scmp.ne.s32.totalorder %s186, %s188
      %p192 = scmp.eq.s32.totalorder %s30, 0
      %p193 = por %p191, %p192
      %p194 = scmp.ne.s32.totalorder %s186, %s188
      %p195 = scmp.eq.s32.totalorder %s35, 1
      %p196 = por %p194, %p195
      %p197 = scmp.ne.s32.totalorder %s188, %s189
      %p198 = scmp.eq.s32.totalorder %s35, 0
      %p199 = por %p197, %p198
      %p200 = scmp.ne.s32.totalorder %s188, %s189
      %p201 = scmp.eq.s32.totalorder %s36, 1
      %p202 = por %p200, %p201
      %p204 = scmp.ne.s32.totalorder %s189, %s203
      %p205 = scmp.eq.s32.totalorder %s36, 0
      %p206 = por %p204, %p205
      %s208 = sadd.s32 %s207, 1
      %p211 = scmp.eq.s32.totalorder %s30, 1
      %p212 = scmp.ne.s32.totalorder %s207, %s209
      %p213 = scmp.eq.s32.totalorder %s30, 0
      %p214 = por %p212, %p213
      %p215 = scmp.ne.s32.totalorder %s207, %s209
      %p216 = scmp.eq.s32.totalorder %s35, 1
      %p217 = por %p215, %p216
      %p218 = scmp.ne.s32.totalorder %s209, %s210
      %p219 = scmp.eq.s32.totalorder %s35, 0
      %p220 = por %p218, %p219
      %p221 = scmp.ne.s32.totalorder %s209, %s210
      %p222 = scmp.eq.s32.totalorder %s36, 1
      %p223 = por %p221, %p222
      %p225 = scmp.ne.s32.totalorder %s210, %s224
      %p226 = scmp.eq.s32.totalorder %s36, 0
      %p227 = por %p225, %p226
      %s229 = sadd.s32 %s228, 1
      %p232 = scmp.eq.s32.totalorder %s30, 1
      %p233 = scmp.ne.s32.totalorder %s228, %s230
      %p234 = scmp.eq.s32.totalorder %s30, 0
      %p235 = por %p233, %p234
      %p236 = scmp.ne.s32.totalorder %s228, %s230
      %p237 = scmp.eq.s32.totalorder %s35, 1
      %p238 = por %p236, %p237
      %p239 = scmp.ne.s32.totalorder %s230, %s231
      %p240 = scmp.eq.s32.totalorder %s35, 0
      %p241 = por %p239, %p240
      %p242 = scmp.ne.s32.totalorder %s230, %s231
      %p243 = scmp.eq.s32.totalorder %s36, 1
      %p244 = por %p242, %p243
      %p246 = scmp.ne.s32.totalorder %s231, %s245
      %p247 = scmp.eq.s32.totalorder %s36, 0
      %p248 = por %p246, %p247
      %s250 = sadd.s32 %s249, 1
      %p253 = scmp.eq.s32.totalorder %s30, 1
      %p254 = scmp.ne.s32.totalorder %s249, %s251
      %p255 = scmp.eq.s32.totalorder %s30, 0
      %p256 = por %p254, %p255
      %p257 = scmp.ne.s32.totalorder %s249, %s251
      %p258 = scmp.eq.s32.totalorder %s35, 1
      %p259 = por %p257, %p258
      %p260 = scmp.ne.s32.totalorder %s251, %s252
      %p261 = scmp.eq.s32.totalorder %s35, 0
      %p262 = por %p260, %p261
      %p263 = scmp.ne.s32.totalorder %s251, %s252
      %p264 = scmp.eq.s32.totalorder %s36, 1
      %p265 = por %p263, %p264
      %p267 = scmp.ne.s32.totalorder %s252, %s266
      %p268 = scmp.eq.s32.totalorder %s36, 0
      %p269 = por %p267, %p268
      %s271 = sadd.s32 %s270, 1
      %p274 = scmp.eq.s32.totalorder %s30, 1
      %p275 = scmp.ne.s32.totalorder %s270, %s272
      %p276 = scmp.eq.s32.totalorder %s30, 0
      %p277 = por %p275, %p276
      %p278 = scmp.ne.s32.totalorder %s270, %s272
      %p279 = scmp.eq.s32.totalorder %s35, 1
      %p280 = por %p278, %p279
      %p281 = scmp.ne.s32.totalorder %s272, %s273
      %p282 = scmp.eq.s32.totalorder %s35, 0
      %p283 = por %p281, %p282
      %p284 = scmp.ne.s32.totalorder %s272, %s273
      %p285 = scmp.eq.s32.totalorder %s36, 1
      %p286 = por %p284, %p285
      %p288 = scmp.ne.s32.totalorder %s273, %s287
      %p289 = scmp.eq.s32.totalorder %s36, 0
      %p290 = por %p288, %p289
      %s292 = sadd.s32 %s291, 1
      %p295 = scmp.eq.s32.totalorder %s30, 1
      %p296 = scmp.ne.s32.totalorder %s291, %s293
      %p297 = scmp.eq.s32.totalorder %s30, 0
      %p298 = por %p296, %p297
      %p299 = scmp.ne.s32.totalorder %s291, %s293
      %p300 = scmp.eq.s32.totalorder %s35, 1
      %p301 = por %p299, %p300
      %p302 = scmp.ne.s32.totalorder %s293, %s294
      %p303 = scmp.eq.s32.totalorder %s35, 0
      %p304 = por %p302, %p303
      %p305 = scmp.ne.s32.totalorder %s293, %s294
      %p306 = scmp.eq.s32.totalorder %s36, 1
      %p307 = por %p305, %p306
      %p309 = scmp.ne.s32.totalorder %s294, %s308
      %p310 = scmp.eq.s32.totalorder %s36, 0
      %p311 = por %p309, %p310
      %s313 = sadd.s32 %s312, 1
      %p316 = scmp.eq.s32.totalorder %s30, 1
      %p317 = scmp.ne.s32.totalorder %s312, %s314
      %p318 = scmp.eq.s32.totalorder %s30, 0
      %p319 = por %p317, %p318
      %p320 = scmp.ne.s32.totalorder %s312, %s314
      %p321 = scmp.eq.s32.totalorder %s35, 1
      %p322 = por %p320, %p321
      %p323 = scmp.ne.s32.totalorder %s314, %s315
      %p324 = scmp.eq.s32.totalorder %s35, 0
      %p325 = por %p323, %p324
      %p326 = scmp.ne.s32.totalorder %s314, %s315
      %p327 = scmp.eq.s32.totalorder %s36, 1
      %p328 = por %p326, %p327
      %p330 = scmp.ne.s32.totalorder %s315, %s329
      %p331 = scmp.eq.s32.totalorder %s36, 0
      %p332 = por %p330, %p331
      %s334 = sadd.s32 %s333, 1
      %p337 = scmp.eq.s32.totalorder %s30, 1
      %p338 = scmp.ne.s32.totalorder %s333, %s335
      %p339 = scmp.eq.s32.totalorder %s30, 0
      %p340 = por %p338, %p339
      %p341 = scmp.ne.s32.totalorder %s333, %s335
      %p342 = scmp.eq.s32.totalorder %s35, 1
      %p343 = por %p341, %p342
      %p344 = scmp.ne.s32.totalorder %s335, %s336
      %p345 = scmp.eq.s32.totalorder %s35, 0
      %p346 = por %p344, %p345
      %p347 = scmp.ne.s32.totalorder %s335, %s336
      %p348 = scmp.eq.s32.totalorder %s36, 1
      %p349 = por %p347, %p348
      %p351 = scmp.ne.s32.totalorder %s336, %s350
      %p352 = scmp.eq.s32.totalorder %s36, 0
      %p353 = por %p351, %p352
      %s355 = sadd.s32 %s354, 1
      %p358 = scmp.eq.s32.totalorder %s30, 1
      %p359 = scmp.ne.s32.totalorder %s354, %s356
      %p360 = scmp.eq.s32.totalorder %s30, 0
      %p361 = por %p359, %p360
      %p362 = scmp.ne.s32.totalorder %s354, %s356
      %p363 = scmp.eq.s32.totalorder %s35, 1
      %p364 = por %p362, %p363
      %p365 = scmp.ne.s32.totalorder %s356, %s357
      %p366 = scmp.eq.s32.totalorder %s35, 0
      %p367 = por %p365, %p366
      %p368 = scmp.ne.s32.totalorder %s356, %s357
      %p369 = scmp.eq.s32.totalorder %s36, 1
      %p370 = por %p368, %p369
      %p372 = scmp.ne.s32.totalorder %s357, %s371
      %p373 = scmp.eq.s32.totalorder %s36, 0
      %p374 = por %p372, %p373
      %s375 = ssub.s32 %s37, %s49
      %s376 = ssub.s32 %s38, %s45
      %s377 = sor.u32 %s375, %s376
      %p378 = scmp.eq.s32.totalorder %s377, 0
      %s380 = sadd.s32 %s379, 1
      %s381 = scalar_select %p378, %s379, %s380
      %p384 = pneg %p378
      %p385 = scmp.eq.s32.totalorder %s30, 1
      %p386 = por %p384, %p385
      %p387 = scmp.ne.s32.totalorder %s379, %s382
      %p388 = scmp.eq.s32.totalorder %s30, 0
      %p389 = por %p387, %p388
      %p390 = scmp.ne.s32.totalorder %s379, %s382
      %p391 = scmp.eq.s32.totalorder %s35, 1
      %p392 = por %p390, %p391
      %p393 = scmp.ne.s32.totalorder %s382, %s383
      %p394 = scmp.eq.s32.totalorder %s35, 0
      %p395 = por %p393, %p394
      %p396 = scmp.ne.s32.totalorder %s382, %s383
      %p397 = scmp.eq.s32.totalorder %s36, 1
      %p398 = por %p396, %p397
      %p400 = scmp.ne.s32.totalorder %s383, %s399
      %p401 = scmp.eq.s32.totalorder %s36, 0
      %p402 = por %p400, %p401
      %p403 = scmp.le.s32.totalorder 1, %s30
      %p404 = scmp.lt.s32.totalorder %s30, 3
      %p405 = pnand %p403, %p404
      %p406 = pneg %p405
      // Predicated region
      $region9: #{tpu_custom_call.1} parent=5 // pred_check
        _
      $region10: #{tpu_custom_call.1} parent=5 // pred_check_branch
        %408 = sbr.rel (%p405) target = $region12
      $region11: #{tpu_custom_call.1} parent=5 // pred_region
        %s409 = ssub.s32 %s30, 1
        // Predicated region
        $region13: #{tpu_custom_call.1} parent=11 // pred_check
          %p410 = pneg %p199
        $region14: #{tpu_custom_call.1} parent=11 // pred_check_branch
          %412 = sbr.rel (%p410) target = $region16
        $region15: #{tpu_custom_call.1} parent=11 // pred_region
          _
        $region16: #{tpu_custom_call.1} parent=11 // pred_fallthru
          _
        // Predicated region
        $region17: #{tpu_custom_call.1} parent=11 // pred_check
          %p413 = pneg %p220
        $region18: #{tpu_custom_call.1} parent=11 // pred_check_branch
          %415 = sbr.rel (%p413) target = $region20
        $region19: #{tpu_custom_call.1} parent=11 // pred_region
          _
        $region20: #{tpu_custom_call.1} parent=11 // pred_fallthru
          _
        // Predicated region
        $region21: #{tpu_custom_call.1} parent=11 // pred_check
          %p416 = pneg %p241
        $region22: #{tpu_custom_call.1} parent=11 // pred_check_branch
          %418 = sbr.rel (%p416) target = $region24
        $region23: #{tpu_custom_call.1} parent=11 // pred_region
          _
        $region24: #{tpu_custom_call.1} parent=11 // pred_fallthru
          _
        // Predicated region
        $region25: #{tpu_custom_call.1} parent=11 // pred_check
          %p419 = pneg %p262
        $region26: #{tpu_custom_call.1} parent=11 // pred_check_branch
          %421 = sbr.rel (%p419) target = $region28
        $region27: #{tpu_custom_call.1} parent=11 // pred_region
          %s423 = ssub.s32 256, 256
          %424 = vsyncadd [#allocation9], %s423
          %s425 = sshll.u32 [#allocation8], 4
          %s426 = int_to_ptr.vmem [resolvable:$true] %s425
          %431 = dma.hbm_to_vmem [thread:$0]  %s8, 256, %s426, [#allocation9], 64, 64, 4
        $region28: #{tpu_custom_call.1} parent=11 // pred_fallthru
          _
        // Predicated region
        $region29: #{tpu_custom_call.1} parent=11 // pred_check
          %p432 = pneg %p283
        $region30: #{tpu_custom_call.1} parent=11 // pred_check_branch
          %434 = sbr.rel (%p432) target = $region32
        $region31: #{tpu_custom_call.1} parent=11 // pred_region
          %s436 = ssub.s32 16, 16
          %437 = vsyncadd [#allocation9], %s436
          %s439 = sshll.u32 [#allocation10], 4
          %s440 = int_to_ptr.vmem [resolvable:$true] %s439
          %442 = dma.hbm_to_vmem [thread:$0]  %s9, 16, %s440, [#allocation9]
        $region32: #{tpu_custom_call.1} parent=11 // pred_fallthru
          _
        // Predicated region
        $region33: #{tpu_custom_call.1} parent=11 // pred_check
          %p443 = pneg %p304
        $region34: #{tpu_custom_call.1} parent=11 // pred_check_branch
          %445 = sbr.rel (%p443) target = $region36
        $region35: #{tpu_custom_call.1} parent=11 // pred_region
          _
        $region36: #{tpu_custom_call.1} parent=11 // pred_fallthru
          _
        // Predicated region
        $region37: #{tpu_custom_call.1} parent=11 // pred_check
          %p446 = pneg %p325
        $region38: #{tpu_custom_call.1} parent=11 // pred_check_branch
          %448 = sbr.rel (%p446) target = $region40
        $region39: #{tpu_custom_call.1} parent=11 // pred_region
          _
        $region40: #{tpu_custom_call.1} parent=11 // pred_fallthru
          _
        // Predicated region
        $region41: #{tpu_custom_call.1} parent=11 // pred_check
          %p449 = pneg %p346
        $region42: #{tpu_custom_call.1} parent=11 // pred_check_branch
          %451 = sbr.rel (%p449) target = $region44
        $region43: #{tpu_custom_call.1} parent=11 // pred_region
          _
        $region44: #{tpu_custom_call.1} parent=11 // pred_fallthru
          _
        // Predicated region
        $region45: #{tpu_custom_call.1} parent=11 // pred_check
          %p452 = pneg %p367
        $region46: #{tpu_custom_call.1} parent=11 // pred_check_branch
          %454 = sbr.rel (%p452) target = $region48
        $region47: #{tpu_custom_call.1} parent=11 // pred_region
          _
        $region48: #{tpu_custom_call.1} parent=11 // pred_fallthru
          _
      $region12: #{tpu_custom_call.1} parent=5 // pred_fallthru
        _
      %p455 = scmp.lt.s32.totalorder %s30, 2
      // Predicated region
      $region49: #{tpu_custom_call.1} parent=5 // pred_check
        %p456 = pneg %p455
      $region50: #{tpu_custom_call.1} parent=5 // pred_check_branch
        %458 = sbr.rel (%p456) target = $region52
      $region51: #{tpu_custom_call.1} parent=5 // pred_region
        // Predicated region
        $region53: #{tpu_custom_call.1} parent=51 // pred_check
          %p459 = pneg %p64
        $region54: #{tpu_custom_call.1} parent=51 // pred_check_branch
          %461 = sbr.rel (%p459) target = $region56
        $region55: #{tpu_custom_call.1} parent=51 // pred_region
          %p462 = scmp.lt.s32.totalorder %s37, 1
          %s463 = scalar_select %p462, %s37, 1
          %p464 = scmp.lt.s32.totalorder %s38, 0
          %s465 = scalar_select %p464, %s38, 0
          %s466 = smul.addr %s463, 4
          %s467 = sadd.s32 %s465, %s466
          %s468 = smul.addr %s467, 4
          %s469 = scalar_lea.vmem %s0, %s468
        $region56: #{tpu_custom_call.1} parent=51 // pred_fallthru
          _
        // Predicated region
        $region57: #{tpu_custom_call.1} parent=51 // pred_check
          %p470 = pneg %p90
        $region58: #{tpu_custom_call.1} parent=51 // pred_check_branch
          %472 = sbr.rel (%p470) target = $region60
        $region59: #{tpu_custom_call.1} parent=51 // pred_region
          %p473 = scmp.lt.s32.totalorder %s37, 1
          %s474 = scalar_select %p473, %s37, 1
          %s475 = smul.addr %s474, 4
          %s476 = smul.addr %s475, 4
          %s477 = scalar_lea.vmem %s1, %s476
        $region60: #{tpu_custom_call.1} parent=51 // pred_fallthru
          _
        // Predicated region
        $region61: #{tpu_custom_call.1} parent=51 // pred_check
          %p478 = pneg %p116
        $region62: #{tpu_custom_call.1} parent=51 // pred_check_branch
          %480 = sbr.rel (%p478) target = $region64
        $region63: #{tpu_custom_call.1} parent=51 // pred_region
          %s481 = sand.u32 %s106, 1
          %s482 = scalar_lea.sflag [#allocation3], %s481
          %s483 = sand.u32 %s106, 1
          %s484 = smul.addr %s483, 16
          %s485 = scalar_lea.vmem [#allocation2], %s484
          %s487 = ssub.s32 256, 256
          %488 = vsyncadd %s482, %s487
          %s489 = smul.addr %s37, 4
          %s490 = smul.addr %s489, 64
          %s491 = scalar_lea.hbm %s2, %s490
          %s492 = sshll.u32 %s485, 4
          %s493 = int_to_ptr.vmem [resolvable:$true] %s492
          %498 = dma.hbm_to_vmem [thread:$0]  %s491, 256, %s493, %s482, 64, 64, 4
        $region64: #{tpu_custom_call.1} parent=51 // pred_fallthru
          _
        // Predicated region
        $region65: #{tpu_custom_call.1} parent=51 // pred_check
          %p499 = pneg %p144
        $region66: #{tpu_custom_call.1} parent=51 // pred_check_branch
          %501 = sbr.rel (%p499) target = $region68
        $region67: #{tpu_custom_call.1} parent=51 // pred_region
          %s502 = sand.u32 %s30, 1
          %s503 = scalar_lea.sflag [#allocation6], %s502
          %s504 = sand.u32 %s134, 1
          %s505 = smul.addr %s504, 4
          %s506 = scalar_lea.vmem [#allocation5], %s505
          %s508 = ssub.s32 64, 64
          %509 = vsyncadd %s503, %s508
          %s510 = sadd.s32 %s38, %s37
          %s511 = smul.addr %s510, 64
          %s512 = scalar_lea.hbm %s3, %s511
          %s514 = sshll.u32 %s506, 4
          %s515 = int_to_ptr.vmem [resolvable:$true] %s514
          %517 = dma.hbm_to_vmem [thread:$0]  %s512, 64, %s515, %s503
        $region68: #{tpu_custom_call.1} parent=51 // pred_fallthru
          _
        // Predicated region
        $region69: #{tpu_custom_call.1} parent=51 // pred_check
          %p518 = pneg %p172
        $region70: #{tpu_custom_call.1} parent=51 // pred_check_branch
          %520 = sbr.rel (%p518) target = $region72
        $region71: #{tpu_custom_call.1} parent=51 // pred_region
          %s521 = sand.u32 %s30, 1
          %s522 = scalar_lea.sflag [#allocation6], %s521
          %s523 = sand.u32 %s162, 1
          %s524 = smul.addr %s523, 4
          %s525 = scalar_lea.vmem [#allocation7], %s524
          %s527 = ssub.s32 64, 64
          %528 = vsyncadd %s522, %s527
          %s529 = sadd.s32 %s38, %s37
          %s530 = smul.addr %s529, 64
          %s531 = scalar_lea.hbm %s4, %s530
          %s533 = sshll.u32 %s525, 4
          %s534 = int_to_ptr.vmem [resolvable:$true] %s533
          %536 = dma.hbm_to_vmem [thread:$0]  %s531, 64, %s534, %s522
        $region72: #{tpu_custom_call.1} parent=51 // pred_fallthru
          _
      $region52: #{tpu_custom_call.1} parent=5 // pred_fallthru
        _
      %p537 = scmp.le.s32.totalorder 1, %s30
      %p538 = scmp.lt.s32.totalorder %s30, 3
      %p539 = pnand %p537, %p538
      %p540 = pneg %p539
      // Predicated region
      $region73: #{tpu_custom_call.1} parent=5 // pred_check
        _
      $region74: #{tpu_custom_call.1} parent=5 // pred_check_branch
        %542 = sbr.rel (%p539) target = $region76
      $region75: #{tpu_custom_call.1} parent=5 // pred_region
        %s543 = ssub.s32 %s30, 1
        %s544 = sand.u32 %s109, 1
        %s545 = scalar_lea.sflag [#allocation3], %s544
        %s546 = sand.u32 %s109, 1
        %s547 = smul.addr %s546, 16
        %s548 = scalar_lea.vmem [#allocation2], %s547
        // Predicated region
        $region77: #{tpu_custom_call.1} parent=75 // pred_check
          %p549 = pneg %p122
        $region78: #{tpu_custom_call.1} parent=75 // pred_check_branch
          %551 = sbr.rel (%p549) target = $region80
        $region79: #{tpu_custom_call.1} parent=75 // pred_region
          %552 = dma.done %s545, 256
        $region80: #{tpu_custom_call.1} parent=75 // pred_fallthru
          _
        %s553 = sand.u32 %s35, 1
        %s554 = scalar_lea.sflag [#allocation6], %s553
        %s555 = sand.u32 %s137, 1
        %s556 = smul.addr %s555, 4
        %s557 = scalar_lea.vmem [#allocation5], %s556
        // Predicated region
        $region81: #{tpu_custom_call.1} parent=75 // pred_check
          %p558 = pneg %p150
        $region82: #{tpu_custom_call.1} parent=75 // pred_check_branch
          %560 = sbr.rel (%p558) target = $region84
        $region83: #{tpu_custom_call.1} parent=75 // pred_region
          %561 = dma.done %s554, 64
        $region84: #{tpu_custom_call.1} parent=75 // pred_fallthru
          _
        %s562 = sand.u32 %s35, 1
        %s563 = scalar_lea.sflag [#allocation6], %s562
        %s564 = sand.u32 %s165, 1
        %s565 = smul.addr %s564, 4
        %s566 = scalar_lea.vmem [#allocation7], %s565
        // Predicated region
        $region85: #{tpu_custom_call.1} parent=75 // pred_check
          %p567 = pneg %p178
        $region86: #{tpu_custom_call.1} parent=75 // pred_check_branch
          %569 = sbr.rel (%p567) target = $region88
        $region87: #{tpu_custom_call.1} parent=75 // pred_region
          %570 = dma.done %s563, 64
        $region88: #{tpu_custom_call.1} parent=75 // pred_fallthru
          _
        // Predicated region
        $region89: #{tpu_custom_call.1} parent=75 // pred_check
          %p571 = pneg %p262
        $region90: #{tpu_custom_call.1} parent=75 // pred_check_branch
          %573 = sbr.rel (%p571) target = $region92
        $region91: #{tpu_custom_call.1} parent=75 // pred_region
          %574 = dma.done [#allocation9], 256
        $region92: #{tpu_custom_call.1} parent=75 // pred_fallthru
          _
        // Predicated region
        $region93: #{tpu_custom_call.1} parent=75 // pred_check
          %p575 = pneg %p283
        $region94: #{tpu_custom_call.1} parent=75 // pred_check_branch
          %577 = sbr.rel (%p575) target = $region96
        $region95: #{tpu_custom_call.1} parent=75 // pred_region
          %578 = dma.done [#allocation9], 16
        $region96: #{tpu_custom_call.1} parent=75 // pred_fallthru
          _
        %p579 = scmp.lt.s32.totalorder %s39, 1
        %s580 = scalar_select %p579, %s39, 1
        %p581 = scmp.lt.s32.totalorder %s40, 0
        %s582 = scalar_select %p581, %s40, 0
        %s583 = smul.addr %s580, 4
        %s584 = sadd.s32 %s582, %s583
        %s585 = smul.addr %s584, 4
        %s586 = scalar_lea.vmem %s0, %s585
        %p587 = pneg %p70
        %p588 = pneg %p67
        %p589 = scmp.lt.s32.totalorder %s39, 1
        %s590 = scalar_select %p589, %s39, 1
        %s591 = smul.addr %s590, 4
        %s592 = smul.addr %s591, 4
        %s593 = scalar_lea.vmem %s1, %s592
        %p594 = pneg %p96
        %p595 = pneg %p93
        %s596 = sand.u32 %s109, 1
        %s597 = scalar_lea.sflag [#allocation3], %s596
        %s598 = sand.u32 %s109, 1
        %s599 = smul.addr %s598, 16
        %s600 = scalar_lea.vmem [#allocation2], %s599
        %p601 = pneg %p122
        %p602 = pneg %p119
        %s603 = sand.u32 %s35, 1
        %s604 = scalar_lea.sflag [#allocation6], %s603
        %s605 = sand.u32 %s137, 1
        %s606 = smul.addr %s605, 4
        %s607 = scalar_lea.vmem [#allocation5], %s606
        %p608 = pneg %p150
        %p609 = pneg %p147
        %s610 = sand.u32 %s35, 1
        %s611 = scalar_lea.sflag [#allocation6], %s610
        %s612 = sand.u32 %s165, 1
        %s613 = smul.addr %s612, 4
        %s614 = scalar_lea.vmem [#allocation7], %s613
        %p615 = pneg %p178
        %p616 = pneg %p175
        %p617 = pneg %p199
        %p618 = pneg %p196
        %p619 = pneg %p220
        %p620 = pneg %p217
        %p621 = pneg %p241
        %p622 = pneg %p238
        %p623 = pneg %p262
        %p624 = pneg %p259
        %p625 = pneg %p283
        %p626 = pneg %p280
        %p627 = pneg %p304
        %p628 = pneg %p301
        %p629 = pneg %p325
        %p630 = pneg %p322
        %p631 = pneg %p346
        %p632 = pneg %p343
        %p633 = pneg %p367
        %p634 = pneg %p364
        %p635 = pneg %p395
        %p636 = pneg %p392
        %s637 = sand.u32 %s382, 1
        %s638 = scalar_lea.sflag [#allocation4], %s637
        %s639 = sand.u32 %s382, 1
        %s640 = smul.addr %s639, 4
        %s641 = scalar_lea.vmem [#allocation11], %s640
        %p642 = scmp.lt.s32.totalorder %s39, 1
        %s643 = scalar_select %p642, %s39, 1
        %p644 = scmp.lt.s32.totalorder %s40, 0
        %s645 = scalar_select %p644, %s40, 0
        %s646 = smul.addr %s643, 4
        %s647 = sadd.s32 %s645, %s646
        %s648 = smul.addr %s647, 4
        %s649 = scalar_lea.vmem %s0, %s648
        %p650 = scmp.lt.s32.totalorder %s39, 1
        %s651 = scalar_select %p650, %s39, 1
        %s652 = smul.addr %s651, 4
        %s653 = smul.addr %s652, 4
        %s654 = scalar_lea.vmem %s1, %s653
        %v657 = vld [vmem:[%s649] sm:$0xf]
        %v658 = vld [vmem:[%s649 + $0x4] sm:$0xf]
        %v659 = vld [vmem:[%s649 + $0x8] sm:$0xf]
        %v660 = vld [vmem:[%s649 + $0xc] sm:$0xf]
        %v661 = vmul.bf16 %v657, 1085620405
        %v662 = vmul.bf16 %v658, 1085620405
        %v663 = vmul.bf16 %v659, 1085620405
        %v664 = vmul.bf16 %v660, 1085620405
        %v665 = vld [vmem:[%s654] sm:$0xf]
        %v666 = vld [vmem:[%s654 + $0x4] sm:$0xf]
        %v667 = vld [vmem:[%s654 + $0x8] sm:$0xf]
        %v668 = vld [vmem:[%s654 + $0xc] sm:$0xf]
        %v669 = vld [vmem:[%s548] sm:$0xf]
        %v670 = vld [vmem:[%s548 + $0x4] sm:$0xf]
        %v671 = vld [vmem:[%s548 + $0x8] sm:$0xf]
        %v672 = vld [vmem:[%s548 + $0xc] sm:$0xf]
        %v673 = vld [vmem:[%s566] sm:$0xf]
        %v674 = vunpack.c.l.bf16 %v673
        %vm675 = vcmask 64512
        %v677 = vsel %vm675, %v661, 0
        %v680 = vsel %vm675, %v665, 0
        %682 = vmatprep.subr.bf16.mxu0 0
        %683 = vmatpush1.bf16.xpose.msra.mxu0 0
        %684 = vmatprep.subr.bf16.mxu0 0
        %685 = vmatpush1.bf16.xpose.msra.mxu0 0
        %686 = vmatprep.subr.bf16.mxu0 0
        %687 = vmatpush1.bf16.xpose.msra.mxu0 0
        %688 = vmatprep.subr.bf16.mxu0 0
        %689 = vmatpush1.bf16.xpose.msra.mxu0 0
        %690 = vmatprep.subr.bf16.mxu0 0
        %691 = vmatpush1.bf16.xpose.msra.mxu0 0
        %692 = vmatprep.subr.bf16.mxu0 0
        %693 = vmatpush1.bf16.xpose.msra.mxu0 0
        %694 = vmatprep.subr.bf16.mxu0 0
        %695 = vmatpush1.bf16.xpose.msra.mxu0 0
        %696 = vmatprep.subr.bf16.mxu0 0
        %697 = vmatpush1.bf16.xpose.msra.mxu0 %v680
        %698 = vmatprep.subr.bf16.mxu0 0
        %699 = vmatpush2.bf16.xpose.msra.mxu0 0
        %700 = vmatprep.subr.bf16.mxu0 0
        %701 = vmatpush2.bf16.xpose.msra.mxu0 0
        %702 = vmatprep.subr.bf16.mxu0 0
        %703 = vmatpush2.bf16.xpose.msra.mxu0 0
        %704 = vmatprep.subr.bf16.mxu0 0
        %705 = vmatpush2.bf16.xpose.msra.mxu0 0
        %706 = vmatprep.subr.bf16.mxu0 0
        %707 = vmatpush2.bf16.xpose.msra.mxu0 0
        %708 = vmatprep.subr.bf16.mxu0 0
        %709 = vmatpush2.bf16.xpose.msra.mxu0 0
        %710 = vmatprep.subr.bf16.mxu0 0
        %711 = vmatpush2.bf16.xpose.msra.mxu0 0
        %712 = vmatprep.subr.bf16.mxu0 0
        %713 = vmatpush2.bf16.xpose.msra.mxu0 0
        %714 = vmatprep.mubr.bf16.mxu0 0
        %715 = vmatmul.mubr.bf16.gmra.mxu0 %v677
        %v716 = vpop.f32.mrf.mxu0
        %v717 = vadd.f32 %v674, %v716
        %v718 = vpop.f32.mrf.mxu0
        %v719 = vpop.f32.mrf.mxu0
        %v720 = vpop.f32.mrf.mxu0
        %721 = vdwg.mxu0
        %v723 = vsel %vm675, %v662, 0
        %v726 = vsel %vm675, %v666, 0
        %728 = vmatprep.subr.bf16.mxu0 0
        %729 = vmatpush1.bf16.xpose.msra.mxu0 0
        %730 = vmatprep.subr.bf16.mxu0 0
        %731 = vmatpush1.bf16.xpose.msra.mxu0 0
        %732 = vmatprep.subr.bf16.mxu0 0
        %733 = vmatpush1.bf16.xpose.msra.mxu0 0
        %734 = vmatprep.subr.bf16.mxu0 0
        %735 = vmatpush1.bf16.xpose.msra.mxu0 0
        %736 = vmatprep.subr.bf16.mxu0 0
        %737 = vmatpush1.bf16.xpose.msra.mxu0 0
        %738 = vmatprep.subr.bf16.mxu0 0
        %739 = vmatpush1.bf16.xpose.msra.mxu0 0
        %740 = vmatprep.subr.bf16.mxu0 0
        %741 = vmatpush1.bf16.xpose.msra.mxu0 0
        %742 = vmatprep.subr.bf16.mxu0 0
        %743 = vmatpush1.bf16.xpose.msra.mxu0 %v726
        %744 = vmatprep.subr.bf16.mxu0 0
        %745 = vmatpush2.bf16.xpose.msra.mxu0 0
        %746 = vmatprep.subr.bf16.mxu0 0
        %747 = vmatpush2.bf16.xpose.msra.mxu0 0
        %748 = vmatprep.subr.bf16.mxu0 0
        %749 = vmatpush2.bf16.xpose.msra.mxu0 0
        %750 = vmatprep.subr.bf16.mxu0 0
        %751 = vmatpush2.bf16.xpose.msra.mxu0 0
        %752 = vmatprep.subr.bf16.mxu0 0
        %753 = vmatpush2.bf16.xpose.msra.mxu0 0
        %754 = vmatprep.subr.bf16.mxu0 0
        %755 = vmatpush2.bf16.xpose.msra.mxu0 0
        %756 = vmatprep.subr.bf16.mxu0 0
        %757 = vmatpush2.bf16.xpose.msra.mxu0 0
        %758 = vmatprep.subr.bf16.mxu0 0
        %759 = vmatpush2.bf16.xpose.msra.mxu0 0
        %760 = vmatprep.mubr.bf16.mxu0 0
        %761 = vmatmul.mubr.bf16.gmra.mxu0 %v723
        %v762 = vpop.f32.mrf.mxu0
        %v763 = vadd.f32 %v674, %v762
        %v764 = vpop.f32.mrf.mxu0
        %v765 = vpop.f32.mrf.mxu0
        %v766 = vpop.f32.mrf.mxu0
        %767 = vdwg.mxu0
        %v769 = vsel %vm675, %v663, 0
        %v772 = vsel %vm675, %v667, 0
        %774 = vmatprep.subr.bf16.mxu0 0
        %775 = vmatpush1.bf16.xpose.msra.mxu0 0
        %776 = vmatprep.subr.bf16.mxu0 0
        %777 = vmatpush1.bf16.xpose.msra.mxu0 0
        %778 = vmatprep.subr.bf16.mxu0 0
        %779 = vmatpush1.bf16.xpose.msra.mxu0 0
        %780 = vmatprep.subr.bf16.mxu0 0
        %781 = vmatpush1.bf16.xpose.msra.mxu0 0
        %782 = vmatprep.subr.bf16.mxu0 0
        %783 = vmatpush1.bf16.xpose.msra.mxu0 0
        %784 = vmatprep.subr.bf16.mxu0 0
        %785 = vmatpush1.bf16.xpose.msra.mxu0 0
        %786 = vmatprep.subr.bf16.mxu0 0
        %787 = vmatpush1.bf16.xpose.msra.mxu0 0
        %788 = vmatprep.subr.bf16.mxu0 0
        %789 = vmatpush1.bf16.xpose.msra.mxu0 %v772
        %790 = vmatprep.subr.bf16.mxu0 0
        %791 = vmatpush2.bf16.xpose.msra.mxu0 0
        %792 = vmatprep.subr.bf16.mxu0 0
        %793 = vmatpush2.bf16.xpose.msra.mxu0 0
        %794 = vmatprep.subr.bf16.mxu0 0
        %795 = vmatpush2.bf16.xpose.msra.mxu0 0
        %796 = vmatprep.subr.bf16.mxu0 0
        %797 = vmatpush2.bf16.xpose.msra.mxu0 0
        %798 = vmatprep.subr.bf16.mxu0 0
        %799 = vmatpush2.bf16.xpose.msra.mxu0 0
        %800 = vmatprep.subr.bf16.mxu0 0
        %801 = vmatpush2.bf16.xpose.msra.mxu0 0
        %802 = vmatprep.subr.bf16.mxu0 0
        %803 = vmatpush2.bf16.xpose.msra.mxu0 0
        %804 = vmatprep.subr.bf16.mxu0 0
        %805 = vmatpush2.bf16.xpose.msra.mxu0 0
        %806 = vmatprep.mubr.bf16.mxu0 0
        %807 = vmatmul.mubr.bf16.gmra.mxu0 %v769
        %v808 = vpop.f32.mrf.mxu0
        %v809 = vadd.f32 %v674, %v808
        %v810 = vpop.f32.mrf.mxu0
        %v811 = vpop.f32.mrf.mxu0
        %v812 = vpop.f32.mrf.mxu0
        %813 = vdwg.mxu0
        %v815 = vsel %vm675, %v664, 0
        %v818 = vsel %vm675, %v668, 0
        %820 = vmatprep.subr.bf16.mxu0 0
        %821 = vmatpush1.bf16.xpose.msra.mxu0 0
        %822 = vmatprep.subr.bf16.mxu0 0
        %823 = vmatpush1.bf16.xpose.msra.mxu0 0
        %824 = vmatprep.subr.bf16.mxu0 0
        %825 = vmatpush1.bf16.xpose.msra.mxu0 0
        %826 = vmatprep.subr.bf16.mxu0 0
        %827 = vmatpush1.bf16.xpose.msra.mxu0 0
        %828 = vmatprep.subr.bf16.mxu0 0
        %829 = vmatpush1.bf16.xpose.msra.mxu0 0
        %830 = vmatprep.subr.bf16.mxu0 0
        %831 = vmatpush1.bf16.xpose.msra.mxu0 0
        %832 = vmatprep.subr.bf16.mxu0 0
        %833 = vmatpush1.bf16.xpose.msra.mxu0 0
        %834 = vmatprep.subr.bf16.mxu0 0
        %835 = vmatpush1.bf16.xpose.msra.mxu0 %v818
        %836 = vmatprep.subr.bf16.mxu0 0
        %837 = vmatpush2.bf16.xpose.msra.mxu0 0
        %838 = vmatprep.subr.bf16.mxu0 0
        %839 = vmatpush2.bf16.xpose.msra.mxu0 0
        %840 = vmatprep.subr.bf16.mxu0 0
        %841 = vmatpush2.bf16.xpose.msra.mxu0 0
        %842 = vmatprep.subr.bf16.mxu0 0
        %843 = vmatpush2.bf16.xpose.msra.mxu0 0
        %844 = vmatprep.subr.bf16.mxu0 0
        %845 = vmatpush2.bf16.xpose.msra.mxu0 0
        %846 = vmatprep.subr.bf16.mxu0 0
        %847 = vmatpush2.bf16.xpose.msra.mxu0 0
        %848 = vmatprep.subr.bf16.mxu0 0
        %849 = vmatpush2.bf16.xpose.msra.mxu0 0
        %850 = vmatprep.subr.bf16.mxu0 0
        %851 = vmatpush2.bf16.xpose.msra.mxu0 0
        %852 = vmatprep.mubr.bf16.mxu0 0
        %853 = vmatmul.mubr.bf16.gmra.mxu0 %v815
        %v854 = vpop.f32.mrf.mxu0
        %v855 = vadd.f32 %v674, %v854
        %v856 = vpop.f32.mrf.mxu0
        %v857 = vpop.f32.mrf.mxu0
        %v858 = vpop.f32.mrf.mxu0
        %859 = vdwg.mxu0
        %v860 = vsel %vm675, %v717, -inf
        %861 = vmax.xlane.f32.xlu0 %v860
        %v862 = vpop.xlane.xlu0 %861
        %v863 = vsel %vm675, %v763, -inf
        %864 = vmax.xlane.f32.xlu0 %v863
        %v865 = vpop.xlane.xlu0 %864
        %v866 = vsel %vm675, %v809, -inf
        %867 = vmax.xlane.f32.xlu0 %v866
        %v868 = vpop.xlane.xlu0 %867
        %v869 = vsel %vm675, %v855, -inf
        %870 = vmax.xlane.f32.xlu0 %v869
        %v871 = vpop.xlane.xlu0 %870
        %v872 = vsub.f32 %v717, %v862
        %v873 = vsub.f32 %v763, %v865
        %v874 = vsub.f32 %v809, %v868
        %v875 = vsub.f32 %v855, %v871
        %v876 = vmul.f32 %v872, 1.442695
        %v877 = vpow.pop %v876
        %v878 = vmul.f32 %v873, 1.442695
        %v879 = vpow.pop %v878
        %v880 = vmul.f32 %v874, 1.442695
        %v881 = vpow.pop %v880
        %v882 = vmul.f32 %v875, 1.442695
        %v883 = vpow.pop %v882
        %v884 = vsel %vm675, %v877, 0.0
        %885 = vadd.xlane.f32.xlu0 %v884
        %v886 = vpop.xlane.xlu0 %885
        %v887 = vsel %vm675, %v879, 0.0
        %888 = vadd.xlane.f32.xlu0 %v887
        %v889 = vpop.xlane.xlu0 %888
        %v890 = vsel %vm675, %v881, 0.0
        %891 = vadd.xlane.f32.xlu0 %v890
        %v892 = vpop.xlane.xlu0 %891
        %v893 = vsel %vm675, %v883, 0.0
        %894 = vadd.xlane.f32.xlu0 %v893
        %v895 = vpop.xlane.xlu0 %894
        %v896 = vrcp.pop %v886
        %v897 = vrcp.pop %v889
        %v898 = vrcp.pop %v892
        %v899 = vrcp.pop %v895
        %v900 = vmul.f32 %v877, %v896
        %v901 = vmul.f32 %v879, %v897
        %v902 = vmul.f32 %v881, %v898
        %v903 = vmul.f32 %v883, %v899
        %v904 = vpack.c.bf16 %v900, %v900
        %v905 = vpack.c.bf16 %v901, %v901
        %v906 = vpack.c.bf16 %v902, %v902
        %v907 = vpack.c.bf16 %v903, %v903
        %v909 = vsel %vm675, %v904, 0
        %vm911 = vcmask 1043456
        %v913 = vsel %vm911, %v669, 0
        %915 = vmatprep.subr.bf16.mxu0 0
        %916 = vmatpush1.bf16.msra.mxu0 0
        %917 = vmatprep.subr.bf16.mxu0 0
        %918 = vmatpush1.bf16.msra.mxu0 0
        %919 = vmatprep.subr.bf16.mxu0 0
        %920 = vmatpush1.bf16.msra.mxu0 0
        %921 = vmatprep.subr.bf16.mxu0 0
        %922 = vmatpush1.bf16.msra.mxu0 0
        %923 = vmatprep.subr.bf16.mxu0 0
        %924 = vmatpush1.bf16.msra.mxu0 0
        %925 = vmatprep.subr.bf16.mxu0 0
        %926 = vmatpush1.bf16.msra.mxu0 0
        %927 = vmatprep.subr.bf16.mxu0 0
        %928 = vmatpush1.bf16.msra.mxu0 0
        %929 = vmatprep.subr.bf16.mxu0 0
        %930 = vmatpush1.bf16.msra.mxu0 %v913
        %931 = vmatprep.subr.bf16.mxu0 0
        %932 = vmatpush2.bf16.msra.mxu0 0
        %933 = vmatprep.subr.bf16.mxu0 0
        %934 = vmatpush2.bf16.msra.mxu0 0
        %935 = vmatprep.subr.bf16.mxu0 0
        %936 = vmatpush2.bf16.msra.mxu0 0
        %937 = vmatprep.subr.bf16.mxu0 0
        %938 = vmatpush2.bf16.msra.mxu0 0
        %939 = vmatprep.subr.bf16.mxu0 0
        %940 = vmatpush2.bf16.msra.mxu0 0
        %941 = vmatprep.subr.bf16.mxu0 0
        %942 = vmatpush2.bf16.msra.mxu0 0
        %943 = vmatprep.subr.bf16.mxu0 0
        %944 = vmatpush2.bf16.msra.mxu0 0
        %945 = vmatprep.subr.bf16.mxu0 0
        %946 = vmatpush2.bf16.msra.mxu0 0
        %947 = vmatprep.mubr.bf16.mxu0 0
        %948 = vmatmul.mubr.bf16.gmra.mxu0 %v909
        %v949 = vpop.f32.mrf.mxu0
        %v950 = vadd.f32 0.0, %v949
        %v951 = vpop.f32.mrf.mxu0
        %v952 = vpop.f32.mrf.mxu0
        %v953 = vpop.f32.mrf.mxu0
        %954 = vdwg.mxu0
        %v956 = vsel %vm675, %v905, 0
        %v959 = vsel %vm911, %v670, 0
        %961 = vmatprep.subr.bf16.mxu0 0
        %962 = vmatpush1.bf16.msra.mxu0 0
        %963 = vmatprep.subr.bf16.mxu0 0
        %964 = vmatpush1.bf16.msra.mxu0 0
        %965 = vmatprep.subr.bf16.mxu0 0
        %966 = vmatpush1.bf16.msra.mxu0 0
        %967 = vmatprep.subr.bf16.mxu0 0
        %968 = vmatpush1.bf16.msra.mxu0 0
        %969 = vmatprep.subr.bf16.mxu0 0
        %970 = vmatpush1.bf16.msra.mxu0 0
        %971 = vmatprep.subr.bf16.mxu0 0
        %972 = vmatpush1.bf16.msra.mxu0 0
        %973 = vmatprep.subr.bf16.mxu0 0
        %974 = vmatpush1.bf16.msra.mxu0 0
        %975 = vmatprep.subr.bf16.mxu0 0
        %976 = vmatpush1.bf16.msra.mxu0 %v959
        %977 = vmatprep.subr.bf16.mxu0 0
        %978 = vmatpush2.bf16.msra.mxu0 0
        %979 = vmatprep.subr.bf16.mxu0 0
        %980 = vmatpush2.bf16.msra.mxu0 0
        %981 = vmatprep.subr.bf16.mxu0 0
        %982 = vmatpush2.bf16.msra.mxu0 0
        %983 = vmatprep.subr.bf16.mxu0 0
        %984 = vmatpush2.bf16.msra.mxu0 0
        %985 = vmatprep.subr.bf16.mxu0 0
        %986 = vmatpush2.bf16.msra.mxu0 0
        %987 = vmatprep.subr.bf16.mxu0 0
        %988 = vmatpush2.bf16.msra.mxu0 0
        %989 = vmatprep.subr.bf16.mxu0 0
        %990 = vmatpush2.bf16.msra.mxu0 0
        %991 = vmatprep.subr.bf16.mxu0 0
        %992 = vmatpush2.bf16.msra.mxu0 0
        %993 = vmatprep.mubr.bf16.mxu0 0
        %994 = vmatmul.mubr.bf16.gmra.mxu0 %v956
        %v995 = vpop.f32.mrf.mxu0
        %v996 = vadd.f32 0.0, %v995
        %v997 = vpop.f32.mrf.mxu0
        %v998 = vpop.f32.mrf.mxu0
        %v999 = vpop.f32.mrf.mxu0
        %1000 = vdwg.mxu0
        %v1002 = vsel %vm675, %v906, 0
        %v1005 = vsel %vm911, %v671, 0
        %1007 = vmatprep.subr.bf16.mxu0 0
        %1008 = vmatpush1.bf16.msra.mxu0 0
        %1009 = vmatprep.subr.bf16.mxu0 0
        %1010 = vmatpush1.bf16.msra.mxu0 0
        %1011 = vmatprep.subr.bf16.mxu0 0
        %1012 = vmatpush1.bf16.msra.mxu0 0
        %1013 = vmatprep.subr.bf16.mxu0 0
        %1014 = vmatpush1.bf16.msra.mxu0 0
        %1015 = vmatprep.subr.bf16.mxu0 0
        %1016 = vmatpush1.bf16.msra.mxu0 0
        %1017 = vmatprep.subr.bf16.mxu0 0
        %1018 = vmatpush1.bf16.msra.mxu0 0
        %1019 = vmatprep.subr.bf16.mxu0 0
        %1020 = vmatpush1.bf16.msra.mxu0 0
        %1021 = vmatprep.subr.bf16.mxu0 0
        %1022 = vmatpush1.bf16.msra.mxu0 %v1005
        %1023 = vmatprep.subr.bf16.mxu0 0
        %1024 = vmatpush2.bf16.msra.mxu0 0
        %1025 = vmatprep.subr.bf16.mxu0 0
        %1026 = vmatpush2.bf16.msra.mxu0 0
        %1027 = vmatprep.subr.bf16.mxu0 0
        %1028 = vmatpush2.bf16.msra.mxu0 0
        %1029 = vmatprep.subr.bf16.mxu0 0
        %1030 = vmatpush2.bf16.msra.mxu0 0
        %1031 = vmatprep.subr.bf16.mxu0 0
        %1032 = vmatpush2.bf16.msra.mxu0 0
        %1033 = vmatprep.subr.bf16.mxu0 0
        %1034 = vmatpush2.bf16.msra.mxu0 0
        %1035 = vmatprep.subr.bf16.mxu0 0
        %1036 = vmatpush2.bf16.msra.mxu0 0
        %1037 = vmatprep.subr.bf16.mxu0 0
        %1038 = vmatpush2.bf16.msra.mxu0 0
        %1039 = vmatprep.mubr.bf16.mxu0 0
        %1040 = vmatmul.mubr.bf16.gmra.mxu0 %v1002
        %v1041 = vpop.f32.mrf.mxu0
        %v1042 = vadd.f32 0.0, %v1041
        %v1043 = vpop.f32.mrf.mxu0
        %v1044 = vpop.f32.mrf.mxu0
        %v1045 = vpop.f32.mrf.mxu0
        %1046 = vdwg.mxu0
        %v1048 = vsel %vm675, %v907, 0
        %v1051 = vsel %vm911, %v672, 0
        %1053 = vmatprep.subr.bf16.mxu0 0
        %1054 = vmatpush1.bf16.msra.mxu0 0
        %1055 = vmatprep.subr.bf16.mxu0 0
        %1056 = vmatpush1.bf16.msra.mxu0 0
        %1057 = vmatprep.subr.bf16.mxu0 0
        %1058 = vmatpush1.bf16.msra.mxu0 0
        %1059 = vmatprep.subr.bf16.mxu0 0
        %1060 = vmatpush1.bf16.msra.mxu0 0
        %1061 = vmatprep.subr.bf16.mxu0 0
        %1062 = vmatpush1.bf16.msra.mxu0 0
        %1063 = vmatprep.subr.bf16.mxu0 0
        %1064 = vmatpush1.bf16.msra.mxu0 0
        %1065 = vmatprep.subr.bf16.mxu0 0
        %1066 = vmatpush1.bf16.msra.mxu0 0
        %1067 = vmatprep.subr.bf16.mxu0 0
        %1068 = vmatpush1.bf16.msra.mxu0 %v1051
        %1069 = vmatprep.subr.bf16.mxu0 0
        %1070 = vmatpush2.bf16.msra.mxu0 0
        %1071 = vmatprep.subr.bf16.mxu0 0
        %1072 = vmatpush2.bf16.msra.mxu0 0
        %1073 = vmatprep.subr.bf16.mxu0 0
        %1074 = vmatpush2.bf16.msra.mxu0 0
        %1075 = vmatprep.subr.bf16.mxu0 0
        %1076 = vmatpush2.bf16.msra.mxu0 0
        %1077 = vmatprep.subr.bf16.mxu0 0
        %1078 = vmatpush2.bf16.msra.mxu0 0
        %1079 = vmatprep.subr.bf16.mxu0 0
        %1080 = vmatpush2.bf16.msra.mxu0 0
        %1081 = vmatprep.subr.bf16.mxu0 0
        %1082 = vmatpush2.bf16.msra.mxu0 0
        %1083 = vmatprep.subr.bf16.mxu0 0
        %1084 = vmatpush2.bf16.msra.mxu0 0
        %1085 = vmatprep.mubr.bf16.mxu0 0
        %1086 = vmatmul.mubr.bf16.gmra.mxu0 %v1048
        %v1087 = vpop.f32.mrf.mxu0
        %v1088 = vadd.f32 0.0, %v1087
        %v1089 = vpop.f32.mrf.mxu0
        %v1090 = vpop.f32.mrf.mxu0
        %v1091 = vpop.f32.mrf.mxu0
        %1092 = vdwg.mxu0
        %v1093 = vpack.c.bf16 %v950, %v950
        %v1094 = vpack.c.bf16 %v996, %v996
        %v1095 = vpack.c.bf16 %v1042, %v1042
        %v1096 = vpack.c.bf16 %v1088, %v1088
        %v1097 = vld [vmem:[%s5] sm:$0xf]
        %v1098 = vld [vmem:[%s5 + $0x4] sm:$0xf]
        %v1099 = vld [vmem:[%s5 + $0x8] sm:$0xf]
        %v1100 = vld [vmem:[%s5 + $0xc] sm:$0xf]
        %v1102 = vsel %vm675, %v1094, 0
        %v1105 = vsel %vm911, %v1098, 0
        %1107 = vmatprep.subr.bf16.mxu0 0
        %1108 = vmatpush1.bf16.msra.mxu0 0
        %1109 = vmatprep.subr.bf16.mxu0 0
        %1110 = vmatpush1.bf16.msra.mxu0 0
        %1111 = vmatprep.subr.bf16.mxu0 0
        %1112 = vmatpush1.bf16.msra.mxu0 0
        %1113 = vmatprep.subr.bf16.mxu0 0
        %1114 = vmatpush1.bf16.msra.mxu0 0
        %1115 = vmatprep.subr.bf16.mxu0 0
        %1116 = vmatpush1.bf16.msra.mxu0 0
        %1117 = vmatprep.subr.bf16.mxu0 0
        %1118 = vmatpush1.bf16.msra.mxu0 0
        %1119 = vmatprep.subr.bf16.mxu0 0
        %1120 = vmatpush1.bf16.msra.mxu0 0
        %1121 = vmatprep.subr.bf16.mxu0 0
        %1122 = vmatpush1.bf16.msra.mxu0 %v1105
        %1123 = vmatprep.subr.bf16.mxu0 0
        %1124 = vmatpush2.bf16.msra.mxu0 0
        %1125 = vmatprep.subr.bf16.mxu0 0
        %1126 = vmatpush2.bf16.msra.mxu0 0
        %1127 = vmatprep.subr.bf16.mxu0 0
        %1128 = vmatpush2.bf16.msra.mxu0 0
        %1129 = vmatprep.subr.bf16.mxu0 0
        %1130 = vmatpush2.bf16.msra.mxu0 0
        %1131 = vmatprep.subr.bf16.mxu0 0
        %1132 = vmatpush2.bf16.msra.mxu0 0
        %1133 = vmatprep.subr.bf16.mxu0 0
        %1134 = vmatpush2.bf16.msra.mxu0 0
        %1135 = vmatprep.subr.bf16.mxu0 0
        %1136 = vmatpush2.bf16.msra.mxu0 0
        %1137 = vmatprep.subr.bf16.mxu0 0
        %1138 = vmatpush2.bf16.msra.mxu0 0
        %1139 = vmatprep.mubr.bf16.mxu0 0
        %1140 = vmatmul.mubr.bf16.gmra.mxu0 %v1102
        %v1141 = vpop.f32.mrf.mxu0
        %v1142 = vadd.f32 0.0, %v1141
        %v1143 = vpop.f32.mrf.mxu0
        %v1144 = vpop.f32.mrf.mxu0
        %v1145 = vpop.f32.mrf.mxu0
        %1146 = vdwg.mxu0
        %v1148 = vsel %vm675, %v1093, 0
        %v1151 = vsel %vm911, %v1097, 0
        %1153 = vmatprep.subr.bf16.mxu0 0
        %1154 = vmatpush1.bf16.msra.mxu0 0
        %1155 = vmatprep.subr.bf16.mxu0 0
        %1156 = vmatpush1.bf16.msra.mxu0 0
        %1157 = vmatprep.subr.bf16.mxu0 0
        %1158 = vmatpush1.bf16.msra.mxu0 0
        %1159 = vmatprep.subr.bf16.mxu0 0
        %1160 = vmatpush1.bf16.msra.mxu0 0
        %1161 = vmatprep.subr.bf16.mxu0 0
        %1162 = vmatpush1.bf16.msra.mxu0 0
        %1163 = vmatprep.subr.bf16.mxu0 0
        %1164 = vmatpush1.bf16.msra.mxu0 0
        %1165 = vmatprep.subr.bf16.mxu0 0
        %1166 = vmatpush1.bf16.msra.mxu0 0
        %1167 = vmatprep.subr.bf16.mxu0 0
        %1168 = vmatpush1.bf16.msra.mxu0 %v1151
        %1169 = vmatprep.subr.bf16.mxu0 0
        %1170 = vmatpush2.bf16.msra.mxu0 0
        %1171 = vmatprep.subr.bf16.mxu0 0
        %1172 = vmatpush2.bf16.msra.mxu0 0
        %1173 = vmatprep.subr.bf16.mxu0 0
        %1174 = vmatpush2.bf16.msra.mxu0 0
        %1175 = vmatprep.subr.bf16.mxu0 0
        %1176 = vmatpush2.bf16.msra.mxu0 0
        %1177 = vmatprep.subr.bf16.mxu0 0
        %1178 = vmatpush2.bf16.msra.mxu0 0
        %1179 = vmatprep.subr.bf16.mxu0 0
        %1180 = vmatpush2.bf16.msra.mxu0 0
        %1181 = vmatprep.subr.bf16.mxu0 0
        %1182 = vmatpush2.bf16.msra.mxu0 0
        %1183 = vmatprep.subr.bf16.mxu0 0
        %1184 = vmatpush2.bf16.msra.mxu0 0
        %1185 = vmatprep.mubr.bf16.mxu0 0
        %1186 = vmatmul.mubr.bf16.gmra.mxu0 %v1148
        %v1187 = vpop.f32.mrf.mxu0
        %v1188 = vadd.f32 %v1142, %v1187
        %v1189 = vpop.f32.mrf.mxu0
        %v1190 = vpop.f32.mrf.mxu0
        %v1191 = vpop.f32.mrf.mxu0
        %1192 = vdwg.mxu0
        %v1194 = vsel %vm675, %v1095, 0
        %v1197 = vsel %vm911, %v1099, 0
        %1199 = vmatprep.subr.bf16.mxu0 0
        %1200 = vmatpush1.bf16.msra.mxu0 0
        %1201 = vmatprep.subr.bf16.mxu0 0
        %1202 = vmatpush1.bf16.msra.mxu0 0
        %1203 = vmatprep.subr.bf16.mxu0 0
        %1204 = vmatpush1.bf16.msra.mxu0 0
        %1205 = vmatprep.subr.bf16.mxu0 0
        %1206 = vmatpush1.bf16.msra.mxu0 0
        %1207 = vmatprep.subr.bf16.mxu0 0
        %1208 = vmatpush1.bf16.msra.mxu0 0
        %1209 = vmatprep.subr.bf16.mxu0 0
        %1210 = vmatpush1.bf16.msra.mxu0 0
        %1211 = vmatprep.subr.bf16.mxu0 0
        %1212 = vmatpush1.bf16.msra.mxu0 0
        %1213 = vmatprep.subr.bf16.mxu0 0
        %1214 = vmatpush1.bf16.msra.mxu0 %v1197
        %1215 = vmatprep.subr.bf16.mxu0 0
        %1216 = vmatpush2.bf16.msra.mxu0 0
        %1217 = vmatprep.subr.bf16.mxu0 0
        %1218 = vmatpush2.bf16.msra.mxu0 0
        %1219 = vmatprep.subr.bf16.mxu0 0
        %1220 = vmatpush2.bf16.msra.mxu0 0
        %1221 = vmatprep.subr.bf16.mxu0 0
        %1222 = vmatpush2.bf16.msra.mxu0 0
        %1223 = vmatprep.subr.bf16.mxu0 0
        %1224 = vmatpush2.bf16.msra.mxu0 0
        %1225 = vmatprep.subr.bf16.mxu0 0
        %1226 = vmatpush2.bf16.msra.mxu0 0
        %1227 = vmatprep.subr.bf16.mxu0 0
        %1228 = vmatpush2.bf16.msra.mxu0 0
        %1229 = vmatprep.subr.bf16.mxu0 0
        %1230 = vmatpush2.bf16.msra.mxu0 0
        %1231 = vmatprep.mubr.bf16.mxu0 0
        %1232 = vmatmul.mubr.bf16.gmra.mxu0 %v1194
        %v1233 = vpop.f32.mrf.mxu0
        %v1234 = vadd.f32 0.0, %v1233
        %v1235 = vpop.f32.mrf.mxu0
        %v1236 = vpop.f32.mrf.mxu0
        %v1237 = vpop.f32.mrf.mxu0
        %1238 = vdwg.mxu0
        %v1239 = vadd.f32 %v1188, %v1234
        %v1241 = vsel %vm675, %v1096, 0
        %v1244 = vsel %vm911, %v1100, 0
        %1246 = vmatprep.subr.bf16.mxu0 0
        %1247 = vmatpush1.bf16.msra.mxu0 0
        %1248 = vmatprep.subr.bf16.mxu0 0
        %1249 = vmatpush1.bf16.msra.mxu0 0
        %1250 = vmatprep.subr.bf16.mxu0 0
        %1251 = vmatpush1.bf16.msra.mxu0 0
        %1252 = vmatprep.subr.bf16.mxu0 0
        %1253 = vmatpush1.bf16.msra.mxu0 0
        %1254 = vmatprep.subr.bf16.mxu0 0
        %1255 = vmatpush1.bf16.msra.mxu0 0
        %1256 = vmatprep.subr.bf16.mxu0 0
        %1257 = vmatpush1.bf16.msra.mxu0 0
        %1258 = vmatprep.subr.bf16.mxu0 0
        %1259 = vmatpush1.bf16.msra.mxu0 0
        %1260 = vmatprep.subr.bf16.mxu0 0
        %1261 = vmatpush1.bf16.msra.mxu0 %v1244
        %1262 = vmatprep.subr.bf16.mxu0 0
        %1263 = vmatpush2.bf16.msra.mxu0 0
        %1264 = vmatprep.subr.bf16.mxu0 0
        %1265 = vmatpush2.bf16.msra.mxu0 0
        %1266 = vmatprep.subr.bf16.mxu0 0
        %1267 = vmatpush2.bf16.msra.mxu0 0
        %1268 = vmatprep.subr.bf16.mxu0 0
        %1269 = vmatpush2.bf16.msra.mxu0 0
        %1270 = vmatprep.subr.bf16.mxu0 0
        %1271 = vmatpush2.bf16.msra.mxu0 0
        %1272 = vmatprep.subr.bf16.mxu0 0
        %1273 = vmatpush2.bf16.msra.mxu0 0
        %1274 = vmatprep.subr.bf16.mxu0 0
        %1275 = vmatpush2.bf16.msra.mxu0 0
        %1276 = vmatprep.subr.bf16.mxu0 0
        %1277 = vmatpush2.bf16.msra.mxu0 0
        %1278 = vmatprep.mubr.bf16.mxu0 0
        %1279 = vmatmul.mubr.bf16.gmra.mxu0 %v1241
        %v1280 = vpop.f32.mrf.mxu0
        %v1281 = vadd.f32 0.0, %v1280
        %v1282 = vpop.f32.mrf.mxu0
        %v1283 = vpop.f32.mrf.mxu0
        %v1284 = vpop.f32.mrf.mxu0
        %1285 = vdwg.mxu0
        %v1286 = vadd.f32 %v1239, %v1281
        %v1287 = vld [vmem:[%s557] sm:$0xf]
        %v1288 = vunpack.c.l.bf16 %v1287
        %v1289 = vadd.f32 %v1286, %v1288
        %v1290 = vld [vmem:[%s6] sm:$0x1]
        %v1291 = vld [vmem:[%s7] sm:$0x1]
        %vm1292 = vcmask 261120
        %v1293 = vsel %vm1292, %v1289, 0.0
        %1294 = vadd.xlane.f32.xlu0 %v1293
        %v1295 = vpop.xlane.xlu0 %1294
        %v1296 = vrcp.pop 32.0
        %v1297 = vmul.f32 %v1295, %v1296
        %v1298 = vsub.f32 %v1289, %v1297
        %v1299 = vmul.f32 %v1298, %v1298
        %v1300 = vsel %vm1292, %v1299, 0.0
        %1301 = vadd.xlane.f32.xlu0 %v1300
        %v1302 = vpop.xlane.xlu0 %1301
        %v1303 = vmul.f32 %v1302, %v1296
        %v1304 = vadd.f32 %v1303, 1e-05
        %v1305 = vrsqrt.pop %v1304
        %v1306 = vmul.f32 %v1298, %v1305
        %v1308 = vlaneseq
        %v1309 = vshrl.u32 %v1308, 7
        %v1310 = vsub.s32 0, %v1309
        %v1311 = vrot.slane %v1290, %v1310
        %v1313 = vmul.f32 %v1306, %v1311
        %v1315 = vlaneseq
        %v1316 = vshrl.u32 %v1315, 7
        %v1317 = vsub.s32 0, %v1316
        %v1318 = vrot.slane %v1291, %v1317
        %v1320 = vadd.f32 %v1313, %v1318
        %v1321 = vpack.c.bf16 %v1320, %v1320
        %v1322 = vld [vmem:[#allocation8] sm:$0xf]
        %v1323 = vld [vmem:[#allocation8 + $0x4] sm:$0xf]
        %v1324 = vld [vmem:[#allocation8 + $0x8] sm:$0xf]
        %v1325 = vld [vmem:[#allocation8 + $0xc] sm:$0xf]
        %v1326 = vld [vmem:[#allocation10] sm:$0x1]
        %v1328 = vlaneseq
        %v1329 = vshrl.u32 %v1328, 7
        %v1330 = vsub.s32 0, %v1329
        %v1331 = vrot.slane %v1326, %v1330
        %v1337 = vunpack.c.l.b16 %v1322
        %v1338 = vunpack.c.l.b16 %v1323
        %v1339 = vunpack.c.l.b16 %v1324
        %v1340 = vunpack.c.l.b16 %v1325
        %v1341 = vpack.c.b16 %v1338, %v1337
        %v1342 = vpack.c.b16 %v1340, %v1339
        %v1346 = vsel %vm1292, %v1321, 0
        %1348 = vmatprep.subr.bf16.mxu0 0
        %1349 = vmatpush1.bf16.msra.mxu0 0
        %1350 = vmatprep.subr.bf16.mxu0 0
        %1351 = vmatpush1.bf16.msra.mxu0 0
        %1352 = vmatprep.subr.bf16.mxu0 0
        %1353 = vmatpush1.bf16.msra.mxu0 0
        %1354 = vmatprep.subr.bf16.mxu0 0
        %1355 = vmatpush1.bf16.msra.mxu0 0
        %1356 = vmatprep.subr.bf16.mxu0 0
        %1357 = vmatpush1.bf16.msra.mxu0 0
        %1358 = vmatprep.subr.bf16.mxu0 0
        %1359 = vmatpush1.bf16.msra.mxu0 0
        %1360 = vmatprep.subr.bf16.mxu0 0
        %1361 = vmatpush1.bf16.msra.mxu0 %v1342
        %1362 = vmatprep.subr.bf16.mxu0 0
        %1363 = vmatpush1.bf16.msra.mxu0 %v1341
        %1364 = vmatprep.subr.bf16.mxu0 0
        %1365 = vmatpush2.bf16.msra.mxu0 0
        %1366 = vmatprep.subr.bf16.mxu0 0
        %1367 = vmatpush2.bf16.msra.mxu0 0
        %1368 = vmatprep.subr.bf16.mxu0 0
        %1369 = vmatpush2.bf16.msra.mxu0 0
        %1370 = vmatprep.subr.bf16.mxu0 0
        %1371 = vmatpush2.bf16.msra.mxu0 0
        %1372 = vmatprep.subr.bf16.mxu0 0
        %1373 = vmatpush2.bf16.msra.mxu0 0
        %1374 = vmatprep.subr.bf16.mxu0 0
        %1375 = vmatpush2.bf16.msra.mxu0 0
        %1376 = vmatprep.subr.bf16.mxu0 0
        %1377 = vmatpush2.bf16.msra.mxu0 0
        %1378 = vmatprep.subr.bf16.mxu0 0
        %1379 = vmatpush2.bf16.msra.mxu0 0
        %1380 = vmatprep.mubr.bf16.mxu0 0
        %1381 = vmatmul.mubr.bf16.gmra.mxu0 %v1346
        %v1382 = vpop.f32.mrf.mxu0
        %v1383 = vadd.f32 %v1331, %v1382
        %v1384 = vpop.f32.mrf.mxu0
        %v1385 = vpop.f32.mrf.mxu0
        %v1386 = vpop.f32.mrf.mxu0
        %1387 = vdwg.mxu0
        %v1388 = vmax.f32 %v1383, 0.0
        %v1389 = vpack.c.bf16 %v1388, %v1388
        %v1390 = vld [vmem:[%s10] sm:$0xf]
        %v1391 = vld [vmem:[%s10 + $0x4] sm:$0xf]
        %v1392 = vld [vmem:[%s10 + $0x8] sm:$0xf]
        %v1393 = vld [vmem:[%s10 + $0xc] sm:$0xf]
        %v1394 = vld [vmem:[%s10 + $0x10] sm:$0xf]
        %v1395 = vld [vmem:[%s10 + $0x14] sm:$0xf]
        %v1396 = vld [vmem:[%s10 + $0x18] sm:$0xf]
        %v1397 = vld [vmem:[%s10 + $0x1c] sm:$0xf]
        %v1398 = vld [vmem:[%s10 + $0x20] sm:$0xf]
        %v1399 = vld [vmem:[%s10 + $0x24] sm:$0xf]
        %v1400 = vld [vmem:[%s10 + $0x28] sm:$0xf]
        %v1401 = vld [vmem:[%s10 + $0x2c] sm:$0xf]
        %v1402 = vld [vmem:[%s10 + $0x30] sm:$0xf]
        %v1403 = vld [vmem:[%s10 + $0x34] sm:$0xf]
        %v1404 = vld [vmem:[%s10 + $0x38] sm:$0xf]
        %v1405 = vld [vmem:[%s10 + $0x3c] sm:$0xf]
        %v1406 = vld [vmem:[%s11] sm:$0x1]
        %v1408 = vlaneseq
        %v1409 = vshrl.u32 %v1408, 7
        %v1410 = vsub.s32 0, %v1409
        %v1411 = vrot.slane %v1406, %v1410
        %v1429 = vunpack.c.l.b16 %v1390
        %v1430 = vunpack.c.l.b16 %v1391
        %v1431 = vunpack.c.l.b16 %v1392
        %v1432 = vunpack.c.l.b16 %v1393
        %v1433 = vunpack.c.l.b16 %v1394
        %v1434 = vunpack.c.l.b16 %v1395
        %v1435 = vunpack.c.l.b16 %v1396
        %v1436 = vunpack.c.l.b16 %v1397
        %v1437 = vunpack.c.l.b16 %v1398
        %v1438 = vunpack.c.l.b16 %v1399
        %v1439 = vunpack.c.l.b16 %v1400
        %v1440 = vunpack.c.l.b16 %v1401
        %v1441 = vunpack.c.l.b16 %v1402
        %v1442 = vunpack.c.l.b16 %v1403
        %v1443 = vunpack.c.l.b16 %v1404
        %v1444 = vunpack.c.l.b16 %v1405
        %v1445 = vpack.c.b16 %v1430, %v1429
        %v1446 = vpack.c.b16 %v1432, %v1431
        %v1447 = vpack.c.b16 %v1434, %v1433
        %v1448 = vpack.c.b16 %v1436, %v1435
        %v1449 = vpack.c.b16 %v1438, %v1437
        %v1450 = vpack.c.b16 %v1440, %v1439
        %v1451 = vpack.c.b16 %v1442, %v1441
        %v1452 = vpack.c.b16 %v1444, %v1443
        %1461 = vmatprep.subr.bf16.mxu0 0
        %1462 = vmatpush1.bf16.msra.mxu0 %v1452
        %1463 = vmatprep.subr.bf16.mxu0 0
        %1464 = vmatpush1.bf16.msra.mxu0 %v1451
        %1465 = vmatprep.subr.bf16.mxu0 0
        %1466 = vmatpush1.bf16.msra.mxu0 %v1450
        %1467 = vmatprep.subr.bf16.mxu0 0
        %1468 = vmatpush1.bf16.msra.mxu0 %v1449
        %1469 = vmatprep.subr.bf16.mxu0 0
        %1470 = vmatpush1.bf16.msra.mxu0 %v1448
        %1471 = vmatprep.subr.bf16.mxu0 0
        %1472 = vmatpush1.bf16.msra.mxu0 %v1447
        %1473 = vmatprep.subr.bf16.mxu0 0
        %1474 = vmatpush1.bf16.msra.mxu0 %v1446
        %1475 = vmatprep.subr.bf16.mxu0 0
        %1476 = vmatpush1.bf16.msra.mxu0 %v1445
        %1477 = vmatprep.subr.bf16.mxu0 0
        %1478 = vmatpush2.bf16.msra.mxu0 0
        %1479 = vmatprep.subr.bf16.mxu0 0
        %1480 = vmatpush2.bf16.msra.mxu0 0
        %1481 = vmatprep.subr.bf16.mxu0 0
        %1482 = vmatpush2.bf16.msra.mxu0 0
        %1483 = vmatprep.subr.bf16.mxu0 0
        %1484 = vmatpush2.bf16.msra.mxu0 0
        %1485 = vmatprep.subr.bf16.mxu0 0
        %1486 = vmatpush2.bf16.msra.mxu0 0
        %1487 = vmatprep.subr.bf16.mxu0 0
        %1488 = vmatpush2.bf16.msra.mxu0 0
        %1489 = vmatprep.subr.bf16.mxu0 0
        %1490 = vmatpush2.bf16.msra.mxu0 0
        %1491 = vmatprep.subr.bf16.mxu0 0
        %1492 = vmatpush2.bf16.msra.mxu0 0
        %1493 = vmatprep.mubr.bf16.mxu0 0
        %1494 = vmatmul.mubr.bf16.gmra.mxu0 %v1389
        %v1495 = vpop.f32.mrf.mxu0
        %v1496 = vadd.f32 %v1411, %v1495
        %v1497 = vpop.f32.mrf.mxu0
        %v1498 = vpop.f32.mrf.mxu0
        %v1499 = vpop.f32.mrf.mxu0
        %1500 = vdwg.mxu0
        %v1501 = vadd.f32 %v1496, %v1320
        %v1502 = vld [vmem:[%s12] sm:$0x1]
        %v1503 = vld [vmem:[%s13] sm:$0x1]
        %v1504 = vsel %vm1292, %v1501, 0.0
        %1505 = vadd.xlane.f32.xlu0 %v1504
        %v1506 = vpop.xlane.xlu0 %1505
        %v1507 = vmul.f32 %v1506, %v1296
        %v1508 = vsub.f32 %v1501, %v1507
        %v1509 = vmul.f32 %v1508, %v1508
        %v1510 = vsel %vm1292, %v1509, 0.0
        %1511 = vadd.xlane.f32.xlu0 %v1510
        %v1512 = vpop.xlane.xlu0 %1511
        %v1513 = vmul.f32 %v1512, %v1296
        %v1514 = vadd.f32 %v1513, 1e-05
        %v1515 = vrsqrt.pop %v1514
        %v1516 = vmul.f32 %v1508, %v1515
        %v1518 = vlaneseq
        %v1519 = vshrl.u32 %v1518, 7
        %v1520 = vsub.s32 0, %v1519
        %v1521 = vrot.slane %v1502, %v1520
        %v1523 = vmul.f32 %v1516, %v1521
        %v1525 = vlaneseq
        %v1526 = vshrl.u32 %v1525, 7
        %v1527 = vsub.s32 0, %v1526
        %v1528 = vrot.slane %v1503, %v1527
        %v1530 = vadd.f32 %v1523, %v1528
        %v1531 = vpack.c.bf16 %v1530, %v1530
        %vm1532 = vcmask 257024
        %1533 = vst.msk [vmem:[%s641] sm:$0xf] %vm1532, %v1531
        %s1534 = sand.u32 %s382, 1
        %s1535 = scalar_lea.sflag [#allocation4], %s1534
        %s1536 = sand.u32 %s382, 1
        %s1537 = smul.addr %s1536, 4
        %s1538 = scalar_lea.vmem [#allocation11], %s1537
        // Predicated region
        $region97: #{tpu_custom_call.1} parent=75 // pred_check
          %p1539 = pneg %p392
        $region98: #{tpu_custom_call.1} parent=75 // pred_check_branch
          %1541 = sbr.rel (%p1539) target = $region100
        $region99: #{tpu_custom_call.1} parent=75 // pred_region
          %s1543 = ssub.s32 64, 64
          %1544 = vsyncadd %s1535, %s1543
          %s1545 = sadd.s32 %s40, %s39
          %s1546 = smul.addr %s1545, 64
          %s1547 = scalar_lea.hbm %s14, %s1546
          %s1549 = sshll.u32 %s1538, 4
          %s1550 = int_to_ptr.vmem [resolvable:$true] %s1549
          %1552 = dma.vmem_to_hbm [thread:$0]  %s1550, 64, %s1547, %s1535
        $region100: #{tpu_custom_call.1} parent=75 // pred_fallthru
          _
      $region76: #{tpu_custom_call.1} parent=5 // pred_fallthru
        _
      %p1553 = scmp.le.s32.totalorder 2, %s30
      // Predicated region
      $region101: #{tpu_custom_call.1} parent=5 // pred_check
        %p1554 = pneg %p1553
      $region102: #{tpu_custom_call.1} parent=5 // pred_check_branch
        %1556 = sbr.rel (%p1554) target = $region104
      $region103: #{tpu_custom_call.1} parent=5 // pred_region
        %s1557 = ssub.s32 %s30, 2
        // Predicated region
        $region105: #{tpu_custom_call.1} parent=103 // pred_check
          %p1558 = pneg %p398
        $region106: #{tpu_custom_call.1} parent=103 // pred_check_branch
          %1560 = sbr.rel (%p1558) target = $region108
        $region107: #{tpu_custom_call.1} parent=103 // pred_region
          %s1561 = sand.u32 %s383, 1
          %s1562 = scalar_lea.sflag [#allocation4], %s1561
          %s1563 = sand.u32 %s383, 1
          %s1564 = smul.addr %s1563, 4
          %s1565 = scalar_lea.vmem [#allocation11], %s1564
          %1566 = dma.done %s1562, 64
        $region108: #{tpu_custom_call.1} parent=103 // pred_fallthru
          _
      $region104: #{tpu_custom_call.1} parent=5 // pred_fallthru
        _
    $region6: #{tpu_custom_call.1} parent=1 // loop_footer
      %s34 = sadd.s32 1, %s30
    $region7: #{tpu_custom_call.1} parent=1 // loop_footer_branch
      %29 = sbr.rel target = $region3
    $region8: #{tpu_custom_call.1} parent=1 // loop_exit
      _
    %1567 = vsyncpa [#allocation3], 1
    %s1568 = scalar_lea.sflag [#allocation3], 1
    %1569 = vsyncpa %s1568, 1
    %1570 = vsyncpa [#allocation6], 1
    %s1571 = scalar_lea.sflag [#allocation6], 1
    %1572 = vsyncpa %s1571, 1
    %1573 = vsyncpa [#allocation9], 1
    %1574 = vsyncpa [#allocation4], 1
    %s1575 = scalar_lea.sflag [#allocation4], 1
    %1576 = vsyncpa %s1575, 1

// kernel: tpu_custom_call.1
$region0: #{tpu_custom_call.1}
  #allocation0 [shape = 'u32[]', space=smem, size = 0x4, offset = 0x4, fixed_abs, tag = 'smem constant byte address 0x4 - core index']
  #allocation1 [shape = 'u32[144,128]{1,0:T(1,128)}', space=vmem, size = 0x12000, scoped, tag = 'internal scratch']
  %s0 = inlined_call_operand.vmem [shape: bf16[2,4,8,8], index: 0, kind: input, shape index: {}]
  %s1 = inlined_call_operand.vmem [shape: bf16[2,4,8,8], index: 1, kind: input, shape index: {}]
  %s2 = inlined_call_operand.hbm [shape: bf16[2,4,8,8], index: 2, kind: input, shape index: {}]
  %s3 = inlined_call_operand.hbm [shape: bf16[2,8,32], index: 3, kind: input, shape index: {}]
  %s4 = inlined_call_operand.hbm [shape: bf16[2,1,8,8], index: 4, kind: input, shape index: {}]
  %s5 = inlined_call_operand.vmem [shape: bf16[4,8,32], index: 5, kind: input, shape index: {}]
  %s6 = inlined_call_operand.vmem [shape: f32[1,32], index: 6, kind: input, shape index: {}]
  %s7 = inlined_call_operand.vmem [shape: f32[1,32], index: 7, kind: input, shape index: {}]
  %s8 = inlined_call_operand.hbm [shape: bf16[32,128], index: 8, kind: input, shape index: {}]
  %s9 = inlined_call_operand.hbm [shape: f32[1,128], index: 9, kind: input, shape index: {}]
  %s10 = inlined_call_operand.vmem [shape: bf16[128,32], index: 10, kind: input, shape index: {}]
  %s11 = inlined_call_operand.vmem [shape: f32[1,32], index: 11, kind: input, shape index: {}]
  %s12 = inlined_call_operand.vmem [shape: f32[1,32], index: 12, kind: input, shape index: {}]
  %s13 = inlined_call_operand.vmem [shape: f32[1,32], index: 13, kind: input, shape index: {}]
  %s14 = inlined_call_operand.hbm [shape: bf16[2,8,32], index: 14, kind: output, shape index: {}]
  %s15 = sld [smem:[#allocation0]]
  $region109: #{tpu_custom_call.1} parent=0
    _
  %s17 = ssub.s32 1, %s15
  %s18 = scalar_select 0, %s17, %s15
  $region1: #{tpu_custom_call.1} parent=0
    #allocation2 [shape = 'u8[16384]{0}', space=vmem, size = 0x4000, scoped, tag = 'input window, operand 2']
    #allocation3 [shape = 's32[2]{0}', space=sflag, size = 0x8, scoped, tag = 'scoped memory for tpu_custom_call.1']
    #allocation4 [shape = 's32[2]{0}', space=sflag, size = 0x8, scoped, tag = 'scoped memory for tpu_custom_call.1']
    #allocation5 [shape = 'u8[4096]{0}', space=vmem, size = 0x1000, scoped, tag = 'input window, operand 3']
    #allocation6 [shape = 's32[2]{0}', space=sflag, size = 0x8, scoped, tag = 'scoped memory for tpu_custom_call.1']
    #allocation7 [shape = 'u8[4096]{0}', space=vmem, size = 0x1000, scoped, tag = 'input window, operand 4']
    #allocation8 [shape = 'u8[8192]{0}', space=vmem, size = 0x2000, scoped, tag = 'input window, operand 8, single buffered']
    #allocation9 [shape = 's32[1]{0}', space=sflag, size = 0x4, scoped, tag = 'scoped memory for tpu_custom_call.1']
    #allocation10 [shape = 'u8[512]{0}', space=vmem, size = 0x400, scoped, tag = 'input window, operand 9, single buffered']
    #allocation11 [shape = 'u8[4096]{0}', space=vmem, size = 0x1000, scoped, tag = 'output window, operand 0']
    %19 = vsyncpa [#allocation3], 0
    %s20 = scalar_lea.sflag [#allocation3], 1
    %21 = vsyncpa %s20, 0
    %22 = vsyncpa [#allocation6], 0
    %s23 = scalar_lea.sflag [#allocation6], 1
    %24 = vsyncpa %s23, 0
    %25 = vsyncpa [#allocation9], 0
    %26 = vsyncpa [#allocation4], 0
    %s27 = scalar_lea.sflag [#allocation4], 1
    %28 = vsyncpa %s27, 0
    loop: start=0, step=1, limit=4
    $region2: #{tpu_custom_call.1} parent=1 // loop_pre_header
      _
    $region3: #{tpu_custom_call.1} parent=1 // loop_header
      %s30 = sphi 0, %s34
      %p31 = scmp.ge.s32.totalorder %s30, 4
      %s37 = sphi 0, %s49
      %s38 = sphi 0, %s45
      %s39 = sphi 0, %s37
      %s40 = sphi 0, %s38
      %s41 = sphi 0, %s39
      %s42 = sphi 0, %s40
      %s54 = sphi 0, %s56
      %s57 = sphi 0, %s54
      %s58 = sphi 0, %s57
      %s74 = sphi 0, %s58
      %s80 = sphi 0, %s82
      %s83 = sphi 0, %s80
      %s84 = sphi 0, %s83
      %s100 = sphi 0, %s84
      %s106 = sphi 0, %s108
      %s109 = sphi 0, %s106
      %s110 = sphi 0, %s109
      %s126 = sphi 0, %s110
      %s134 = sphi 0, %s136
      %s137 = sphi 0, %s134
      %s138 = sphi 0, %s137
      %s154 = sphi 0, %s138
      %s162 = sphi 0, %s164
      %s165 = sphi 0, %s162
      %s166 = sphi 0, %s165
      %s182 = sphi 0, %s166
      %s186 = sphi 0, %s186
      %s188 = sphi 0, %s186
      %s189 = sphi 0, %s188
      %s203 = sphi 0, %s189
      %s207 = sphi 0, %s207
      %s209 = sphi 0, %s207
      %s210 = sphi 0, %s209
      %s224 = sphi 0, %s210
      %s228 = sphi 0, %s228
      %s230 = sphi 0, %s228
      %s231 = sphi 0, %s230
      %s245 = sphi 0, %s231
      %s249 = sphi 0, %s249
      %s251 = sphi 0, %s249
      %s252 = sphi 0, %s251
      %s266 = sphi 0, %s252
      %s270 = sphi 0, %s270
      %s272 = sphi 0, %s270
      %s273 = sphi 0, %s272
      %s287 = sphi 0, %s273
      %s291 = sphi 0, %s291
      %s293 = sphi 0, %s291
      %s294 = sphi 0, %s293
      %s308 = sphi 0, %s294
      %s312 = sphi 0, %s312
      %s314 = sphi 0, %s312
      %s315 = sphi 0, %s314
      %s329 = sphi 0, %s315
      %s333 = sphi 0, %s333
      %s335 = sphi 0, %s333
      %s336 = sphi 0, %s335
      %s350 = sphi 0, %s336
      %s354 = sphi 0, %s354
      %s356 = sphi 0, %s354
      %s357 = sphi 0, %s356
      %s371 = sphi 0, %s357
      %s379 = sphi 0, %s381
      %s382 = sphi 0, %s379
      %s383 = sphi 0, %s382
      %s399 = sphi 0, %s383
    $region4: #{tpu_custom_call.1} parent=1 // loop_header_branch
      %33 = sbr.rel (%p31) target = $region8
    $region5: #{tpu_custom_call.1} parent=1 // loop_body
      %s35 = ssub.s32 %s30, 1
      %s36 = ssub.s32 %s30, 2
      %s43 = sadd.s32 1, %s38
      %p44 = scmp.ge.s32.totalorder %s43, 1
      %s45 = scalar_select %p44, 0, %s43
      %s46 = sadd.s32 1, %s37
      %s47 = scalar_select %p44, %s46, %s37
      %p48 = scmp.ge.s32.totalorder %s47, 2
      %s49 = scalar_select %p48, 0, %s47
      %s50 = ssub.s32 %s37, %s49
      %s51 = ssub.s32 %s38, %s45
      %s52 = sor.u32 %s50, %s51
      %p53 = scmp.eq.s32.totalorder %s52, 0
      %s55 = sadd.s32 %s54, 1
      %s56 = scalar_select %p53, %s54, %s55
      %p59 = pneg %p53
      %p60 = scmp.eq.s32.totalorder %s30, 1
      %p61 = por %p59, %p60
      %p62 = scmp.ne.s32.totalorder %s54, %s57
      %p63 = scmp.eq.s32.totalorder %s30, 0
      %p64 = por %p62, %p63
      %p65 = scmp.ne.s32.totalorder %s54, %s57
      %p66 = scmp.eq.s32.totalorder %s35, 1
      %p67 = por %p65, %p66
      %p68 = scmp.ne.s32.totalorder %s57, %s58
      %p69 = scmp.eq.s32.totalorder %s35, 0
      %p70 = por %p68, %p69
      %p71 = scmp.ne.s32.totalorder %s57, %s58
      %p72 = scmp.eq.s32.totalorder %s36, 1
      %p73 = por %p71, %p72
      %p75 = scmp.ne.s32.totalorder %s58, %s74
      %p76 = scmp.eq.s32.totalorder %s36, 0
      %p77 = por %p75, %p76
      %s78 = ssub.s32 %s37, %s49
      %p79 = scmp.eq.s32.totalorder %s78, 0
      %s81 = sadd.s32 %s80, 1
      %s82 = scalar_select %p79, %s80, %s81
      %p85 = pneg %p79
      %p86 = scmp.eq.s32.totalorder %s30, 1
      %p87 = por %p85, %p86
      %p88 = scmp.ne.s32.totalorder %s80, %s83
      %p89 = scmp.eq.s32.totalorder %s30, 0
      %p90 = por %p88, %p89
      %p91 = scmp.ne.s32.totalorder %s80, %s83
      %p92 = scmp.eq.s32.totalorder %s35, 1
      %p93 = por %p91, %p92
      %p94 = scmp.ne.s32.totalorder %s83, %s84
      %p95 = scmp.eq.s32.totalorder %s35, 0
      %p96 = por %p94, %p95
      %p97 = scmp.ne.s32.totalorder %s83, %s84
      %p98 = scmp.eq.s32.totalorder %s36, 1
      %p99 = por %p97, %p98
      %p101 = scmp.ne.s32.totalorder %s84, %s100
      %p102 = scmp.eq.s32.totalorder %s36, 0
      %p103 = por %p101, %p102
      %s104 = ssub.s32 %s37, %s49
      %p105 = scmp.eq.s32.totalorder %s104, 0
      %s107 = sadd.s32 %s106, 1
      %s108 = scalar_select %p105, %s106, %s107
      %p111 = pneg %p105
      %p112 = scmp.eq.s32.totalorder %s30, 1
      %p113 = por %p111, %p112
      %p114 = scmp.ne.s32.totalorder %s106, %s109
      %p115 = scmp.eq.s32.totalorder %s30, 0
      %p116 = por %p114, %p115
      %p117 = scmp.ne.s32.totalorder %s106, %s109
      %p118 = scmp.eq.s32.totalorder %s35, 1
      %p119 = por %p117, %p118
      %p120 = scmp.ne.s32.totalorder %s109, %s110
      %p121 = scmp.eq.s32.totalorder %s35, 0
      %p122 = por %p120, %p121
      %p123 = scmp.ne.s32.totalorder %s109, %s110
      %p124 = scmp.eq.s32.totalorder %s36, 1
      %p125 = por %p123, %p124
      %p127 = scmp.ne.s32.totalorder %s110, %s126
      %p128 = scmp.eq.s32.totalorder %s36, 0
      %p129 = por %p127, %p128
      %s130 = ssub.s32 %s37, %s49
      %s131 = ssub.s32 %s38, %s45
      %s132 = sor.u32 %s130, %s131
      %p133 = scmp.eq.s32.totalorder %s132, 0
      %s135 = sadd.s32 %s134, 1
      %s136 = scalar_select %p133, %s134, %s135
      %p139 = pneg %p133
      %p140 = scmp.eq.s32.totalorder %s30, 1
      %p141 = por %p139, %p140
      %p142 = scmp.ne.s32.totalorder %s134, %s137
      %p143 = scmp.eq.s32.totalorder %s30, 0
      %p144 = por %p142, %p143
      %p145 = scmp.ne.s32.totalorder %s134, %s137
      %p146 = scmp.eq.s32.totalorder %s35, 1
      %p147 = por %p145, %p146
      %p148 = scmp.ne.s32.totalorder %s137, %s138
      %p149 = scmp.eq.s32.totalorder %s35, 0
      %p150 = por %p148, %p149
      %p151 = scmp.ne.s32.totalorder %s137, %s138
      %p152 = scmp.eq.s32.totalorder %s36, 1
      %p153 = por %p151, %p152
      %p155 = scmp.ne.s32.totalorder %s138, %s154
      %p156 = scmp.eq.s32.totalorder %s36, 0
      %p157 = por %p155, %p156
      %s158 = ssub.s32 %s37, %s49
      %s159 = ssub.s32 %s38, %s45
      %s160 = sor.u32 %s158, %s159
      %p161 = scmp.eq.s32.totalorder %s160, 0
      %s163 = sadd.s32 %s162, 1
      %s164 = scalar_select %p161, %s162, %s163
      %p167 = pneg %p161
      %p168 = scmp.eq.s32.totalorder %s30, 1
      %p169 = por %p167, %p168
      %p170 = scmp.ne.s32.totalorder %s162, %s165
      %p171 = scmp.eq.s32.totalorder %s30, 0
      %p172 = por %p170, %p171
      %p173 = scmp.ne.s32.totalorder %s162, %s165
      %p174 = scmp.eq.s32.totalorder %s35, 1
      %p175 = por %p173, %p174
      %p176 = scmp.ne.s32.totalorder %s165, %s166
      %p177 = scmp.eq.s32.totalorder %s35, 0
      %p178 = por %p176, %p177
      %p179 = scmp.ne.s32.totalorder %s165, %s166
      %p180 = scmp.eq.s32.totalorder %s36, 1
      %p181 = por %p179, %p180
      %p183 = scmp.ne.s32.totalorder %s166, %s182
      %p184 = scmp.eq.s32.totalorder %s36, 0
      %p185 = por %p183, %p184
      %s187 = sadd.s32 %s186, 1
      %p190 = scmp.eq.s32.totalorder %s30, 1
      %p191 = scmp.ne.s32.totalorder %s186, %s188
      %p192 = scmp.eq.s32.totalorder %s30, 0
      %p193 = por %p191, %p192
      %p194 = scmp.ne.s32.totalorder %s186, %s188
      %p195 = scmp.eq.s32.totalorder %s35, 1
      %p196 = por %p194, %p195
      %p197 = scmp.ne.s32.totalorder %s188, %s189
      %p198 = scmp.eq.s32.totalorder %s35, 0
      %p199 = por %p197, %p198
      %p200 = scmp.ne.s32.totalorder %s188, %s189
      %p201 = scmp.eq.s32.totalorder %s36, 1
      %p202 = por %p200, %p201
      %p204 = scmp.ne.s32.totalorder %s189, %s203
      %p205 = scmp.eq.s32.totalorder %s36, 0
      %p206 = por %p204, %p205
      %s208 = sadd.s32 %s207, 1
      %p211 = scmp.eq.s32.totalorder %s30, 1
      %p212 = scmp.ne.s32.totalorder %s207, %s209
      %p213 = scmp.eq.s32.totalorder %s30, 0
      %p214 = por %p212, %p213
      %p215 = scmp.ne.s32.totalorder %s207, %s209
      %p216 = scmp.eq.s32.totalorder %s35, 1
      %p217 = por %p215, %p216
      %p218 = scmp.ne.s32.totalorder %s209, %s210
      %p219 = scmp.eq.s32.totalorder %s35, 0
      %p220 = por %p218, %p219
      %p221 = scmp.ne.s32.totalorder %s209, %s210
      %p222 = scmp.eq.s32.totalorder %s36, 1
      %p223 = por %p221, %p222
      %p225 = scmp.ne.s32.totalorder %s210, %s224
      %p226 = scmp.eq.s32.totalorder %s36, 0
      %p227 = por %p225, %p226
      %s229 = sadd.s32 %s228, 1
      %p232 = scmp.eq.s32.totalorder %s30, 1
      %p233 = scmp.ne.s32.totalorder %s228, %s230
      %p234 = scmp.eq.s32.totalorder %s30, 0
      %p235 = por %p233, %p234
      %p236 = scmp.ne.s32.totalorder %s228, %s230
      %p237 = scmp.eq.s32.totalorder %s35, 1
      %p238 = por %p236, %p237
      %p239 = scmp.ne.s32.totalorder %s230, %s231
      %p240 = scmp.eq.s32.totalorder %s35, 0
      %p241 = por %p239, %p240
      %p242 = scmp.ne.s32.totalorder %s230, %s231
      %p243 = scmp.eq.s32.totalorder %s36, 1
      %p244 = por %p242, %p243
      %p246 = scmp.ne.s32.totalorder %s231, %s245
      %p247 = scmp.eq.s32.totalorder %s36, 0
      %p248 = por %p246, %p247
      %s250 = sadd.s32 %s249, 1
      %p253 = scmp.eq.s32.totalorder %s30, 1
      %p254 = scmp.ne.s32.totalorder %s249, %s251
      %p255 = scmp.eq.s32.totalorder %s30, 0
      %p256 = por %p254, %p255
      %p257 = scmp.ne.s32.totalorder %s249, %s251
      %p258 = scmp.eq.s32.totalorder %s35, 1
      %p259 = por %p257, %p258
      %p260 = scmp.ne.s32.totalorder %s251, %s252
      %p261 = scmp.eq.s32.totalorder %s35, 0
      %p262 = por %p260, %p261
      %p263 = scmp.ne.s32.totalorder %s251, %s252
      %p264 = scmp.eq.s32.totalorder %s36, 1
      %p265 = por %p263, %p264
      %p267 = scmp.ne.s32.totalorder %s252, %s266
      %p268 = scmp.eq.s32.totalorder %s36, 0
      %p269 = por %p267, %p268
      %s271 = sadd.s32 %s270, 1
      %p274 = scmp.eq.s32.totalorder %s30, 1
      %p275 = scmp.ne.s32.totalorder %s270, %s272
      %p276 = scmp.eq.s32.totalorder %s30, 0
      %p277 = por %p275, %p276
      %p278 = scmp.ne.s32.totalorder %s270, %s272
      %p279 = scmp.eq.s32.totalorder %s35, 1
      %p280 = por %p278, %p279
      %p281 = scmp.ne.s32.totalorder %s272, %s273
      %p282 = scmp.eq.s32.totalorder %s35, 0
      %p283 = por %p281, %p282
      %p284 = scmp.ne.s32.totalorder %s272, %s273
      %p285 = scmp.eq.s32.totalorder %s36, 1
      %p286 = por %p284, %p285
      %p288 = scmp.ne.s32.totalorder %s273, %s287
      %p289 = scmp.eq.s32.totalorder %s36, 0
      %p290 = por %p288, %p289
      %s292 = sadd.s32 %s291, 1
      %p295 = scmp.eq.s32.totalorder %s30, 1
      %p296 = scmp.ne.s32.totalorder %s291, %s293
      %p297 = scmp.eq.s32.totalorder %s30, 0
      %p298 = por %p296, %p297
      %p299 = scmp.ne.s32.totalorder %s291, %s293
      %p300 = scmp.eq.s32.totalorder %s35, 1
      %p301 = por %p299, %p300
      %p302 = scmp.ne.s32.totalorder %s293, %s294
      %p303 = scmp.eq.s32.totalorder %s35, 0
      %p304 = por %p302, %p303
      %p305 = scmp.ne.s32.totalorder %s293, %s294
      %p306 = scmp.eq.s32.totalorder %s36, 1
      %p307 = por %p305, %p306
      %p309 = scmp.ne.s32.totalorder %s294, %s308
      %p310 = scmp.eq.s32.totalorder %s36, 0
      %p311 = por %p309, %p310
      %s313 = sadd.s32 %s312, 1
      %p316 = scmp.eq.s32.totalorder %s30, 1
      %p317 = scmp.ne.s32.totalorder %s312, %s314
      %p318 = scmp.eq.s32.totalorder %s30, 0
      %p319 = por %p317, %p318
      %p320 = scmp.ne.s32.totalorder %s312, %s314
      %p321 = scmp.eq.s32.totalorder %s35, 1
      %p322 = por %p320, %p321
      %p323 = scmp.ne.s32.totalorder %s314, %s315
      %p324 = scmp.eq.s32.totalorder %s35, 0
      %p325 = por %p323, %p324
      %p326 = scmp.ne.s32.totalorder %s314, %s315
      %p327 = scmp.eq.s32.totalorder %s36, 1
      %p328 = por %p326, %p327
      %p330 = scmp.ne.s32.totalorder %s315, %s329
      %p331 = scmp.eq.s32.totalorder %s36, 0
      %p332 = por %p330, %p331
      %s334 = sadd.s32 %s333, 1
      %p337 = scmp.eq.s32.totalorder %s30, 1
      %p338 = scmp.ne.s32.totalorder %s333, %s335
      %p339 = scmp.eq.s32.totalorder %s30, 0
      %p340 = por %p338, %p339
      %p341 = scmp.ne.s32.totalorder %s333, %s335
      %p342 = scmp.eq.s32.totalorder %s35, 1
      %p343 = por %p341, %p342
      %p344 = scmp.ne.s32.totalorder %s335, %s336
      %p345 = scmp.eq.s32.totalorder %s35, 0
      %p346 = por %p344, %p345
      %p347 = scmp.ne.s32.totalorder %s335, %s336
      %p348 = scmp.eq.s32.totalorder %s36, 1
      %p349 = por %p347, %p348
      %p351 = scmp.ne.s32.totalorder %s336, %s350
      %p352 = scmp.eq.s32.totalorder %s36, 0
      %p353 = por %p351, %p352
      %s355 = sadd.s32 %s354, 1
      %p358 = scmp.eq.s32.totalorder %s30, 1
      %p359 = scmp.ne.s32.totalorder %s354, %s356
      %p360 = scmp.eq.s32.totalorder %s30, 0
      %p361 = por %p359, %p360
      %p362 = scmp.ne.s32.totalorder %s354, %s356
      %p363 = scmp.eq.s32.totalorder %s35, 1
      %p364 = por %p362, %p363
      %p365 = scmp.ne.s32.totalorder %s356, %s357
      %p366 = scmp.eq.s32.totalorder %s35, 0
      %p367 = por %p365, %p366
      %p368 = scmp.ne.s32.totalorder %s356, %s357
      %p369 = scmp.eq.s32.totalorder %s36, 1
      %p370 = por %p368, %p369
      %p372 = scmp.ne.s32.totalorder %s357, %s371
      %p373 = scmp.eq.s32.totalorder %s36, 0
      %p374 = por %p372, %p373
      %s375 = ssub.s32 %s37, %s49
      %s376 = ssub.s32 %s38, %s45
      %s377 = sor.u32 %s375, %s376
      %p378 = scmp.eq.s32.totalorder %s377, 0
      %s380 = sadd.s32 %s379, 1
      %s381 = scalar_select %p378, %s379, %s380
      %p384 = pneg %p378
      %p385 = scmp.eq.s32.totalorder %s30, 1
      %p386 = por %p384, %p385
      %p387 = scmp.ne.s32.totalorder %s379, %s382
      %p388 = scmp.eq.s32.totalorder %s30, 0
      %p389 = por %p387, %p388
      %p390 = scmp.ne.s32.totalorder %s379, %s382
      %p391 = scmp.eq.s32.totalorder %s35, 1
      %p392 = por %p390, %p391
      %p393 = scmp.ne.s32.totalorder %s382, %s383
      %p394 = scmp.eq.s32.totalorder %s35, 0
      %p395 = por %p393, %p394
      %p396 = scmp.ne.s32.totalorder %s382, %s383
      %p397 = scmp.eq.s32.totalorder %s36, 1
      %p398 = por %p396, %p397
      %p400 = scmp.ne.s32.totalorder %s383, %s399
      %p401 = scmp.eq.s32.totalorder %s36, 0
      %p402 = por %p400, %p401
      %p403 = scmp.le.s32.totalorder 1, %s30
      %p404 = scmp.lt.s32.totalorder %s30, 3
      %p405 = pnand %p403, %p404
      %p406 = pneg %p405
      // Predicated region
      $region9: #{tpu_custom_call.1} parent=5 // pred_check
        _
      $region10: #{tpu_custom_call.1} parent=5 // pred_check_branch
        %408 = sbr.rel (%p405) target = $region12
      $region11: #{tpu_custom_call.1} parent=5 // pred_region
        %s409 = ssub.s32 %s30, 1
        // Predicated region
        $region13: #{tpu_custom_call.1} parent=11 // pred_check
          %p410 = pneg %p199
        $region14: #{tpu_custom_call.1} parent=11 // pred_check_branch
          %412 = sbr.rel (%p410) target = $region16
        $region15: #{tpu_custom_call.1} parent=11 // pred_region
          _
        $region16: #{tpu_custom_call.1} parent=11 // pred_fallthru
          _
        // Predicated region
        $region17: #{tpu_custom_call.1} parent=11 // pred_check
          %p413 = pneg %p220
        $region18: #{tpu_custom_call.1} parent=11 // pred_check_branch
          %415 = sbr.rel (%p413) target = $region20
        $region19: #{tpu_custom_call.1} parent=11 // pred_region
          _
        $region20: #{tpu_custom_call.1} parent=11 // pred_fallthru
          _
        // Predicated region
        $region21: #{tpu_custom_call.1} parent=11 // pred_check
          %p416 = pneg %p241
        $region22: #{tpu_custom_call.1} parent=11 // pred_check_branch
          %418 = sbr.rel (%p416) target = $region24
        $region23: #{tpu_custom_call.1} parent=11 // pred_region
          _
        $region24: #{tpu_custom_call.1} parent=11 // pred_fallthru
          _
        // Predicated region
        $region25: #{tpu_custom_call.1} parent=11 // pred_check
          %p419 = pneg %p262
        $region26: #{tpu_custom_call.1} parent=11 // pred_check_branch
          %421 = sbr.rel (%p419) target = $region28
        $region27: #{tpu_custom_call.1} parent=11 // pred_region
          %s423 = ssub.s32 256, 256
          %424 = vsyncadd [#allocation9], %s423
          %s425 = sshll.u32 [#allocation8], 4
          %s426 = int_to_ptr.vmem [resolvable:$true] %s425
          %431 = dma.hbm_to_vmem [thread:$0]  %s8, 256, %s426, [#allocation9], 64, 64, 4
        $region28: #{tpu_custom_call.1} parent=11 // pred_fallthru
          _
        // Predicated region
        $region29: #{tpu_custom_call.1} parent=11 // pred_check
          %p432 = pneg %p283
        $region30: #{tpu_custom_call.1} parent=11 // pred_check_branch
          %434 = sbr.rel (%p432) target = $region32
        $region31: #{tpu_custom_call.1} parent=11 // pred_region
          %s436 = ssub.s32 16, 16
          %437 = vsyncadd [#allocation9], %s436
          %s439 = sshll.u32 [#allocation10], 4
          %s440 = int_to_ptr.vmem [resolvable:$true] %s439
          %442 = dma.hbm_to_vmem [thread:$0]  %s9, 16, %s440, [#allocation9]
        $region32: #{tpu_custom_call.1} parent=11 // pred_fallthru
          _
        // Predicated region
        $region33: #{tpu_custom_call.1} parent=11 // pred_check
          %p443 = pneg %p304
        $region34: #{tpu_custom_call.1} parent=11 // pred_check_branch
          %445 = sbr.rel (%p443) target = $region36
        $region35: #{tpu_custom_call.1} parent=11 // pred_region
          _
        $region36: #{tpu_custom_call.1} parent=11 // pred_fallthru
          _
        // Predicated region
        $region37: #{tpu_custom_call.1} parent=11 // pred_check
          %p446 = pneg %p325
        $region38: #{tpu_custom_call.1} parent=11 // pred_check_branch
          %448 = sbr.rel (%p446) target = $region40
        $region39: #{tpu_custom_call.1} parent=11 // pred_region
          _
        $region40: #{tpu_custom_call.1} parent=11 // pred_fallthru
          _
        // Predicated region
        $region41: #{tpu_custom_call.1} parent=11 // pred_check
          %p449 = pneg %p346
        $region42: #{tpu_custom_call.1} parent=11 // pred_check_branch
          %451 = sbr.rel (%p449) target = $region44
        $region43: #{tpu_custom_call.1} parent=11 // pred_region
          _
        $region44: #{tpu_custom_call.1} parent=11 // pred_fallthru
          _
        // Predicated region
        $region45: #{tpu_custom_call.1} parent=11 // pred_check
          %p452 = pneg %p367
        $region46: #{tpu_custom_call.1} parent=11 // pred_check_branch
          %454 = sbr.rel (%p452) target = $region48
        $region47: #{tpu_custom_call.1} parent=11 // pred_region
          _
        $region48: #{tpu_custom_call.1} parent=11 // pred_fallthru
          _
      $region12: #{tpu_custom_call.1} parent=5 // pred_fallthru
        _
      %p455 = scmp.lt.s32.totalorder %s30, 2
      // Predicated region
      $region49: #{tpu_custom_call.1} parent=5 // pred_check
        %p456 = pneg %p455
      $region50: #{tpu_custom_call.1} parent=5 // pred_check_branch
        %458 = sbr.rel (%p456) target = $region52
      $region51: #{tpu_custom_call.1} parent=5 // pred_region
        // Predicated region
        $region53: #{tpu_custom_call.1} parent=51 // pred_check
          %p459 = pneg %p64
        $region54: #{tpu_custom_call.1} parent=51 // pred_check_branch
          %461 = sbr.rel (%p459) target = $region56
        $region55: #{tpu_custom_call.1} parent=51 // pred_region
          %p462 = scmp.lt.s32.totalorder %s37, 1
          %s463 = scalar_select %p462, %s37, 1
          %p464 = scmp.lt.s32.totalorder %s38, 0
          %s465 = scalar_select %p464, %s38, 0
          %s466 = smul.addr %s463, 4
          %s467 = sadd.s32 %s465, %s466
          %s468 = smul.addr %s467, 4
          %s469 = scalar_lea.vmem %s0, %s468
        $region56: #{tpu_custom_call.1} parent=51 // pred_fallthru
          _
        // Predicated region
        $region57: #{tpu_custom_call.1} parent=51 // pred_check
          %p470 = pneg %p90
        $region58: #{tpu_custom_call.1} parent=51 // pred_check_branch
          %472 = sbr.rel (%p470) target = $region60
        $region59: #{tpu_custom_call.1} parent=51 // pred_region
          %p473 = scmp.lt.s32.totalorder %s37, 1
          %s474 = scalar_select %p473, %s37, 1
          %s475 = smul.addr %s474, 4
          %s476 = smul.addr %s475, 4
          %s477 = scalar_lea.vmem %s1, %s476
        $region60: #{tpu_custom_call.1} parent=51 // pred_fallthru
          _
        // Predicated region
        $region61: #{tpu_custom_call.1} parent=51 // pred_check
          %p478 = pneg %p116
        $region62: #{tpu_custom_call.1} parent=51 // pred_check_branch
          %480 = sbr.rel (%p478) target = $region64
        $region63: #{tpu_custom_call.1} parent=51 // pred_region
          %s481 = sand.u32 %s106, 1
          %s482 = scalar_lea.sflag [#allocation3], %s481
          %s483 = sand.u32 %s106, 1
          %s484 = smul.addr %s483, 16
          %s485 = scalar_lea.vmem [#allocation2], %s484
          %s487 = ssub.s32 256, 256
          %488 = vsyncadd %s482, %s487
          %s489 = smul.addr %s37, 4
          %s490 = smul.addr %s489, 64
          %s491 = scalar_lea.hbm %s2, %s490
          %s492 = sshll.u32 %s485, 4
          %s493 = int_to_ptr.vmem [resolvable:$true] %s492
          %498 = dma.hbm_to_vmem [thread:$0]  %s491, 256, %s493, %s482, 64, 64, 4
        $region64: #{tpu_custom_call.1} parent=51 // pred_fallthru
          _
        // Predicated region
        $region65: #{tpu_custom_call.1} parent=51 // pred_check
          %p499 = pneg %p144
        $region66: #{tpu_custom_call.1} parent=51 // pred_check_branch
          %501 = sbr.rel (%p499) target = $region68
        $region67: #{tpu_custom_call.1} parent=51 // pred_region
          %s502 = sand.u32 %s30, 1
          %s503 = scalar_lea.sflag [#allocation6], %s502
          %s504 = sand.u32 %s134, 1
          %s505 = smul.addr %s504, 4
          %s506 = scalar_lea.vmem [#allocation5], %s505
          %s508 = ssub.s32 64, 64
          %509 = vsyncadd %s503, %s508
          %s510 = sadd.s32 %s38, %s37
          %s511 = smul.addr %s510, 64
          %s512 = scalar_lea.hbm %s3, %s511
          %s514 = sshll.u32 %s506, 4
          %s515 = int_to_ptr.vmem [resolvable:$true] %s514
          %517 = dma.hbm_to_vmem [thread:$0]  %s512, 64, %s515, %s503
        $region68: #{tpu_custom_call.1} parent=51 // pred_fallthru
          _
        // Predicated region
        $region69: #{tpu_custom_call.1} parent=51 // pred_check
          %p518 = pneg %p172
        $region70: #{tpu_custom_call.1} parent=51 // pred_check_branch
          %520 = sbr.rel (%p518) target = $region72
        $region71: #{tpu_custom_call.1} parent=51 // pred_region
          %s521 = sand.u32 %s30, 1
          %s522 = scalar_lea.sflag [#allocation6], %s521
          %s523 = sand.u32 %s162, 1
          %s524 = smul.addr %s523, 4
          %s525 = scalar_lea.vmem [#allocation7], %s524
          %s527 = ssub.s32 64, 64
          %528 = vsyncadd %s522, %s527
          %s529 = sadd.s32 %s38, %s37
          %s530 = smul.addr %s529, 64
          %s531 = scalar_lea.hbm %s4, %s530
          %s533 = sshll.u32 %s525, 4
          %s534 = int_to_ptr.vmem [resolvable:$true] %s533
          %536 = dma.hbm_to_vmem [thread:$0]  %s531, 64, %s534, %s522
        $region72: #{tpu_custom_call.1} parent=51 // pred_fallthru
          _
      $region52: #{tpu_custom_call.1} parent=5 // pred_fallthru
        _
      %p537 = scmp.le.s32.totalorder 1, %s30
      %p538 = scmp.lt.s32.totalorder %s30, 3
      %p539 = pnand %p537, %p538
      %p540 = pneg %p539
      // Predicated region
      $region73: #{tpu_custom_call.1} parent=5 // pred_check
        _
      $region74: #{tpu_custom_call.1} parent=5 // pred_check_branch
        %542 = sbr.rel (%p539) target = $region76
      $region75: #{tpu_custom_call.1} parent=5 // pred_region
        %s543 = ssub.s32 %s30, 1
        %s544 = sand.u32 %s109, 1
        %s545 = scalar_lea.sflag [#allocation3], %s544
        %s546 = sand.u32 %s109, 1
        %s547 = smul.addr %s546, 16
        %s548 = scalar_lea.vmem [#allocation2], %s547
        // Predicated region
        $region77: #{tpu_custom_call.1} parent=75 // pred_check
          %p549 = pneg %p122
        $region78: #{tpu_custom_call.1} parent=75 // pred_check_branch
          %551 = sbr.rel (%p549) target = $region80
        $region79: #{tpu_custom_call.1} parent=75 // pred_region
          %552 = dma.done %s545, 256
        $region80: #{tpu_custom_call.1} parent=75 // pred_fallthru
          _
        %s553 = sand.u32 %s35, 1
        %s554 = scalar_lea.sflag [#allocation6], %s553
        %s555 = sand.u32 %s137, 1
        %s556 = smul.addr %s555, 4
        %s557 = scalar_lea.vmem [#allocation5], %s556
        // Predicated region
        $region81: #{tpu_custom_call.1} parent=75 // pred_check
          %p558 = pneg %p150
        $region82: #{tpu_custom_call.1} parent=75 // pred_check_branch
          %560 = sbr.rel (%p558) target = $region84
        $region83: #{tpu_custom_call.1} parent=75 // pred_region
          %561 = dma.done %s554, 64
        $region84: #{tpu_custom_call.1} parent=75 // pred_fallthru
          _
        %s562 = sand.u32 %s35, 1
        %s563 = scalar_lea.sflag [#allocation6], %s562
        %s564 = sand.u32 %s165, 1
        %s565 = smul.addr %s564, 4
        %s566 = scalar_lea.vmem [#allocation7], %s565
        // Predicated region
        $region85: #{tpu_custom_call.1} parent=75 // pred_check
          %p567 = pneg %p178
        $region86: #{tpu_custom_call.1} parent=75 // pred_check_branch
          %569 = sbr.rel (%p567) target = $region88
        $region87: #{tpu_custom_call.1} parent=75 // pred_region
          %570 = dma.done %s563, 64
        $region88: #{tpu_custom_call.1} parent=75 // pred_fallthru
          _
        // Predicated region
        $region89: #{tpu_custom_call.1} parent=75 // pred_check
          %p571 = pneg %p262
        $region90: #{tpu_custom_call.1} parent=75 // pred_check_branch
          %573 = sbr.rel (%p571) target = $region92
        $region91: #{tpu_custom_call.1} parent=75 // pred_region
          %574 = dma.done [#allocation9], 256
        $region92: #{tpu_custom_call.1} parent=75 // pred_fallthru
          _
        // Predicated region
        $region93: #{tpu_custom_call.1} parent=75 // pred_check
          %p575 = pneg %p283
        $region94: #{tpu_custom_call.1} parent=75 // pred_check_branch
          %577 = sbr.rel (%p575) target = $region96
        $region95: #{tpu_custom_call.1} parent=75 // pred_region
          %578 = dma.done [#allocation9], 16
        $region96: #{tpu_custom_call.1} parent=75 // pred_fallthru
          _
        %p579 = scmp.lt.s32.totalorder %s39, 1
        %s580 = scalar_select %p579, %s39, 1
        %p581 = scmp.lt.s32.totalorder %s40, 0
        %s582 = scalar_select %p581, %s40, 0
        %s583 = smul.addr %s580, 4
        %s584 = sadd.s32 %s582, %s583
        %s585 = smul.addr %s584, 4
        %s586 = scalar_lea.vmem %s0, %s585
        %p587 = pneg %p70
        %p588 = pneg %p67
        %p589 = scmp.lt.s32.totalorder %s39, 1
        %s590 = scalar_select %p589, %s39, 1
        %s591 = smul.addr %s590, 4
        %s592 = smul.addr %s591, 4
        %s593 = scalar_lea.vmem %s1, %s592
        %p594 = pneg %p96
        %p595 = pneg %p93
        %s596 = sand.u32 %s109, 1
        %s597 = scalar_lea.sflag [#allocation3], %s596
        %s598 = sand.u32 %s109, 1
        %s599 = smul.addr %s598, 16
        %s600 = scalar_lea.vmem [#allocation2], %s599
        %p601 = pneg %p122
        %p602 = pneg %p119
        %s603 = sand.u32 %s35, 1
        %s604 = scalar_lea.sflag [#allocation6], %s603
        %s605 = sand.u32 %s137, 1
        %s606 = smul.addr %s605, 4
        %s607 = scalar_lea.vmem [#allocation5], %s606
        %p608 = pneg %p150
        %p609 = pneg %p147
        %s610 = sand.u32 %s35, 1
        %s611 = scalar_lea.sflag [#allocation6], %s610
        %s612 = sand.u32 %s165, 1
        %s613 = smul.addr %s612, 4
        %s614 = scalar_lea.vmem [#allocation7], %s613
        %p615 = pneg %p178
        %p616 = pneg %p175
        %p617 = pneg %p199
        %p618 = pneg %p196
        %p619 = pneg %p220
        %p620 = pneg %p217
        %p621 = pneg %p241
        %p622 = pneg %p238
        %p623 = pneg %p262
        %p624 = pneg %p259
        %p625 = pneg %p283
        %p626 = pneg %p280
        %p627 = pneg %p304
        %p628 = pneg %p301
        %p629 = pneg %p325
        %p630 = pneg %p322
        %p631 = pneg %p346
        %p632 = pneg %p343
        %p633 = pneg %p367
        %p634 = pneg %p364
        %p635 = pneg %p395
        %p636 = pneg %p392
        %s637 = sand.u32 %s382, 1
        %s638 = scalar_lea.sflag [#allocation4], %s637
        %s639 = sand.u32 %s382, 1
        %s640 = smul.addr %s639, 4
        %s641 = scalar_lea.vmem [#allocation11], %s640
        %p642 = scmp.lt.s32.totalorder %s39, 1
        %s643 = scalar_select %p642, %s39, 1
        %p644 = scmp.lt.s32.totalorder %s40, 0
        %s645 = scalar_select %p644, %s40, 0
        %s646 = smul.addr %s643, 4
        %s647 = sadd.s32 %s645, %s646
        %s648 = smul.addr %s647, 4
        %s649 = scalar_lea.vmem %s0, %s648
        %p650 = scmp.lt.s32.totalorder %s39, 1
        %s651 = scalar_select %p650, %s39, 1
        %s652 = smul.addr %s651, 4
        %s653 = smul.addr %s652, 4
        %s654 = scalar_lea.vmem %s1, %s653
        %v657 = vld [vmem:[%s649] sm:$0xf]
        %v658 = vld [vmem:[%s649 + $0x4] sm:$0xf]
        %v659 = vld [vmem:[%s649 + $0x8] sm:$0xf]
        %v660 = vld [vmem:[%s649 + $0xc] sm:$0xf]
        %v661 = vmul.bf16 %v657, 1085620405
        %v662 = vmul.bf16 %v658, 1085620405
        %v663 = vmul.bf16 %v659, 1085620405
        %v664 = vmul.bf16 %v660, 1085620405
        %v665 = vld [vmem:[%s654] sm:$0xf]
        %v666 = vld [vmem:[%s654 + $0x4] sm:$0xf]
        %v667 = vld [vmem:[%s654 + $0x8] sm:$0xf]
        %v668 = vld [vmem:[%s654 + $0xc] sm:$0xf]
        %v669 = vld [vmem:[%s548] sm:$0xf]
        %v670 = vld [vmem:[%s548 + $0x4] sm:$0xf]
        %v671 = vld [vmem:[%s548 + $0x8] sm:$0xf]
        %v672 = vld [vmem:[%s548 + $0xc] sm:$0xf]
        %v673 = vld [vmem:[%s566] sm:$0xf]
        %v674 = vunpack.c.l.bf16 %v673
        %vm675 = vcmask 64512
        %v677 = vsel %vm675, %v661, 0
        %v680 = vsel %vm675, %v665, 0
        %682 = vmatprep.subr.bf16.mxu0 0
        %683 = vmatpush1.bf16.xpose.msra.mxu0 0
        %684 = vmatprep.subr.bf16.mxu0 0
        %685 = vmatpush1.bf16.xpose.msra.mxu0 0
        %686 = vmatprep.subr.bf16.mxu0 0
        %687 = vmatpush1.bf16.xpose.msra.mxu0 0
        %688 = vmatprep.subr.bf16.mxu0 0
        %689 = vmatpush1.bf16.xpose.msra.mxu0 0
        %690 = vmatprep.subr.bf16.mxu0 0
        %691 = vmatpush1.bf16.xpose.msra.mxu0 0
        %692 = vmatprep.subr.bf16.mxu0 0
        %693 = vmatpush1.bf16.xpose.msra.mxu0 0
        %694 = vmatprep.subr.bf16.mxu0 0
        %695 = vmatpush1.bf16.xpose.msra.mxu0 0
        %696 = vmatprep.subr.bf16.mxu0 0
        %697 = vmatpush1.bf16.xpose.msra.mxu0 %v680
        %698 = vmatprep.subr.bf16.mxu0 0
        %699 = vmatpush2.bf16.xpose.msra.mxu0 0
        %700 = vmatprep.subr.bf16.mxu0 0
        %701 = vmatpush2.bf16.xpose.msra.mxu0 0
        %702 = vmatprep.subr.bf16.mxu0 0
        %703 = vmatpush2.bf16.xpose.msra.mxu0 0
        %704 = vmatprep.subr.bf16.mxu0 0
        %705 = vmatpush2.bf16.xpose.msra.mxu0 0
        %706 = vmatprep.subr.bf16.mxu0 0
        %707 = vmatpush2.bf16.xpose.msra.mxu0 0
        %708 = vmatprep.subr.bf16.mxu0 0
        %709 = vmatpush2.bf16.xpose.msra.mxu0 0
        %710 = vmatprep.subr.bf16.mxu0 0
        %711 = vmatpush2.bf16.xpose.msra.mxu0 0
        %712 = vmatprep.subr.bf16.mxu0 0
        %713 = vmatpush2.bf16.xpose.msra.mxu0 0
        %714 = vmatprep.mubr.bf16.mxu0 0
        %715 = vmatmul.mubr.bf16.gmra.mxu0 %v677
        %v716 = vpop.f32.mrf.mxu0
        %v717 = vadd.f32 %v674, %v716
        %v718 = vpop.f32.mrf.mxu0
        %v719 = vpop.f32.mrf.mxu0
        %v720 = vpop.f32.mrf.mxu0
        %721 = vdwg.mxu0
        %v723 = vsel %vm675, %v662, 0
        %v726 = vsel %vm675, %v666, 0
        %728 = vmatprep.subr.bf16.mxu0 0
        %729 = vmatpush1.bf16.xpose.msra.mxu0 0
        %730 = vmatprep.subr.bf16.mxu0 0
        %731 = vmatpush1.bf16.xpose.msra.mxu0 0
        %732 = vmatprep.subr.bf16.mxu0 0
        %733 = vmatpush1.bf16.xpose.msra.mxu0 0
        %734 = vmatprep.subr.bf16.mxu0 0
        %735 = vmatpush1.bf16.xpose.msra.mxu0 0
        %736 = vmatprep.subr.bf16.mxu0 0
        %737 = vmatpush1.bf16.xpose.msra.mxu0 0
        %738 = vmatprep.subr.bf16.mxu0 0
        %739 = vmatpush1.bf16.xpose.msra.mxu0 0
        %740 = vmatprep.subr.bf16.mxu0 0
        %741 = vmatpush1.bf16.xpose.msra.mxu0 0
        %742 = vmatprep.subr.bf16.mxu0 0
        %743 = vmatpush1.bf16.xpose.msra.mxu0 %v726
        %744 = vmatprep.subr.bf16.mxu0 0
        %745 = vmatpush2.bf16.xpose.msra.mxu0 0
        %746 = vmatprep.subr.bf16.mxu0 0
        %747 = vmatpush2.bf16.xpose.msra.mxu0 0
        %748 = vmatprep.subr.bf16.mxu0 0
        %749 = vmatpush2.bf16.xpose.msra.mxu0 0
        %750 = vmatprep.subr.bf16.mxu0 0
        %751 = vmatpush2.bf16.xpose.msra.mxu0 0
        %752 = vmatprep.subr.bf16.mxu0 0
        %753 = vmatpush2.bf16.xpose.msra.mxu0 0
        %754 = vmatprep.subr.bf16.mxu0 0
        %755 = vmatpush2.bf16.xpose.msra.mxu0 0
        %756 = vmatprep.subr.bf16.mxu0 0
        %757 = vmatpush2.bf16.xpose.msra.mxu0 0
        %758 = vmatprep.subr.bf16.mxu0 0
        %759 = vmatpush2.bf16.xpose.msra.mxu0 0
        %760 = vmatprep.mubr.bf16.mxu0 0
        %761 = vmatmul.mubr.bf16.gmra.mxu0 %v723
        %v762 = vpop.f32.mrf.mxu0
        %v763 = vadd.f32 %v674, %v762
        %v764 = vpop.f32.mrf.mxu0
        %v765 = vpop.f32.mrf.mxu0
        %v766 = vpop.f32.mrf.mxu0
        %767 = vdwg.mxu0
        %v769 = vsel %vm675, %v663, 0
        %v772 = vsel %vm675, %v667, 0
        %774 = vmatprep.subr.bf16.mxu0 0
        %775 = vmatpush1.bf16.xpose.msra.mxu0 0
        %776 = vmatprep.subr.bf16.mxu0 0
        %777 = vmatpush1.bf16.xpose.msra.mxu0 0
        %778 = vmatprep.subr.bf16.mxu0 0
        %779 = vmatpush1.bf16.xpose.msra.mxu0 0
        %780 = vmatprep.subr.bf16.mxu0 0
        %781 = vmatpush1.bf16.xpose.msra.mxu0 0
        %782 = vmatprep.subr.bf16.mxu0 0
        %783 = vmatpush1.bf16.xpose.msra.mxu0 0
        %784 = vmatprep.subr.bf16.mxu0 0
        %785 = vmatpush1.bf16.xpose.msra.mxu0 0
        %786 = vmatprep.subr.bf16.mxu0 0
        %787 = vmatpush1.bf16.xpose.msra.mxu0 0
        %788 = vmatprep.subr.bf16.mxu0 0
        %789 = vmatpush1.bf16.xpose.msra.mxu0 %v772
        %790 = vmatprep.subr.bf16.mxu0 0
        %791 = vmatpush2.bf16.xpose.msra.mxu0 0
        %792 = vmatprep.subr.bf16.mxu0 0
        %793 = vmatpush2.bf16.xpose.msra.mxu0 0
        %794 = vmatprep.subr.bf16.mxu0 0
        %795 = vmatpush2.bf16.xpose.msra.mxu0 0
        %796 = vmatprep.subr.bf16.mxu0 0
        %797 = vmatpush2.bf16.xpose.msra.mxu0 0
        %798 = vmatprep.subr.bf16.mxu0 0
        %799 = vmatpush2.bf16.xpose.msra.mxu0 0
        %800 = vmatprep.subr.bf16.mxu0 0
        %801 = vmatpush2.bf16.xpose.msra.mxu0 0
        %802 = vmatprep.subr.bf16.mxu0 0
        %803 = vmatpush2.bf16.xpose.msra.mxu0 0
        %804 = vmatprep.subr.bf16.mxu0 0
        %805 = vmatpush2.bf16.xpose.msra.mxu0 0
        %806 = vmatprep.mubr.bf16.mxu0 0
        %807 = vmatmul.mubr.bf16.gmra.mxu0 %v769
        %v808 = vpop.f32.mrf.mxu0
        %v809 = vadd.f32 %v674, %v808
        %v810 = vpop.f32.mrf.mxu0
        %v811 = vpop.f32.mrf.mxu0
        %v812 = vpop.f32.mrf.mxu0
        %813 = vdwg.mxu0
        %v815 = vsel %vm675, %v664, 0
        %v818 = vsel %vm675, %v668, 0
        %820 = vmatprep.subr.bf16.mxu0 0
        %821 = vmatpush1.bf16.xpose.msra.mxu0 0
        %822 = vmatprep.subr.bf16.mxu0 0
        %823 = vmatpush1.bf16.xpose.msra.mxu0 0
        %824 = vmatprep.subr.bf16.mxu0 0
        %825 = vmatpush1.bf16.xpose.msra.mxu0 0
        %826 = vmatprep.subr.bf16.mxu0 0
        %827 = vmatpush1.bf16.xpose.msra.mxu0 0
        %828 = vmatprep.subr.bf16.mxu0 0
        %829 = vmatpush1.bf16.xpose.msra.mxu0 0
        %830 = vmatprep.subr.bf16.mxu0 0
        %831 = vmatpush1.bf16.xpose.msra.mxu0 0
        %832 = vmatprep.subr.bf16.mxu0 0
        %833 = vmatpush1.bf16.xpose.msra.mxu0 0
        %834 = vmatprep.subr.bf16.mxu0 0
        %835 = vmatpush1.bf16.xpose.msra.mxu0 %v818
        %836 = vmatprep.subr.bf16.mxu0 0
        %837 = vmatpush2.bf16.xpose.msra.mxu0 0
        %838 = vmatprep.subr.bf16.mxu0 0
        %839 = vmatpush2.bf16.xpose.msra.mxu0 0
        %840 = vmatprep.subr.bf16.mxu0 0
        %841 = vmatpush2.bf16.xpose.msra.mxu0 0
        %842 = vmatprep.subr.bf16.mxu0 0
        %843 = vmatpush2.bf16.xpose.msra.mxu0 0
        %844 = vmatprep.subr.bf16.mxu0 0
        %845 = vmatpush2.bf16.xpose.msra.mxu0 0
        %846 = vmatprep.subr.bf16.mxu0 0
        %847 = vmatpush2.bf16.xpose.msra.mxu0 0
        %848 = vmatprep.subr.bf16.mxu0 0
        %849 = vmatpush2.bf16.xpose.msra.mxu0 0
        %850 = vmatprep.subr.bf16.mxu0 0
        %851 = vmatpush2.bf16.xpose.msra.mxu0 0
        %852 = vmatprep.mubr.bf16.mxu0 0
        %853 = vmatmul.mubr.bf16.gmra.mxu0 %v815
        %v854 = vpop.f32.mrf.mxu0
        %v855 = vadd.f32 %v674, %v854
        %v856 = vpop.f32.mrf.mxu0
        %v857 = vpop.f32.mrf.mxu0
        %v858 = vpop.f32.mrf.mxu0
        %859 = vdwg.mxu0
        %v860 = vsel %vm675, %v717, -inf
        %861 = vmax.xlane.f32.xlu0 %v860
        %v862 = vpop.xlane.xlu0 %861
        %v863 = vsel %vm675, %v763, -inf
        %864 = vmax.xlane.f32.xlu0 %v863
        %v865 = vpop.xlane.xlu0 %864
        %v866 = vsel %vm675, %v809, -inf
        %867 = vmax.xlane.f32.xlu0 %v866
        %v868 = vpop.xlane.xlu0 %867
        %v869 = vsel %vm675, %v855, -inf
        %870 = vmax.xlane.f32.xlu0 %v869
        %v871 = vpop.xlane.xlu0 %870
        %v872 = vsub.f32 %v717, %v862
        %v873 = vsub.f32 %v763, %v865
        %v874 = vsub.f32 %v809, %v868
        %v875 = vsub.f32 %v855, %v871
        %v876 = vmul.f32 %v872, 1.442695
        %v877 = vpow.pop %v876
        %v878 = vmul.f32 %v873, 1.442695
        %v879 = vpow.pop %v878
        %v880 = vmul.f32 %v874, 1.442695
        %v881 = vpow.pop %v880
        %v882 = vmul.f32 %v875, 1.442695
        %v883 = vpow.pop %v882
        %v884 = vsel %vm675, %v877, 0.0
        %885 = vadd.xlane.f32.xlu0 %v884
        %v886 = vpop.xlane.xlu0 %885
        %v887 = vsel %vm675, %v879, 0.0
        %888 = vadd.xlane.f32.xlu0 %v887
        %v889 = vpop.xlane.xlu0 %888
        %v890 = vsel %vm675, %v881, 0.0
        %891 = vadd.xlane.f32.xlu0 %v890
        %v892 = vpop.xlane.xlu0 %891
        %v893 = vsel %vm675, %v883, 0.0
        %894 = vadd.xlane.f32.xlu0 %v893
        %v895 = vpop.xlane.xlu0 %894
        %v896 = vrcp.pop %v886
        %v897 = vrcp.pop %v889
        %v898 = vrcp.pop %v892
        %v899 = vrcp.pop %v895
        %v900 = vmul.f32 %v877, %v896
        %v901 = vmul.f32 %v879, %v897
        %v902 = vmul.f32 %v881, %v898
        %v903 = vmul.f32 %v883, %v899
        %v904 = vpack.c.bf16 %v900, %v900
        %v905 = vpack.c.bf16 %v901, %v901
        %v906 = vpack.c.bf16 %v902, %v902
        %v907 = vpack.c.bf16 %v903, %v903
        %v909 = vsel %vm675, %v904, 0
        %vm911 = vcmask 1043456
        %v913 = vsel %vm911, %v669, 0
        %915 = vmatprep.subr.bf16.mxu0 0
        %916 = vmatpush1.bf16.msra.mxu0 0
        %917 = vmatprep.subr.bf16.mxu0 0
        %918 = vmatpush1.bf16.msra.mxu0 0
        %919 = vmatprep.subr.bf16.mxu0 0
        %920 = vmatpush1.bf16.msra.mxu0 0
        %921 = vmatprep.subr.bf16.mxu0 0
        %922 = vmatpush1.bf16.msra.mxu0 0
        %923 = vmatprep.subr.bf16.mxu0 0
        %924 = vmatpush1.bf16.msra.mxu0 0
        %925 = vmatprep.subr.bf16.mxu0 0
        %926 = vmatpush1.bf16.msra.mxu0 0
        %927 = vmatprep.subr.bf16.mxu0 0
        %928 = vmatpush1.bf16.msra.mxu0 0
        %929 = vmatprep.subr.bf16.mxu0 0
        %930 = vmatpush1.bf16.msra.mxu0 %v913
        %931 = vmatprep.subr.bf16.mxu0 0
        %932 = vmatpush2.bf16.msra.mxu0 0
        %933 = vmatprep.subr.bf16.mxu0 0
        %934 = vmatpush2.bf16.msra.mxu0 0
        %935 = vmatprep.subr.bf16.mxu0 0
        %936 = vmatpush2.bf16.msra.mxu0 0
        %937 = vmatprep.subr.bf16.mxu0 0
        %938 = vmatpush2.bf16.msra.mxu0 0
        %939 = vmatprep.subr.bf16.mxu0 0
        %940 = vmatpush2.bf16.msra.mxu0 0
        %941 = vmatprep.subr.bf16.mxu0 0
        %942 = vmatpush2.bf16.msra.mxu0 0
        %943 = vmatprep.subr.bf16.mxu0 0
        %944 = vmatpush2.bf16.msra.mxu0 0
        %945 = vmatprep.subr.bf16.mxu0 0
        %946 = vmatpush2.bf16.msra.mxu0 0
        %947 = vmatprep.mubr.bf16.mxu0 0
        %948 = vmatmul.mubr.bf16.gmra.mxu0 %v909
        %v949 = vpop.f32.mrf.mxu0
        %v950 = vadd.f32 0.0, %v949
        %v951 = vpop.f32.mrf.mxu0
        %v952 = vpop.f32.mrf.mxu0
        %v953 = vpop.f32.mrf.mxu0
        %954 = vdwg.mxu0
        %v956 = vsel %vm675, %v905, 0
        %v959 = vsel %vm911, %v670, 0
        %961 = vmatprep.subr.bf16.mxu0 0
        %962 = vmatpush1.bf16.msra.mxu0 0
        %963 = vmatprep.subr.bf16.mxu0 0
        %964 = vmatpush1.bf16.msra.mxu0 0
        %965 = vmatprep.subr.bf16.mxu0 0
        %966 = vmatpush1.bf16.msra.mxu0 0
        %967 = vmatprep.subr.bf16.mxu0 0
        %968 = vmatpush1.bf16.msra.mxu0 0
        %969 = vmatprep.subr.bf16.mxu0 0
        %970 = vmatpush1.bf16.msra.mxu0 0
        %971 = vmatprep.subr.bf16.mxu0 0
        %972 = vmatpush1.bf16.msra.mxu0 0
        %973 = vmatprep.subr.bf16.mxu0 0
        %974 = vmatpush1.bf16.msra.mxu0 0
        %975 = vmatprep.subr.bf16.mxu0 0
        %976 = vmatpush1.bf16.msra.mxu0 %v959
        %977 = vmatprep.subr.bf16.mxu0 0
        %978 = vmatpush2.bf16.msra.mxu0 0
        %979 = vmatprep.subr.bf16.mxu0 0
        %980 = vmatpush2.bf16.msra.mxu0 0
        %981 = vmatprep.subr.bf16.mxu0 0
        %982 = vmatpush2.bf16.msra.mxu0 0
        %983 = vmatprep.subr.bf16.mxu0 0
        %984 = vmatpush2.bf16.msra.mxu0 0
        %985 = vmatprep.subr.bf16.mxu0 0
        %986 = vmatpush2.bf16.msra.mxu0 0
        %987 = vmatprep.subr.bf16.mxu0 0
        %988 = vmatpush2.bf16.msra.mxu0 0
        %989 = vmatprep.subr.bf16.mxu0 0
        %990 = vmatpush2.bf16.msra.mxu0 0
        %991 = vmatprep.subr.bf16.mxu0 0
        %992 = vmatpush2.bf16.msra.mxu0 0
        %993 = vmatprep.mubr.bf16.mxu0 0
        %994 = vmatmul.mubr.bf16.gmra.mxu0 %v956
        %v995 = vpop.f32.mrf.mxu0
        %v996 = vadd.f32 0.0, %v995
        %v997 = vpop.f32.mrf.mxu0
        %v998 = vpop.f32.mrf.mxu0
        %v999 = vpop.f32.mrf.mxu0
        %1000 = vdwg.mxu0
        %v1002 = vsel %vm675, %v906, 0
        %v1005 = vsel %vm911, %v671, 0
        %1007 = vmatprep.subr.bf16.mxu0 0
        %1008 = vmatpush1.bf16.msra.mxu0 0
        %1009 = vmatprep.subr.bf16.mxu0 0
        %1010 = vmatpush1.bf16.msra.mxu0 0
        %1011 = vmatprep.subr.bf16.mxu0 0
        %1012 = vmatpush1.bf16.msra.mxu0 0
        %1013 = vmatprep.subr.bf16.mxu0 0
        %1014 = vmatpush1.bf16.msra.mxu0 0
        %1015 = vmatprep.subr.bf16.mxu0 0
        %1016 = vmatpush1.bf16.msra.mxu0 0
        %1017 = vmatprep.subr.bf16.mxu0 0
        %1018 = vmatpush1.bf16.msra.mxu0 0
        %1019 = vmatprep.subr.bf16.mxu0 0
        %1020 = vmatpush1.bf16.msra.mxu0 0
        %1021 = vmatprep.subr.bf16.mxu0 0
        %1022 = vmatpush1.bf16.msra.mxu0 %v1005
        %1023 = vmatprep.subr.bf16.mxu0 0
        %1024 = vmatpush2.bf16.msra.mxu0 0
        %1025 = vmatprep.subr.bf16.mxu0 0
        %1026 = vmatpush2.bf16.msra.mxu0 0
        %1027 = vmatprep.subr.bf16.mxu0 0
        %1028 = vmatpush2.bf16.msra.mxu0 0
        %1029 = vmatprep.subr.bf16.mxu0 0
        %1030 = vmatpush2.bf16.msra.mxu0 0
        %1031 = vmatprep.subr.bf16.mxu0 0
        %1032 = vmatpush2.bf16.msra.mxu0 0
        %1033 = vmatprep.subr.bf16.mxu0 0
        %1034 = vmatpush2.bf16.msra.mxu0 0
        %1035 = vmatprep.subr.bf16.mxu0 0
        %1036 = vmatpush2.bf16.msra.mxu0 0
        %1037 = vmatprep.subr.bf16.mxu0 0
        %1038 = vmatpush2.bf16.msra.mxu0 0
        %1039 = vmatprep.mubr.bf16.mxu0 0
        %1040 = vmatmul.mubr.bf16.gmra.mxu0 %v1002
        %v1041 = vpop.f32.mrf.mxu0
        %v1042 = vadd.f32 0.0, %v1041
        %v1043 = vpop.f32.mrf.mxu0
        %v1044 = vpop.f32.mrf.mxu0
        %v1045 = vpop.f32.mrf.mxu0
        %1046 = vdwg.mxu0
        %v1048 = vsel %vm675, %v907, 0
        %v1051 = vsel %vm911, %v672, 0
        %1053 = vmatprep.subr.bf16.mxu0 0
        %1054 = vmatpush1.bf16.msra.mxu0 0
        %1055 = vmatprep.subr.bf16.mxu0 0
        %1056 = vmatpush1.bf16.msra.mxu0 0
        %1057 = vmatprep.subr.bf16.mxu0 0
        %1058 = vmatpush1.bf16.msra.mxu0 0
        %1059 = vmatprep.subr.bf16.mxu0 0
        %1060 = vmatpush1.bf16.msra.mxu0 0
        %1061 = vmatprep.subr.bf16.mxu0 0
        %1062 = vmatpush1.bf16.msra.mxu0 0
        %1063 = vmatprep.subr.bf16.mxu0 0
        %1064 = vmatpush1.bf16.msra.mxu0 0
        %1065 = vmatprep.subr.bf16.mxu0 0
        %1066 = vmatpush1.bf16.msra.mxu0 0
        %1067 = vmatprep.subr.bf16.mxu0 0
        %1068 = vmatpush1.bf16.msra.mxu0 %v1051
        %1069 = vmatprep.subr.bf16.mxu0 0
        %1070 = vmatpush2.bf16.msra.mxu0 0
        %1071 = vmatprep.subr.bf16.mxu0 0
        %1072 = vmatpush2.bf16.msra.mxu0 0
        %1073 = vmatprep.subr.bf16.mxu0 0
        %1074 = vmatpush2.bf16.msra.mxu0 0
        %1075 = vmatprep.subr.bf16.mxu0 0
        %1076 = vmatpush2.bf16.msra.mxu0 0
        %1077 = vmatprep.subr.bf16.mxu0 0
        %1078 = vmatpush2.bf16.msra.mxu0 0
        %1079 = vmatprep.subr.bf16.mxu0 0
        %1080 = vmatpush2.bf16.msra.mxu0 0
        %1081 = vmatprep.subr.bf16.mxu0 0
        %1082 = vmatpush2.bf16.msra.mxu0 0
        %1083 = vmatprep.subr.bf16.mxu0 0
        %1084 = vmatpush2.bf16.msra.mxu0 0
        %1085 = vmatprep.mubr.bf16.mxu0 0
        %1086 = vmatmul.mubr.bf16.gmra.mxu0 %v1048
        %v1087 = vpop.f32.mrf.mxu0
        %v1088 = vadd.f32 0.0, %v1087
        %v1089 = vpop.f32.mrf.mxu0
        %v1090 = vpop.f32.mrf.mxu0
        %v1091 = vpop.f32.mrf.mxu0
        %1092 = vdwg.mxu0
        %v1093 = vpack.c.bf16 %v950, %v950
        %v1094 = vpack.c.bf16 %v996, %v996
        %v1095 = vpack.c.bf16 %v1042, %v1042
        %v1096 = vpack.c.bf16 %v1088, %v1088
        %v1097 = vld [vmem:[%s5] sm:$0xf]
        %v1098 = vld [vmem:[%s5 + $0x4] sm:$0xf]
        %v1099 = vld [vmem:[%s5 + $0x8] sm:$0xf]
        %v1100 = vld [vmem:[%s5 + $0xc] sm:$0xf]
        %v1102 = vsel %vm675, %v1094, 0
        %v1105 = vsel %vm911, %v1098, 0
        %1107 = vmatprep.subr.bf16.mxu0 0
        %1108 = vmatpush1.bf16.msra.mxu0 0
        %1109 = vmatprep.subr.bf16.mxu0 0
        %1110 = vmatpush1.bf16.msra.mxu0 0
        %1111 = vmatprep.subr.bf16.mxu0 0
        %1112 = vmatpush1.bf16.msra.mxu0 0
        %1113 = vmatprep.subr.bf16.mxu0 0
        %1114 = vmatpush1.bf16.msra.mxu0 0
        %1115 = vmatprep.subr.bf16.mxu0 0
        %1116 = vmatpush1.bf16.msra.mxu0 0
        %1117 = vmatprep.subr.bf16.mxu0 0
        %1118 = vmatpush1.bf16.msra.mxu0 0
        %1119 = vmatprep.subr.bf16.mxu0 0
        %1120 = vmatpush1.bf16.msra.mxu0 0
        %1121 = vmatprep.subr.bf16.mxu0 0
        %1122 = vmatpush1.bf16.msra.mxu0 %v1105
        %1123 = vmatprep.subr.bf16.mxu0 0
        %1124 = vmatpush2.bf16.msra.mxu0 0
        %1125 = vmatprep.subr.bf16.mxu0 0
        %1126 = vmatpush2.bf16.msra.mxu0 0
        %1127 = vmatprep.subr.bf16.mxu0 0
        %1128 = vmatpush2.bf16.msra.mxu0 0
        %1129 = vmatprep.subr.bf16.mxu0 0
        %1130 = vmatpush2.bf16.msra.mxu0 0
        %1131 = vmatprep.subr.bf16.mxu0 0
        %1132 = vmatpush2.bf16.msra.mxu0 0
        %1133 = vmatprep.subr.bf16.mxu0 0
        %1134 = vmatpush2.bf16.msra.mxu0 0
        %1135 = vmatprep.subr.bf16.mxu0 0
        %1136 = vmatpush2.bf16.msra.mxu0 0
        %1137 = vmatprep.subr.bf16.mxu0 0
        %1138 = vmatpush2.bf16.msra.mxu0 0
        %1139 = vmatprep.mubr.bf16.mxu0 0
        %1140 = vmatmul.mubr.bf16.gmra.mxu0 %v1102
        %v1141 = vpop.f32.mrf.mxu0
        %v1142 = vadd.f32 0.0, %v1141
        %v1143 = vpop.f32.mrf.mxu0
        %v1144 = vpop.f32.mrf.mxu0
        %v1145 = vpop.f32.mrf.mxu0
        %1146 = vdwg.mxu0
        %v1148 = vsel %vm675, %v1093, 0
        %v1151 = vsel %vm911, %v1097, 0
        %1153 = vmatprep.subr.bf16.mxu0 0
        %1154 = vmatpush1.bf16.msra.mxu0 0
        %1155 = vmatprep.subr.bf16.mxu0 0
        %1156 = vmatpush1.bf16.msra.mxu0 0
        %1157 = vmatprep.subr.bf16.mxu0 0
        %1158 = vmatpush1.bf16.msra.mxu0 0
        %1159 = vmatprep.subr.bf16.mxu0 0
        %1160 = vmatpush1.bf16.msra.mxu0 0
        %1161 = vmatprep.subr.bf16.mxu0 0
        %1162 = vmatpush1.bf16.msra.mxu0 0
        %1163 = vmatprep.subr.bf16.mxu0 0
        %1164 = vmatpush1.bf16.msra.mxu0 0
        %1165 = vmatprep.subr.bf16.mxu0 0
        %1166 = vmatpush1.bf16.msra.mxu0 0
        %1167 = vmatprep.subr.bf16.mxu0 0
        %1168 = vmatpush1.bf16.msra.mxu0 %v1151
        %1169 = vmatprep.subr.bf16.mxu0 0
        %1170 = vmatpush2.bf16.msra.mxu0 0
        %1171 = vmatprep.subr.bf16.mxu0 0
        %1172 = vmatpush2.bf16.msra.mxu0 0
        %1173 = vmatprep.subr.bf16.mxu0 0
        %1174 = vmatpush2.bf16.msra.mxu0 0
        %1175 = vmatprep.subr.bf16.mxu0 0
        %1176 = vmatpush2.bf16.msra.mxu0 0
        %1177 = vmatprep.subr.bf16.mxu0 0
        %1178 = vmatpush2.bf16.msra.mxu0 0
        %1179 = vmatprep.subr.bf16.mxu0 0
        %1180 = vmatpush2.bf16.msra.mxu0 0
        %1181 = vmatprep.subr.bf16.mxu0 0
        %1182 = vmatpush2.bf16.msra.mxu0 0
        %1183 = vmatprep.subr.bf16.mxu0 0
        %1184 = vmatpush2.bf16.msra.mxu0 0
        %1185 = vmatprep.mubr.bf16.mxu0 0
        %1186 = vmatmul.mubr.bf16.gmra.mxu0 %v1148
        %v1187 = vpop.f32.mrf.mxu0
        %v1188 = vadd.f32 %v1142, %v1187
        %v1189 = vpop.f32.mrf.mxu0
        %v1190 = vpop.f32.mrf.mxu0
        %v1191 = vpop.f32.mrf.mxu0
        %1192 = vdwg.mxu0
        %v1194 = vsel %vm675, %v1095, 0
        %v1197 = vsel %vm911, %v1099, 0
        %1199 = vmatprep.subr.bf16.mxu0 0
        %1200 = vmatpush1.bf16.msra.mxu0 0
        %1201 = vmatprep.subr.bf16.mxu0 0
        %1202 = vmatpush1.bf16.msra.mxu0 0
        %1203 = vmatprep.subr.bf16.mxu0 0
        %1204 = vmatpush1.bf16.msra.mxu0 0
        %1205 = vmatprep.subr.bf16.mxu0 0
        %1206 = vmatpush1.bf16.msra.mxu0 0
        %1207 = vmatprep.subr.bf16.mxu0 0
        %1208 = vmatpush1.bf16.msra.mxu0 0
        %1209 = vmatprep.subr.bf16.mxu0 0
        %1210 = vmatpush1.bf16.msra.mxu0 0
        %1211 = vmatprep.subr.bf16.mxu0 0
        %1212 = vmatpush1.bf16.msra.mxu0 0
        %1213 = vmatprep.subr.bf16.mxu0 0
        %1214 = vmatpush1.bf16.msra.mxu0 %v1197
        %1215 = vmatprep.subr.bf16.mxu0 0
        %1216 = vmatpush2.bf16.msra.mxu0 0
        %1217 = vmatprep.subr.bf16.mxu0 0
        %1218 = vmatpush2.bf16.msra.mxu0 0
        %1219 = vmatprep.subr.bf16.mxu0 0
        %1220 = vmatpush2.bf16.msra.mxu0 0
        %1221 = vmatprep.subr.bf16.mxu0 0
        %1222 = vmatpush2.bf16.msra.mxu0 0
        %1223 = vmatprep.subr.bf16.mxu0 0
        %1224 = vmatpush2.bf16.msra.mxu0 0
        %1225 = vmatprep.subr.bf16.mxu0 0
        %1226 = vmatpush2.bf16.msra.mxu0 0
        %1227 = vmatprep.subr.bf16.mxu0 0
        %1228 = vmatpush2.bf16.msra.mxu0 0
        %1229 = vmatprep.subr.bf16.mxu0 0
        %1230 = vmatpush2.bf16.msra.mxu0 0
        %1231 = vmatprep.mubr.bf16.mxu0 0
        %1232 = vmatmul.mubr.bf16.gmra.mxu0 %v1194
        %v1233 = vpop.f32.mrf.mxu0
        %v1234 = vadd.f32 0.0, %v1233
        %v1235 = vpop.f32.mrf.mxu0
        %v1236 = vpop.f32.mrf.mxu0
        %v1237 = vpop.f32.mrf.mxu0
        %1238 = vdwg.mxu0
        %v1239 = vadd.f32 %v1188, %v1234
        %v1241 = vsel %vm675, %v1096, 0
        %v1244 = vsel %vm911, %v1100, 0
        %1246 = vmatprep.subr.bf16.mxu0 0
        %1247 = vmatpush1.bf16.msra.mxu0 0
        %1248 = vmatprep.subr.bf16.mxu0 0
        %1249 = vmatpush1.bf16.msra.mxu0 0
        %1250 = vmatprep.subr.bf16.mxu0 0
        %1251 = vmatpush1.bf16.msra.mxu0 0
        %1252 = vmatprep.subr.bf16.mxu0 0
        %1253 = vmatpush1.bf16.msra.mxu0 0
        %1254 = vmatprep.subr.bf16.mxu0 0
        %1255 = vmatpush1.bf16.msra.mxu0 0
        %1256 = vmatprep.subr.bf16.mxu0 0
        %1257 = vmatpush1.bf16.msra.mxu0 0
        %1258 = vmatprep.subr.bf16.mxu0 0
        %1259 = vmatpush1.bf16.msra.mxu0 0
        %1260 = vmatprep.subr.bf16.mxu0 0
        %1261 = vmatpush1.bf16.msra.mxu0 %v1244
        %1262 = vmatprep.subr.bf16.mxu0 0
        %1263 = vmatpush2.bf16.msra.mxu0 0
        %1264 = vmatprep.subr.bf16.mxu0 0
        %1265 = vmatpush2.bf16.msra.mxu0 0
        %1266 = vmatprep.subr.bf16.mxu0 0
        %1267 = vmatpush2.bf16.msra.mxu0 0
        %1268 = vmatprep.subr.bf16.mxu0 0
        %1269 = vmatpush2.bf16.msra.mxu0 0
        %1270 = vmatprep.subr.bf16.mxu0 0
        %1271 = vmatpush2.bf16.msra.mxu0 0
        %1272 = vmatprep.subr.bf16.mxu0 0
        %1273 = vmatpush2.bf16.msra.mxu0 0
        %1274 = vmatprep.subr.bf16.mxu0 0
        %1275 = vmatpush2.bf16.msra.mxu0 0
        %1276 = vmatprep.subr.bf16.mxu0 0
        %1277 = vmatpush2.bf16.msra.mxu0 0
        %1278 = vmatprep.mubr.bf16.mxu0 0
        %1279 = vmatmul.mubr.bf16.gmra.mxu0 %v1241
        %v1280 = vpop.f32.mrf.mxu0
        %v1281 = vadd.f32 0.0, %v1280
        %v1282 = vpop.f32.mrf.mxu0
        %v1283 = vpop.f32.mrf.mxu0
        %v1284 = vpop.f32.mrf.mxu0
        %1285 = vdwg.mxu0
        %v1286 = vadd.f32 %v1239, %v1281
        %v1287 = vld [vmem:[%s557] sm:$0xf]
        %v1288 = vunpack.c.l.bf16 %v1287
        %v1289 = vadd.f32 %v1286, %v1288
        %v1290 = vld [vmem:[%s6] sm:$0x1]
        %v1291 = vld [vmem:[%s7] sm:$0x1]
        %vm1292 = vcmask 261120
        %v1293 = vsel %vm1292, %v1289, 0.0
        %1294 = vadd.xlane.f32.xlu0 %v1293
        %v1295 = vpop.xlane.xlu0 %1294
        %v1296 = vrcp.pop 32.0
        %v1297 = vmul.f32 %v1295, %v1296
        %v1298 = vsub.f32 %v1289, %v1297
        %v1299 = vmul.f32 %v1298, %v1298
        %v1300 = vsel %vm1292, %v1299, 0.0
        %1301 = vadd.xlane.f32.xlu0 %v1300
        %v1302 = vpop.xlane.xlu0 %1301
        %v1303 = vmul.f32 %v1302, %v1296
        %v1304 = vadd.f32 %v1303, 1e-05
        %v1305 = vrsqrt.pop %v1304
        %v1306 = vmul.f32 %v1298, %v1305
        %v1308 = vlaneseq
        %v1309 = vshrl.u32 %v1308, 7
        %v1310 = vsub.s32 0, %v1309
        %v1311 = vrot.slane %v1290, %v1310
        %v1313 = vmul.f32 %v1306, %v1311
        %v1315 = vlaneseq
        %v1316 = vshrl.u32 %v1315, 7
        %v1317 = vsub.s32 0, %v1316
        %v1318 = vrot.slane %v1291, %v1317
        %v1320 = vadd.f32 %v1313, %v1318
        %v1321 = vpack.c.bf16 %v1320, %v1320
        %v1322 = vld [vmem:[#allocation8] sm:$0xf]
        %v1323 = vld [vmem:[#allocation8 + $0x4] sm:$0xf]
        %v1324 = vld [vmem:[#allocation8 + $0x8] sm:$0xf]
        %v1325 = vld [vmem:[#allocation8 + $0xc] sm:$0xf]
        %v1326 = vld [vmem:[#allocation10] sm:$0x1]
        %v1328 = vlaneseq
        %v1329 = vshrl.u32 %v1328, 7
        %v1330 = vsub.s32 0, %v1329
        %v1331 = vrot.slane %v1326, %v1330
        %v1337 = vunpack.c.l.b16 %v1322
        %v1338 = vunpack.c.l.b16 %v1323
        %v1339 = vunpack.c.l.b16 %v1324
        %v1340 = vunpack.c.l.b16 %v1325
        %v1341 = vpack.c.b16 %v1338, %v1337
        %v1342 = vpack.c.b16 %v1340, %v1339
        %v1346 = vsel %vm1292, %v1321, 0
        %1348 = vmatprep.subr.bf16.mxu0 0
        %1349 = vmatpush1.bf16.msra.mxu0 0
        %1350 = vmatprep.subr.bf16.mxu0 0
        %1351 = vmatpush1.bf16.msra.mxu0 0
        %1352 = vmatprep.subr.bf16.mxu0 0
        %1353 = vmatpush1.bf16.msra.mxu0 0
        %1354 = vmatprep.subr.bf16.mxu0 0
        %1355 = vmatpush1.bf16.msra.mxu0 0
        %1356 = vmatprep.subr.bf16.mxu0 0
        %1357 = vmatpush1.bf16.msra.mxu0 0
        %1358 = vmatprep.subr.bf16.mxu0 0
        %1359 = vmatpush1.bf16.msra.mxu0 0
        %1360 = vmatprep.subr.bf16.mxu0 0
        %1361 = vmatpush1.bf16.msra.mxu0 %v1342
        %1362 = vmatprep.subr.bf16.mxu0 0
        %1363 = vmatpush1.bf16.msra.mxu0 %v1341
        %1364 = vmatprep.subr.bf16.mxu0 0
        %1365 = vmatpush2.bf16.msra.mxu0 0
        %1366 = vmatprep.subr.bf16.mxu0 0
        %1367 = vmatpush2.bf16.msra.mxu0 0
        %1368 = vmatprep.subr.bf16.mxu0 0
        %1369 = vmatpush2.bf16.msra.mxu0 0
        %1370 = vmatprep.subr.bf16.mxu0 0
        %1371 = vmatpush2.bf16.msra.mxu0 0
        %1372 = vmatprep.subr.bf16.mxu0 0
        %1373 = vmatpush2.bf16.msra.mxu0 0
        %1374 = vmatprep.subr.bf16.mxu0 0
        %1375 = vmatpush2.bf16.msra.mxu0 0
        %1376 = vmatprep.subr.bf16.mxu0 0
        %1377 = vmatpush2.bf16.msra.mxu0 0
        %1378 = vmatprep.subr.bf16.mxu0 0
        %1379 = vmatpush2.bf16.msra.mxu0 0
        %1380 = vmatprep.mubr.bf16.mxu0 0
        %1381 = vmatmul.mubr.bf16.gmra.mxu0 %v1346
        %v1382 = vpop.f32.mrf.mxu0
        %v1383 = vadd.f32 %v1331, %v1382
        %v1384 = vpop.f32.mrf.mxu0
        %v1385 = vpop.f32.mrf.mxu0
        %v1386 = vpop.f32.mrf.mxu0
        %1387 = vdwg.mxu0
        %v1388 = vmax.f32 %v1383, 0.0
        %v1389 = vpack.c.bf16 %v1388, %v1388
        %v1390 = vld [vmem:[%s10] sm:$0xf]
        %v1391 = vld [vmem:[%s10 + $0x4] sm:$0xf]
        %v1392 = vld [vmem:[%s10 + $0x8] sm:$0xf]
        %v1393 = vld [vmem:[%s10 + $0xc] sm:$0xf]
        %v1394 = vld [vmem:[%s10 + $0x10] sm:$0xf]
        %v1395 = vld [vmem:[%s10 + $0x14] sm:$0xf]
        %v1396 = vld [vmem:[%s10 + $0x18] sm:$0xf]
        %v1397 = vld [vmem:[%s10 + $0x1c] sm:$0xf]
        %v1398 = vld [vmem:[%s10 + $0x20] sm:$0xf]
        %v1399 = vld [vmem:[%s10 + $0x24] sm:$0xf]
        %v1400 = vld [vmem:[%s10 + $0x28] sm:$0xf]
        %v1401 = vld [vmem:[%s10 + $0x2c] sm:$0xf]
        %v1402 = vld [vmem:[%s10 + $0x30] sm:$0xf]
        %v1403 = vld [vmem:[%s10 + $0x34] sm:$0xf]
        %v1404 = vld [vmem:[%s10 + $0x38] sm:$0xf]
        %v1405 = vld [vmem:[%s10 + $0x3c] sm:$0xf]
        %v1406 = vld [vmem:[%s11] sm:$0x1]
        %v1408 = vlaneseq
        %v1409 = vshrl.u32 %v1408, 7
        %v1410 = vsub.s32 0, %v1409
        %v1411 = vrot.slane %v1406, %v1410
        %v1429 = vunpack.c.l.b16 %v1390
        %v1430 = vunpack.c.l.b16 %v1391
        %v1431 = vunpack.c.l.b16 %v1392
        %v1432 = vunpack.c.l.b16 %v1393
        %v1433 = vunpack.c.l.b16 %v1394
        %v1434 = vunpack.c.l.b16 %v1395
        %v1435 = vunpack.c.l.b16 %v1396
        %v1436 = vunpack.c.l.b16 %v1397
        %v1437 = vunpack.c.l.b16 %v1398
        %v1438 = vunpack.c.l.b16 %v1399
        %v1439 = vunpack.c.l.b16 %v1400
        %v1440 = vunpack.c.l.b16 %v1401
        %v1441 = vunpack.c.l.b16 %v1402
        %v1442 = vunpack.c.l.b16 %v1403
        %v1443 = vunpack.c.l.b16 %v1404
        %v1444 = vunpack.c.l.b16 %v1405
        %v1445 = vpack.c.b16 %v1430, %v1429
        %v1446 = vpack.c.b16 %v1432, %v1431
        %v1447 = vpack.c.b16 %v1434, %v1433
        %v1448 = vpack.c.b16 %v1436, %v1435
        %v1449 = vpack.c.b16 %v1438, %v1437
        %v1450 = vpack.c.b16 %v1440, %v1439
        %v1451 = vpack.c.b16 %v1442, %v1441
        %v1452 = vpack.c.b16 %v1444, %v1443
        %1461 = vmatprep.subr.bf16.mxu0 0
        %1462 = vmatpush1.bf16.msra.mxu0 %v1452
        %1463 = vmatprep.subr.bf16.mxu0 0
        %1464 = vmatpush1.bf16.msra.mxu0 %v1451
        %1465 = vmatprep.subr.bf16.mxu0 0
        %1466 = vmatpush1.bf16.msra.mxu0 %v1450
        %1467 = vmatprep.subr.bf16.mxu0 0
        %1468 = vmatpush1.bf16.msra.mxu0 %v1449
        %1469 = vmatprep.subr.bf16.mxu0 0
        %1470 = vmatpush1.bf16.msra.mxu0 %v1448
        %1471 = vmatprep.subr.bf16.mxu0 0
        %1472 = vmatpush1.bf16.msra.mxu0 %v1447
        %1473 = vmatprep.subr.bf16.mxu0 0
        %1474 = vmatpush1.bf16.msra.mxu0 %v1446
        %1475 = vmatprep.subr.bf16.mxu0 0
        %1476 = vmatpush1.bf16.msra.mxu0 %v1445
        %1477 = vmatprep.subr.bf16.mxu0 0
        %1478 = vmatpush2.bf16.msra.mxu0 0
        %1479 = vmatprep.subr.bf16.mxu0 0
        %1480 = vmatpush2.bf16.msra.mxu0 0
        %1481 = vmatprep.subr.bf16.mxu0 0
        %1482 = vmatpush2.bf16.msra.mxu0 0
        %1483 = vmatprep.subr.bf16.mxu0 0
        %1484 = vmatpush2.bf16.msra.mxu0 0
        %1485 = vmatprep.subr.bf16.mxu0 0
        %1486 = vmatpush2.bf16.msra.mxu0 0
        %1487 = vmatprep.subr.bf16.mxu0 0
        %1488 = vmatpush2.bf16.msra.mxu0 0
        %1489 = vmatprep.subr.bf16.mxu0 0
        %1490 = vmatpush2.bf16.msra.mxu0 0
        %1491 = vmatprep.subr.bf16.mxu0 0
        %1492 = vmatpush2.bf16.msra.mxu0 0
        %1493 = vmatprep.mubr.bf16.mxu0 0
        %1494 = vmatmul.mubr.bf16.gmra.mxu0 %v1389
        %v1495 = vpop.f32.mrf.mxu0
        %v1496 = vadd.f32 %v1411, %v1495
        %v1497 = vpop.f32.mrf.mxu0
        %v1498 = vpop.f32.mrf.mxu0
        %v1499 = vpop.f32.mrf.mxu0
        %1500 = vdwg.mxu0
        %v1501 = vadd.f32 %v1496, %v1320
        %v1502 = vld [vmem:[%s12] sm:$0x1]
        %v1503 = vld [vmem:[%s13] sm:$0x1]
        %v1504 = vsel %vm1292, %v1501, 0.0
        %1505 = vadd.xlane.f32.xlu0 %v1504
        %v1506 = vpop.xlane.xlu0 %1505
        %v1507 = vmul.f32 %v1506, %v1296
        %v1508 = vsub.f32 %v1501, %v1507
        %v1509 = vmul.f32 %v1508, %v1508
        %v1510 = vsel %vm1292, %v1509, 0.0
        %1511 = vadd.xlane.f32.xlu0 %v1510
        %v1512 = vpop.xlane.xlu0 %1511
        %v1513 = vmul.f32 %v1512, %v1296
        %v1514 = vadd.f32 %v1513, 1e-05
        %v1515 = vrsqrt.pop %v1514
        %v1516 = vmul.f32 %v1508, %v1515
        %v1518 = vlaneseq
        %v1519 = vshrl.u32 %v1518, 7
        %v1520 = vsub.s32 0, %v1519
        %v1521 = vrot.slane %v1502, %v1520
        %v1523 = vmul.f32 %v1516, %v1521
        %v1525 = vlaneseq
        %v1526 = vshrl.u32 %v1525, 7
        %v1527 = vsub.s32 0, %v1526
        %v1528 = vrot.slane %v1503, %v1527
        %v1530 = vadd.f32 %v1523, %v1528
        %v1531 = vpack.c.bf16 %v1530, %v1530
        %vm1532 = vcmask 257024
        %1533 = vst.msk [vmem:[%s641] sm:$0xf] %vm1532, %v1531
        %s1534 = sand.u32 %s382, 1
        %s1535 = scalar_lea.sflag [#allocation4], %s1534
        %s1536 = sand.u32 %s382, 1
        %s1537 = smul.addr %s1536, 4
        %s1538 = scalar_lea.vmem [#allocation11], %s1537
        // Predicated region
        $region97: #{tpu_custom_call.1} parent=75 // pred_check
          %p1539 = pneg %p392
        $region98: #{tpu_custom_call.1} parent=75 // pred_check_branch
          %1541 = sbr.rel (%p1539) target = $region100
        $region99: #{tpu_custom_call.1} parent=75 // pred_region
          %s1543 = ssub.s32 64, 64
          %1544 = vsyncadd %s1535, %s1543
          %s1545 = sadd.s32 %s40, %s39
          %s1546 = smul.addr %s1545, 64
          %s1547 = scalar_lea.hbm %s14, %s1546
          %s1549 = sshll.u32 %s1538, 4
          %s1550 = int_to_ptr.vmem [resolvable:$true] %s1549
          %1552 = dma.vmem_to_hbm [thread:$0]  %s1550, 64, %s1547, %s1535
        $region100: #{tpu_custom_call.1} parent=75 // pred_fallthru
          _
      $region76: #{tpu_custom_call.1} parent=5 // pred_fallthru
        _
      %p1553 = scmp.le.s32.totalorder 2, %s30
      // Predicated region
      $region101: #{tpu_custom_call.1} parent=5 // pred_check
        %p1554 = pneg %p1553
      $region102: #{tpu_custom_call.1} parent=5 // pred_check_branch
        %1556 = sbr.rel (%p1554) target = $region104
      $region103: #{tpu_custom_call.1} parent=5 // pred_region
        %s1557 = ssub.s32 %s30, 2
        // Predicated region
        $region105: #{tpu_custom_call.1} parent=103 // pred_check
          %p1558 = pneg %p398
        $region106: #{tpu_custom_call.1} parent=103 // pred_check_branch
          %1560 = sbr.rel (%p1558) target = $region108
        $region107: #{tpu_custom_call.1} parent=103 // pred_region
          %s1561 = sand.u32 %s383, 1
          %s1562 = scalar_lea.sflag [#allocation4], %s1561
          %s1563 = sand.u32 %s383, 1
          %s1564 = smul.addr %s1563, 4
          %s1565 = scalar_lea.vmem [#allocation11], %s1564
          %1566 = dma.done %s1562, 64
        $region108: #{tpu_custom_call.1} parent=103 // pred_fallthru
          _
      $region104: #{tpu_custom_call.1} parent=5 // pred_fallthru
        _
    $region6: #{tpu_custom_call.1} parent=1 // loop_footer
      %s34 = sadd.s32 1, %s30
    $region7: #{tpu_custom_call.1} parent=1 // loop_footer_branch
      %29 = sbr.rel target = $region3
    $region8: #{tpu_custom_call.1} parent=1 // loop_exit
      _
    %1567 = vsyncpa [#allocation3], 1
    %s1568 = scalar_lea.sflag [#allocation3], 1
    %1569 = vsyncpa %s1568, 1
    %1570 = vsyncpa [#allocation6], 1
    %s1571 = scalar_lea.sflag [#allocation6], 1
    %1572 = vsyncpa %s1571, 1
    %1573 = vsyncpa [#allocation9], 1
    %1574 = vsyncpa [#allocation4], 1
    %s1575 = scalar_lea.sflag [#allocation4], 1
    %1576 = vsyncpa %s1575, 1

</llo_original>
